<compile_context>
chip_gen: v6e
topology: v6e:2x2x1
jax: 0.10.0
libtpu: 0.0.40
codegen_flags: <defaults>
</compile_context>

<pallas_src>
import functools

import jax
import jax.numpy as jnp
from jax import lax
from jax.experimental import pallas as pl
from jax.experimental.pallas import tpu as pltpu


_VMEM_LIMIT = 32 * 1024 * 1024   # explicit scoped-VMEM limit (safe on v5e/v6e/v7x)


# ----------------------------------------------------------------------------
# Kernel 1: conv0 as a 27-tap VPU stencil (Cin=1, k=3, stride=1, pad=1)
# ----------------------------------------------------------------------------
def _conv0_stencil_kernel(w_ref, xp_ref, o_ref, *, Cout, H, W):
    # w_ref : [Cout, 27] f32 in SMEM (scalar taps)
    # xp_ref: [1, Dp, Hp, Wp] bf16 in VMEM (padded volume of one batch element,
    #         resident across the inner depth grid axis)
    # o_ref : [Cout, 1, 1, H, W] bf16 (one output depth-plane)
    d = pl.program_id(1)
    x3 = xp_ref[0, pl.ds(d, 3)].astype(jnp.float32)          # [3, Hp, Wp]
    accs = [jnp.zeros((H, W), jnp.float32) for _ in range(Cout)]
    tap = 0
    for kd in range(3):
        for kh in range(3):
            for kw in range(3):
                win = x3[kd, kh:kh + H, kw:kw + W]            # [H, W]
                for c in range(Cout):
                    accs[c] = accs[c] + w_ref[c, tap] * win
                tap += 1
    for c in range(Cout):
        o_ref[c, 0, 0] = accs[c].astype(o_ref.dtype)


def pallas_conv0_stencil(w_taps, x_bdhw, out_dtype=jnp.bfloat16):
    """SN_Conv3d(1, C0, 3, 1, 1, bias=False) as a stencil (no im2col blow-up).

    w_taps: [Cout, 27] f32 (tap order kd*9+kh*3+kw), x: [B, D, H, W] bf16
    -> [Cout, B, D, H, W] bf16 (channel-first for the following DownBlocks).
    """
    B, D, H, W = x_bdhw.shape
    Cout = w_taps.shape[0]
    xp = jnp.pad(x_bdhw, ((0, 0), (1, 1), (1, 1), (1, 1)))
    Dp, Hp, Wp = D + 2, H + 2, W + 2
    # TODO(synk): for very large H*W, tile the H axis as well (accs live in vregs).
    return pl.pallas_call(
        functools.partial(_conv0_stencil_kernel, Cout=Cout, H=H, W=W),
        out_shape=jax.ShapeDtypeStruct((Cout, B, D, H, W), out_dtype),
        grid=(B, D),
        in_specs=[
            pl.BlockSpec(memory_space=pltpu.MemorySpace.SMEM),          # taps
            pl.BlockSpec((1, Dp, Hp, Wp), lambda b, d: (b, 0, 0, 0)),   # stays resident over d
        ],
        out_specs=pl.BlockSpec((Cout, 1, 1, H, W), lambda b, d: (0, b, d, 0, 0)),
        compiler_params=pltpu.CompilerParams(
            dimension_semantics=("parallel", "arbitrary"),
            vmem_limit_bytes=_VMEM_LIMIT,
        ),
    )(w_taps.astype(jnp.float32), xp)


# ----------------------------------------------------------------------------
# Kernel 2: DownBlock conv as W[Cout,K] @ A[K,M] with fused LeakyReLU epilogue
# ----------------------------------------------------------------------------
def _conv_matmul_kernel(w_ref, a_ref, o_ref, *, negative_slope):
    acc = jnp.dot(w_ref[...], a_ref[...], preferred_element_type=jnp.float32)
    if negative_slope is not None:
        acc = jnp.maximum(acc, acc * negative_slope)      # LeakyReLU, 2 VALU ops
    o_ref[...] = acc.astype(o_ref.dtype)


def _pick_lane_tile(M, tmax):
    """Full M if small; else the largest multiple of 128 <= tmax dividing M;
    else fall back to padding (returns (tile, pad_amount))."""
    if M <= tmax:
        return M, 0
    for tm in range(tmax, 0, -128):
        if M % tm == 0:
            return tm, 0
    return tmax, (-M) % tmax


def pallas_conv_matmul(w2d, a, *, negative_slope=None, out_dtype=jnp.bfloat16):
    """w2d: [Cout, K], a: [K, M] (im2col, spatial M on lanes) -> [Cout, M]."""
    Cout, K = w2d.shape
    K2, M = a.shape
    assert K == K2
    tmax = 2048 if Cout <= 16 else 1024      # keep Cout*TM*4 <= 128 KiB (f32 epilogue)
    tm, padm = _pick_lane_tile(M, tmax)
    if padm:
        a = jnp.pad(a, ((0, 0), (0, padm)))
    mp = M + padm
    grid_m = mp // tm

    a_spec_kwargs = {}
    if grid_m >= 3:
        # DMA-exposed pipeline (tiny compute per tile) -> triple-buffer A.
        a_spec_kwargs["pipeline_mode"] = pl.Buffered(3)

    out = pl.pallas_call(
        functools.partial(_conv_matmul_kernel, negative_slope=negative_slope),
        out_shape=jax.ShapeDtypeStruct((Cout, mp), out_dtype),
        grid=(grid_m,),
        in_specs=[
            pl.BlockSpec((Cout, K), lambda i: (0, 0)),            # weights resident
            pl.BlockSpec((K, tm), lambda i: (0, i), **a_spec_kwargs),
        ],
        out_specs=pl.BlockSpec((Cout, tm), lambda i: (0, i)),
        compiler_params=pltpu.CompilerParams(
            dimension_semantics=("parallel",),                    # shards across v7x TCs
            vmem_limit_bytes=_VMEM_LIMIT,
        ),
    )(w2d.astype(jnp.bfloat16), a.astype(jnp.bfloat16))
    return out[:, :M] if padm else out


# ----------------------------------------------------------------------------
# Kernel 3: last DownBlock conv fused with the projection head
#   logits[b, s] = sum_c leaky(W3 @ A3[b])[c, s] * coef[b, c]
# ----------------------------------------------------------------------------
def _conv_proj_kernel(w_ref, a_ref, coef_ref, o_ref, *, negative_slope):
    # w_ref: [Cout, K] bf16, a_ref: [1, K, TS] bf16, coef_ref: [1, 1, Cout] f32
    acc = jnp.dot(w_ref[...], a_ref[0], preferred_element_type=jnp.float32)   # [Cout, TS]
    feat = jnp.maximum(acc, acc * negative_slope)
    o_ref[0] = jnp.dot(coef_ref[0], feat, preferred_element_type=jnp.float32)  # [1, TS]


def pallas_conv_proj_logits(w2d, a_bks, coef_b1c, *, negative_slope=0.2):
    """w2d: [Cout, K], a_bks: [B, K, S] (per-batch im2col), coef: [B, 1, Cout]
    -> logits [B, 1, S] f32.  feat is never written to HBM."""
    B, K, S = a_bks.shape
    Cout, K2 = w2d.shape
    assert K == K2 and coef_b1c.shape == (B, 1, Cout)
    ts, pads = _pick_lane_tile(S, 1024)
    if pads:
        a_bks = jnp.pad(a_bks, ((0, 0), (0, 0), (0, pads)))
    sp = S + pads

    out = pl.pallas_call(
        functools.partial(_conv_proj_kernel, negative_slope=negative_slope),
        out_shape=jax.ShapeDtypeStruct((B, 1, sp), jnp.float32),
        grid=(B, sp // ts),
        in_specs=[
            pl.BlockSpec((Cout, K), lambda b, s: (0, 0)),
            pl.BlockSpec((1, K, ts), lambda b, s: (b, 0, s)),
            pl.BlockSpec((1, 1, Cout), lambda b, s: (b, 0, 0)),
        ],
        out_specs=pl.BlockSpec((1, 1, ts), lambda b, s: (b, 0, s)),
        compiler_params=pltpu.CompilerParams(
            dimension_semantics=("parallel", "parallel"),
            vmem_limit_bytes=_VMEM_LIMIT,
        ),
    )(w2d.astype(jnp.bfloat16), a_bks.astype(jnp.bfloat16), coef_b1c.astype(jnp.float32))
    return out[:, :, :S] if pads else out


# ----------------------------------------------------------------------------
# im2col glue (JAX) for the k=4 / stride=2 / pad=1 DownBlock convs
# ----------------------------------------------------------------------------
def _im2col_cf(x_cf, k, stride, pad):
    """x_cf: [Cin, B, D, H, W] -> stacked taps [k^3, Cin, B, Do, Ho, Wo]."""
    Cin, B, D, H, W = x_cf.shape
    Do = (D + 2 * pad - k) // stride + 1
    Ho = (H + 2 * pad - k) // stride + 1
    Wo = (W + 2 * pad - k) // stride + 1
    xp = jnp.pad(x_cf, ((0, 0), (0, 0), (pad, pad), (pad, pad), (pad, pad)))
    slabs = []
    for kd in range(k):
        for kh in range(k):
            for kw in range(k):
                slabs.append(
                    xp[:, :,
                       kd:kd + (Do - 1) * stride + 1:stride,
                       kh:kh + (Ho - 1) * stride + 1:stride,
                       kw:kw + (Wo - 1) * stride + 1:stride])
    return jnp.stack(slabs, axis=0), (Do, Ho, Wo)


def conv3d_down(x_cf, w2d, negative_slope=0.2):
    """DownBlock conv (4,2,1,bias=False)+LeakyReLU. x_cf: [Cin,B,D,H,W] bf16."""
    Cin, B, D, H, W = x_cf.shape
    a6, (Do, Ho, Wo) = _im2col_cf(x_cf, k=4, stride=2, pad=1)
    K = 64 * Cin
    M = B * Do * Ho * Wo
    out2d = pallas_conv_matmul(w2d, a6.reshape(K, M), negative_slope=negative_slope)
    return out2d.reshape(w2d.shape[0], B, Do, Ho, Wo)


def conv3d_down_proj(x_cf, w2d, coef_b1c, negative_slope=0.2):
    """Last DownBlock conv fused with the projection head -> logits [B,1,S]."""
    Cin, B, D, H, W = x_cf.shape
    a6, (Do, Ho, Wo) = _im2col_cf(x_cf, k=4, stride=2, pad=1)
    K = 64 * Cin
    S = Do * Ho * Wo
    a_bks = jnp.transpose(a6.reshape(K, B, S), (1, 0, 2))          # [B, K, S]
    logits = pallas_conv_proj_logits(w2d, a_bks, coef_b1c, negative_slope=negative_slope)
    return logits, (Do, Ho, Wo)


# ----------------------------------------------------------------------------
# Parameters (PyTorch layouts) / forward
# ----------------------------------------------------------------------------
def init_params(key, ndf=4, num_class=2):
    nfc_multi = {8: 8, 16: 4, 32: 2, 64: 1}
    nfc = {k: int(v * ndf) for k, v in nfc_multi.items()}
    ks = jax.random.split(key, 6)
    s = 0.05
    params = {
        # to_map[0]: SN_Conv3d(1, nfc[64], 3, 1, 1, bias=False)
        "w0": jax.random.normal(ks[0], (nfc[64], 1, 3, 3, 3), jnp.float32) * s,
        # DownBlock convs: Conv3d(cin, cout, 4, 2, 1, bias=False)
        "w1": jax.random.normal(ks[1], (nfc[32], nfc[64], 4, 4, 4), jnp.float32) * s,
        "w2": jax.random.normal(ks[2], (nfc[16], nfc[32], 4, 4, 4), jnp.float32) * s,
        "w3": jax.random.normal(ks[3], (nfc[8], nfc[16], 4, 4, 4), jnp.float32) * s,
        # to_logits: SN_Conv3d(nfc[8], 1, 1, 1, 0, bias=False) -> row vector [1, nfc[8]]
        "w_logits": jax.random.normal(ks[4], (1, nfc[8]), jnp.float32) * s,
        # to_cls_embed: SN_Linear(num_class, nfc[8], bias=False), stored as W^T
        "w_cls": jax.random.normal(ks[5], (num_class, nfc[8]), jnp.float32) * s,
    }
    return params, nfc


def discriminator_forward(params, x_ncdhw, label):
    """x: [B, 1, D, H, W] f32, label: [B, num_class] -> [B, 1, D/8, H/8, W/8] f32."""
    B = x_ncdhw.shape[0]

    # Kernel-layout weights (tiny reshapes, traced under jit).
    w0 = params["w0"]
    C0 = w0.shape[0]
    w0_taps = w0.reshape(C0, 27)                               # (kd, kh, kw) tap order

    def prep_down(w):                                          # [Cout,Cin,4,4,4] -> [Cout, 64*Cin]
        Cout, Cin, k, _, _ = w.shape
        return jnp.transpose(w, (0, 2, 3, 4, 1)).reshape(Cout, k * k * k * Cin).astype(jnp.bfloat16)

    w1, w2, w3 = prep_down(params["w1"]), prep_down(params["w2"]), prep_down(params["w3"])
    C3 = w3.shape[0]

    # --- to_map (channel-first bf16 activations end-to-end) ---
    x = x_ncdhw[:, 0].astype(jnp.bfloat16)                     # [B, D, H, W] (Cin = 1)
    h = pallas_conv0_stencil(w0_taps, x)                       # [C0, B, D, H, W], no activation
    h = conv3d_down(h, w1)                                     # [C1, B, D/2, H/2, W/2]
    h = conv3d_down(h, w2)                                     # [C2, B, D/4, H/4, W/4]

    # --- fused last DownBlock conv + projection head ---
    coef = label.astype(jnp.float32) @ params["w_cls"] + params["w_logits"]   # [B, C3]
    logits, (Do, Ho, Wo) = conv3d_down_proj(h, w3, coef.reshape(B, 1, C3))
    return logits.reshape(B, 1, Do, Ho, Wo)


# ----------------------------------------------------------------------------
# Pure-JAX reference (same bf16 quantization points) for a correctness check
# ----------------------------------------------------------------------------
def discriminator_reference(params, x_ncdhw, label):
    f32, bf16 = jnp.float32, jnp.bfloat16

    def conv(x, w, stride, pad):
        dn = lax.conv_dimension_numbers(x.shape, w.shape, ("NCDHW", "OIDHW", "NCDHW"))
        return lax.conv_general_dilated(
            x, w, (stride,) * 3, [(pad, pad)] * 3,
            dimension_numbers=dn, preferred_element_type=f32)

    def leaky(v):
        return jnp.maximum(v, 0.2 * v)

    xb = x_ncdhw.astype(bf16)
    h = conv(xb.astype(f32), params["w0"], 1, 1).astype(bf16)           # conv0, no activation
    h = leaky(conv(h, params["w1"].astype(bf16), 2, 1)).astype(bf16)
    h = leaky(conv(h, params["w2"].astype(bf16), 2, 1)).astype(bf16)
    feat = leaky(conv(h, params["w3"].astype(bf16), 2, 1))              # f32 feat_out
    logits = jnp.einsum("c,bcdhw->bdhw", params["w_logits"][0], feat)[:, None]
    cls_embed = label.astype(f32) @ params["w_cls"]                     # [B, C]
    logits = logits + jnp.einsum("bc,bcdhw->bdhw", cls_embed, feat)[:, None]
    return logits


if __name__ == "__main__":
    key = jax.random.PRNGKey(0)
    kp, kx = jax.random.split(key)

    ndf, num_class = 4, 2
    params, _nfc = init_params(kp, ndf=ndf, num_class=num_class)

    B, D, H, W = 2, 16, 16, 16
    x = jax.random.normal(kx, (B, 1, D, H, W), jnp.float32)
    label = jax.nn.one_hot(jnp.array([0, 1]), num_class).astype(jnp.float32)

    fwd = jax.jit(discriminator_forward)
    out = jax.block_until_ready(fwd(params, x, label))
    assert out.shape == (B, 1, D // 8, H // 8, W // 8), out.shape
    assert out.dtype == jnp.float32

    ref = jax.block_until_ready(jax.jit(discriminator_reference)(params, x, label))
    err = float(jnp.max(jnp.abs(out - ref)))
    tol = 5e-3 + 5e-2 * float(jnp.max(jnp.abs(ref)))
    assert err <= tol, (err, tol)

    print("KERNEL_OK")
</pallas_src>

<mosaic_0001>
module attributes {stable_mosaic.version = 11 : i64} {
  func.func @_conv0_stencil_kernel(%arg0: i32, %arg1: i32, %arg2: memref<4x27xf32, #tpu.memory_space<smem>>, %arg3: memref<1x18x18x18xbf16, #tpu.memory_space<vmem>>, %arg4: memref<4x1x1x16x16xbf16, #tpu.memory_space<vmem>>) attributes {dimension_semantics = [#tpu.dimension_semantics<parallel>, #tpu.dimension_semantics<arbitrary>], iteration_bounds = array<i64: 2, 16>, scalar_prefetch = 0 : i64, scratch_operands = 0 : i64, tpu.core_type = #tpu.core_type<tc>, window_params = [{transform_indices = @transform_0, window_bounds = array<i64: 4, 27>}, {transform_indices = @transform_1, window_bounds = array<i64: 1, 18, 18, 18>}, {transform_indices = @transform_2, window_bounds = array<i64: 4, 1, 1, 16, 16>}]} {
    %c0 = arith.constant 0 : index
    %0 = arith.index_cast %arg1 : i32 to index
    %c0_0 = arith.constant 0 : index
    %c0_1 = arith.constant 0 : index
    %1 = vector.load %arg3[%c0, %0, %c0_0, %c0_1] : memref<1x18x18x18xbf16, #tpu.memory_space<vmem>>, vector<1x3x18x18xbf16>
    %2 = vector.shape_cast %1 : vector<1x3x18x18xbf16> to vector<3x18x18xbf16>
    %3 = arith.extf %2 : vector<3x18x18xbf16> to vector<3x18x18xf32>
    %cst = arith.constant 0.000000e+00 : f32
    %4 = vector.broadcast %cst : f32 to vector<16x16xf32>
    %cst_2 = arith.constant 0.000000e+00 : f32
    %5 = vector.broadcast %cst_2 : f32 to vector<16x16xf32>
    %cst_3 = arith.constant 0.000000e+00 : f32
    %6 = vector.broadcast %cst_3 : f32 to vector<16x16xf32>
    %cst_4 = arith.constant 0.000000e+00 : f32
    %7 = vector.broadcast %cst_4 : f32 to vector<16x16xf32>
    %8 = vector.extract_strided_slice %3 {offsets = [0, 0, 0], sizes = [1, 16, 16], strides = [1, 1, 1]} : vector<3x18x18xf32> to vector<1x16x16xf32>
    %9 = vector.shape_cast %8 : vector<1x16x16xf32> to vector<16x16xf32>
    %c0_5 = arith.constant 0 : index
    %c0_6 = arith.constant 0 : index
    %10 = memref.load %arg2[%c0_5, %c0_6] : memref<4x27xf32, #tpu.memory_space<smem>>
    %11 = vector.broadcast %10 : f32 to vector<16x16xf32>
    %12 = arith.mulf %11, %9 : vector<16x16xf32>
    %13 = arith.addf %4, %12 : vector<16x16xf32>
    %c1 = arith.constant 1 : index
    %c0_7 = arith.constant 0 : index
    %14 = memref.load %arg2[%c1, %c0_7] : memref<4x27xf32, #tpu.memory_space<smem>>
    %15 = vector.broadcast %14 : f32 to vector<16x16xf32>
    %16 = arith.mulf %15, %9 : vector<16x16xf32>
    %17 = arith.addf %5, %16 : vector<16x16xf32>
    %c2 = arith.constant 2 : index
    %c0_8 = arith.constant 0 : index
    %18 = memref.load %arg2[%c2, %c0_8] : memref<4x27xf32, #tpu.memory_space<smem>>
    %19 = vector.broadcast %18 : f32 to vector<16x16xf32>
    %20 = arith.mulf %19, %9 : vector<16x16xf32>
    %21 = arith.addf %6, %20 : vector<16x16xf32>
    %c3 = arith.constant 3 : index
    %c0_9 = arith.constant 0 : index
    %22 = memref.load %arg2[%c3, %c0_9] : memref<4x27xf32, #tpu.memory_space<smem>>
    %23 = vector.broadcast %22 : f32 to vector<16x16xf32>
    %24 = arith.mulf %23, %9 : vector<16x16xf32>
    %25 = arith.addf %7, %24 : vector<16x16xf32>
    %26 = vector.extract_strided_slice %3 {offsets = [0, 0, 1], sizes = [1, 16, 16], strides = [1, 1, 1]} : vector<3x18x18xf32> to vector<1x16x16xf32>
    %27 = vector.shape_cast %26 : vector<1x16x16xf32> to vector<16x16xf32>
    %c0_10 = arith.constant 0 : index
    %c1_11 = arith.constant 1 : index
    %28 = memref.load %arg2[%c0_10, %c1_11] : memref<4x27xf32, #tpu.memory_space<smem>>
    %29 = vector.broadcast %28 : f32 to vector<16x16xf32>
    %30 = arith.mulf %29, %27 : vector<16x16xf32>
    %31 = arith.addf %13, %30 : vector<16x16xf32>
    %c1_12 = arith.constant 1 : index
    %c1_13 = arith.constant 1 : index
    %32 = memref.load %arg2[%c1_12, %c1_13] : memref<4x27xf32, #tpu.memory_space<smem>>
    %33 = vector.broadcast %32 : f32 to vector<16x16xf32>
    %34 = arith.mulf %33, %27 : vector<16x16xf32>
    %35 = arith.addf %17, %34 : vector<16x16xf32>
    %c2_14 = arith.constant 2 : index
    %c1_15 = arith.constant 1 : index
    %36 = memref.load %arg2[%c2_14, %c1_15] : memref<4x27xf32, #tpu.memory_space<smem>>
    %37 = vector.broadcast %36 : f32 to vector<16x16xf32>
    %38 = arith.mulf %37, %27 : vector<16x16xf32>
    %39 = arith.addf %21, %38 : vector<16x16xf32>
    %c3_16 = arith.constant 3 : index
    %c1_17 = arith.constant 1 : index
    %40 = memref.load %arg2[%c3_16, %c1_17] : memref<4x27xf32, #tpu.memory_space<smem>>
    %41 = vector.broadcast %40 : f32 to vector<16x16xf32>
    %42 = arith.mulf %41, %27 : vector<16x16xf32>
    %43 = arith.addf %25, %42 : vector<16x16xf32>
    %44 = vector.extract_strided_slice %3 {offsets = [0, 0, 2], sizes = [1, 16, 16], strides = [1, 1, 1]} : vector<3x18x18xf32> to vector<1x16x16xf32>
    %45 = vector.shape_cast %44 : vector<1x16x16xf32> to vector<16x16xf32>
    %c0_18 = arith.constant 0 : index
    %c2_19 = arith.constant 2 : index
    %46 = memref.load %arg2[%c0_18, %c2_19] : memref<4x27xf32, #tpu.memory_space<smem>>
    %47 = vector.broadcast %46 : f32 to vector<16x16xf32>
    %48 = arith.mulf %47, %45 : vector<16x16xf32>
    %49 = arith.addf %31, %48 : vector<16x16xf32>
    %c1_20 = arith.constant 1 : index
    %c2_21 = arith.constant 2 : index
    %50 = memref.load %arg2[%c1_20, %c2_21] : memref<4x27xf32, #tpu.memory_space<smem>>
    %51 = vector.broadcast %50 : f32 to vector<16x16xf32>
    %52 = arith.mulf %51, %45 : vector<16x16xf32>
    %53 = arith.addf %35, %52 : vector<16x16xf32>
    %c2_22 = arith.constant 2 : index
    %c2_23 = arith.constant 2 : index
    %54 = memref.load %arg2[%c2_22, %c2_23] : memref<4x27xf32, #tpu.memory_space<smem>>
    %55 = vector.broadcast %54 : f32 to vector<16x16xf32>
    %56 = arith.mulf %55, %45 : vector<16x16xf32>
    %57 = arith.addf %39, %56 : vector<16x16xf32>
    %c3_24 = arith.constant 3 : index
    %c2_25 = arith.constant 2 : index
    %58 = memref.load %arg2[%c3_24, %c2_25] : memref<4x27xf32, #tpu.memory_space<smem>>
    %59 = vector.broadcast %58 : f32 to vector<16x16xf32>
    %60 = arith.mulf %59, %45 : vector<16x16xf32>
    %61 = arith.addf %43, %60 : vector<16x16xf32>
    %62 = vector.extract_strided_slice %3 {offsets = [0, 1, 0], sizes = [1, 16, 16], strides = [1, 1, 1]} : vector<3x18x18xf32> to vector<1x16x16xf32>
    %63 = vector.shape_cast %62 : vector<1x16x16xf32> to vector<16x16xf32>
    %c0_26 = arith.constant 0 : index
    %c3_27 = arith.constant 3 : index
    %64 = memref.load %arg2[%c0_26, %c3_27] : memref<4x27xf32, #tpu.memory_space<smem>>
    %65 = vector.broadcast %64 : f32 to vector<16x16xf32>
    %66 = arith.mulf %65, %63 : vector<16x16xf32>
    %67 = arith.addf %49, %66 : vector<16x16xf32>
    %c1_28 = arith.constant 1 : index
    %c3_29 = arith.constant 3 : index
    %68 = memref.load %arg2[%c1_28, %c3_29] : memref<4x27xf32, #tpu.memory_space<smem>>
    %69 = vector.broadcast %68 : f32 to vector<16x16xf32>
    %70 = arith.mulf %69, %63 : vector<16x16xf32>
    %71 = arith.addf %53, %70 : vector<16x16xf32>
    %c2_30 = arith.constant 2 : index
    %c3_31 = arith.constant 3 : index
    %72 = memref.load %arg2[%c2_30, %c3_31] : memref<4x27xf32, #tpu.memory_space<smem>>
    %73 = vector.broadcast %72 : f32 to vector<16x16xf32>
    %74 = arith.mulf %73, %63 : vector<16x16xf32>
    %75 = arith.addf %57, %74 : vector<16x16xf32>
    %c3_32 = arith.constant 3 : index
    %c3_33 = arith.constant 3 : index
    %76 = memref.load %arg2[%c3_32, %c3_33] : memref<4x27xf32, #tpu.memory_space<smem>>
    %77 = vector.broadcast %76 : f32 to vector<16x16xf32>
    %78 = arith.mulf %77, %63 : vector<16x16xf32>
    %79 = arith.addf %61, %78 : vector<16x16xf32>
    %80 = vector.extract_strided_slice %3 {offsets = [0, 1, 1], sizes = [1, 16, 16], strides = [1, 1, 1]} : vector<3x18x18xf32> to vector<1x16x16xf32>
    %81 = vector.shape_cast %80 : vector<1x16x16xf32> to vector<16x16xf32>
    %c0_34 = arith.constant 0 : index
    %c4 = arith.constant 4 : index
    %82 = memref.load %arg2[%c0_34, %c4] : memref<4x27xf32, #tpu.memory_space<smem>>
    %83 = vector.broadcast %82 : f32 to vector<16x16xf32>
    %84 = arith.mulf %83, %81 : vector<16x16xf32>
    %85 = arith.addf %67, %84 : vector<16x16xf32>
    %c1_35 = arith.constant 1 : index
    %c4_36 = arith.constant 4 : index
    %86 = memref.load %arg2[%c1_35, %c4_36] : memref<4x27xf32, #tpu.memory_space<smem>>
    %87 = vector.broadcast %86 : f32 to vector<16x16xf32>
    %88 = arith.mulf %87, %81 : vector<16x16xf32>
    %89 = arith.addf %71, %88 : vector<16x16xf32>
    %c2_37 = arith.constant 2 : index
    %c4_38 = arith.constant 4 : index
    %90 = memref.load %arg2[%c2_37, %c4_38] : memref<4x27xf32, #tpu.memory_space<smem>>
    %91 = vector.broadcast %90 : f32 to vector<16x16xf32>
    %92 = arith.mulf %91, %81 : vector<16x16xf32>
    %93 = arith.addf %75, %92 : vector<16x16xf32>
    %c3_39 = arith.constant 3 : index
    %c4_40 = arith.constant 4 : index
    %94 = memref.load %arg2[%c3_39, %c4_40] : memref<4x27xf32, #tpu.memory_space<smem>>
    %95 = vector.broadcast %94 : f32 to vector<16x16xf32>
    %96 = arith.mulf %95, %81 : vector<16x16xf32>
    %97 = arith.addf %79, %96 : vector<16x16xf32>
    %98 = vector.extract_strided_slice %3 {offsets = [0, 1, 2], sizes = [1, 16, 16], strides = [1, 1, 1]} : vector<3x18x18xf32> to vector<1x16x16xf32>
    %99 = vector.shape_cast %98 : vector<1x16x16xf32> to vector<16x16xf32>
    %c0_41 = arith.constant 0 : index
    %c5 = arith.constant 5 : index
    %100 = memref.load %arg2[%c0_41, %c5] : memref<4x27xf32, #tpu.memory_space<smem>>
    %101 = vector.broadcast %100 : f32 to vector<16x16xf32>
    %102 = arith.mulf %101, %99 : vector<16x16xf32>
    %103 = arith.addf %85, %102 : vector<16x16xf32>
    %c1_42 = arith.constant 1 : index
    %c5_43 = arith.constant 5 : index
    %104 = memref.load %arg2[%c1_42, %c5_43] : memref<4x27xf32, #tpu.memory_space<smem>>
    %105 = vector.broadcast %104 : f32 to vector<16x16xf32>
    %106 = arith.mulf %105, %99 : vector<16x16xf32>
    %107 = arith.addf %89, %106 : vector<16x16xf32>
    %c2_44 = arith.constant 2 : index
    %c5_45 = arith.constant 5 : index
    %108 = memref.load %arg2[%c2_44, %c5_45] : memref<4x27xf32, #tpu.memory_space<smem>>
    %109 = vector.broadcast %108 : f32 to vector<16x16xf32>
    %110 = arith.mulf %109, %99 : vector<16x16xf32>
    %111 = arith.addf %93, %110 : vector<16x16xf32>
    %c3_46 = arith.constant 3 : index
    %c5_47 = arith.constant 5 : index
    %112 = memref.load %arg2[%c3_46, %c5_47] : memref<4x27xf32, #tpu.memory_space<smem>>
    %113 = vector.broadcast %112 : f32 to vector<16x16xf32>
    %114 = arith.mulf %113, %99 : vector<16x16xf32>
    %115 = arith.addf %97, %114 : vector<16x16xf32>
    %116 = vector.extract_strided_slice %3 {offsets = [0, 2, 0], sizes = [1, 16, 16], strides = [1, 1, 1]} : vector<3x18x18xf32> to vector<1x16x16xf32>
    %117 = vector.shape_cast %116 : vector<1x16x16xf32> to vector<16x16xf32>
    %c0_48 = arith.constant 0 : index
    %c6 = arith.constant 6 : index
    %118 = memref.load %arg2[%c0_48, %c6] : memref<4x27xf32, #tpu.memory_space<smem>>
    %119 = vector.broadcast %118 : f32 to vector<16x16xf32>
    %120 = arith.mulf %119, %117 : vector<16x16xf32>
    %121 = arith.addf %103, %120 : vector<16x16xf32>
    %c1_49 = arith.constant 1 : index
    %c6_50 = arith.constant 6 : index
    %122 = memref.load %arg2[%c1_49, %c6_50] : memref<4x27xf32, #tpu.memory_space<smem>>
    %123 = vector.broadcast %122 : f32 to vector<16x16xf32>
    %124 = arith.mulf %123, %117 : vector<16x16xf32>
    %125 = arith.addf %107, %124 : vector<16x16xf32>
    %c2_51 = arith.constant 2 : index
    %c6_52 = arith.constant 6 : index
    %126 = memref.load %arg2[%c2_51, %c6_52] : memref<4x27xf32, #tpu.memory_space<smem>>
    %127 = vector.broadcast %126 : f32 to vector<16x16xf32>
    %128 = arith.mulf %127, %117 : vector<16x16xf32>
    %129 = arith.addf %111, %128 : vector<16x16xf32>
    %c3_53 = arith.constant 3 : index
    %c6_54 = arith.constant 6 : index
    %130 = memref.load %arg2[%c3_53, %c6_54] : memref<4x27xf32, #tpu.memory_space<smem>>
    %131 = vector.broadcast %130 : f32 to vector<16x16xf32>
    %132 = arith.mulf %131, %117 : vector<16x16xf32>
    %133 = arith.addf %115, %132 : vector<16x16xf32>
    %134 = vector.extract_strided_slice %3 {offsets = [0, 2, 1], sizes = [1, 16, 16], strides = [1, 1, 1]} : vector<3x18x18xf32> to vector<1x16x16xf32>
    %135 = vector.shape_cast %134 : vector<1x16x16xf32> to vector<16x16xf32>
    %c0_55 = arith.constant 0 : index
    %c7 = arith.constant 7 : index
    %136 = memref.load %arg2[%c0_55, %c7] : memref<4x27xf32, #tpu.memory_space<smem>>
    %137 = vector.broadcast %136 : f32 to vector<16x16xf32>
    %138 = arith.mulf %137, %135 : vector<16x16xf32>
    %139 = arith.addf %121, %138 : vector<16x16xf32>
    %c1_56 = arith.constant 1 : index
    %c7_57 = arith.constant 7 : index
    %140 = memref.load %arg2[%c1_56, %c7_57] : memref<4x27xf32, #tpu.memory_space<smem>>
    %141 = vector.broadcast %140 : f32 to vector<16x16xf32>
    %142 = arith.mulf %141, %135 : vector<16x16xf32>
    %143 = arith.addf %125, %142 : vector<16x16xf32>
    %c2_58 = arith.constant 2 : index
    %c7_59 = arith.constant 7 : index
    %144 = memref.load %arg2[%c2_58, %c7_59] : memref<4x27xf32, #tpu.memory_space<smem>>
    %145 = vector.broadcast %144 : f32 to vector<16x16xf32>
    %146 = arith.mulf %145, %135 : vector<16x16xf32>
    %147 = arith.addf %129, %146 : vector<16x16xf32>
    %c3_60 = arith.constant 3 : index
    %c7_61 = arith.constant 7 : index
    %148 = memref.load %arg2[%c3_60, %c7_61] : memref<4x27xf32, #tpu.memory_space<smem>>
    %149 = vector.broadcast %148 : f32 to vector<16x16xf32>
    %150 = arith.mulf %149, %135 : vector<16x16xf32>
    %151 = arith.addf %133, %150 : vector<16x16xf32>
    %152 = vector.extract_strided_slice %3 {offsets = [0, 2, 2], sizes = [1, 16, 16], strides = [1, 1, 1]} : vector<3x18x18xf32> to vector<1x16x16xf32>
    %153 = vector.shape_cast %152 : vector<1x16x16xf32> to vector<16x16xf32>
    %c0_62 = arith.constant 0 : index
    %c8 = arith.constant 8 : index
    %154 = memref.load %arg2[%c0_62, %c8] : memref<4x27xf32, #tpu.memory_space<smem>>
    %155 = vector.broadcast %154 : f32 to vector<16x16xf32>
    %156 = arith.mulf %155, %153 : vector<16x16xf32>
    %157 = arith.addf %139, %156 : vector<16x16xf32>
    %c1_63 = arith.constant 1 : index
    %c8_64 = arith.constant 8 : index
    %158 = memref.load %arg2[%c1_63, %c8_64] : memref<4x27xf32, #tpu.memory_space<smem>>
    %159 = vector.broadcast %158 : f32 to vector<16x16xf32>
    %160 = arith.mulf %159, %153 : vector<16x16xf32>
    %161 = arith.addf %143, %160 : vector<16x16xf32>
    %c2_65 = arith.constant 2 : index
    %c8_66 = arith.constant 8 : index
    %162 = memref.load %arg2[%c2_65, %c8_66] : memref<4x27xf32, #tpu.memory_space<smem>>
    %163 = vector.broadcast %162 : f32 to vector<16x16xf32>
    %164 = arith.mulf %163, %153 : vector<16x16xf32>
    %165 = arith.addf %147, %164 : vector<16x16xf32>
    %c3_67 = arith.constant 3 : index
    %c8_68 = arith.constant 8 : index
    %166 = memref.load %arg2[%c3_67, %c8_68] : memref<4x27xf32, #tpu.memory_space<smem>>
    %167 = vector.broadcast %166 : f32 to vector<16x16xf32>
    %168 = arith.mulf %167, %153 : vector<16x16xf32>
    %169 = arith.addf %151, %168 : vector<16x16xf32>
    %170 = vector.extract_strided_slice %3 {offsets = [1, 0, 0], sizes = [1, 16, 16], strides = [1, 1, 1]} : vector<3x18x18xf32> to vector<1x16x16xf32>
    %171 = vector.shape_cast %170 : vector<1x16x16xf32> to vector<16x16xf32>
    %c0_69 = arith.constant 0 : index
    %c9 = arith.constant 9 : index
    %172 = memref.load %arg2[%c0_69, %c9] : memref<4x27xf32, #tpu.memory_space<smem>>
    %173 = vector.broadcast %172 : f32 to vector<16x16xf32>
    %174 = arith.mulf %173, %171 : vector<16x16xf32>
    %175 = arith.addf %157, %174 : vector<16x16xf32>
    %c1_70 = arith.constant 1 : index
    %c9_71 = arith.constant 9 : index
    %176 = memref.load %arg2[%c1_70, %c9_71] : memref<4x27xf32, #tpu.memory_space<smem>>
    %177 = vector.broadcast %176 : f32 to vector<16x16xf32>
    %178 = arith.mulf %177, %171 : vector<16x16xf32>
    %179 = arith.addf %161, %178 : vector<16x16xf32>
    %c2_72 = arith.constant 2 : index
    %c9_73 = arith.constant 9 : index
    %180 = memref.load %arg2[%c2_72, %c9_73] : memref<4x27xf32, #tpu.memory_space<smem>>
    %181 = vector.broadcast %180 : f32 to vector<16x16xf32>
    %182 = arith.mulf %181, %171 : vector<16x16xf32>
    %183 = arith.addf %165, %182 : vector<16x16xf32>
    %c3_74 = arith.constant 3 : index
    %c9_75 = arith.constant 9 : index
    %184 = memref.load %arg2[%c3_74, %c9_75] : memref<4x27xf32, #tpu.memory_space<smem>>
    %185 = vector.broadcast %184 : f32 to vector<16x16xf32>
    %186 = arith.mulf %185, %171 : vector<16x16xf32>
    %187 = arith.addf %169, %186 : vector<16x16xf32>
    %188 = vector.extract_strided_slice %3 {offsets = [1, 0, 1], sizes = [1, 16, 16], strides = [1, 1, 1]} : vector<3x18x18xf32> to vector<1x16x16xf32>
    %189 = vector.shape_cast %188 : vector<1x16x16xf32> to vector<16x16xf32>
    %c0_76 = arith.constant 0 : index
    %c10 = arith.constant 10 : index
    %190 = memref.load %arg2[%c0_76, %c10] : memref<4x27xf32, #tpu.memory_space<smem>>
    %191 = vector.broadcast %190 : f32 to vector<16x16xf32>
    %192 = arith.mulf %191, %189 : vector<16x16xf32>
    %193 = arith.addf %175, %192 : vector<16x16xf32>
    %c1_77 = arith.constant 1 : index
    %c10_78 = arith.constant 10 : index
    %194 = memref.load %arg2[%c1_77, %c10_78] : memref<4x27xf32, #tpu.memory_space<smem>>
    %195 = vector.broadcast %194 : f32 to vector<16x16xf32>
    %196 = arith.mulf %195, %189 : vector<16x16xf32>
    %197 = arith.addf %179, %196 : vector<16x16xf32>
    %c2_79 = arith.constant 2 : index
    %c10_80 = arith.constant 10 : index
    %198 = memref.load %arg2[%c2_79, %c10_80] : memref<4x27xf32, #tpu.memory_space<smem>>
    %199 = vector.broadcast %198 : f32 to vector<16x16xf32>
    %200 = arith.mulf %199, %189 : vector<16x16xf32>
    %201 = arith.addf %183, %200 : vector<16x16xf32>
    %c3_81 = arith.constant 3 : index
    %c10_82 = arith.constant 10 : index
    %202 = memref.load %arg2[%c3_81, %c10_82] : memref<4x27xf32, #tpu.memory_space<smem>>
    %203 = vector.broadcast %202 : f32 to vector<16x16xf32>
    %204 = arith.mulf %203, %189 : vector<16x16xf32>
    %205 = arith.addf %187, %204 : vector<16x16xf32>
    %206 = vector.extract_strided_slice %3 {offsets = [1, 0, 2], sizes = [1, 16, 16], strides = [1, 1, 1]} : vector<3x18x18xf32> to vector<1x16x16xf32>
    %207 = vector.shape_cast %206 : vector<1x16x16xf32> to vector<16x16xf32>
    %c0_83 = arith.constant 0 : index
    %c11 = arith.constant 11 : index
    %208 = memref.load %arg2[%c0_83, %c11] : memref<4x27xf32, #tpu.memory_space<smem>>
    %209 = vector.broadcast %208 : f32 to vector<16x16xf32>
    %210 = arith.mulf %209, %207 : vector<16x16xf32>
    %211 = arith.addf %193, %210 : vector<16x16xf32>
    %c1_84 = arith.constant 1 : index
    %c11_85 = arith.constant 11 : index
    %212 = memref.load %arg2[%c1_84, %c11_85] : memref<4x27xf32, #tpu.memory_space<smem>>
    %213 = vector.broadcast %212 : f32 to vector<16x16xf32>
    %214 = arith.mulf %213, %207 : vector<16x16xf32>
    %215 = arith.addf %197, %214 : vector<16x16xf32>
    %c2_86 = arith.constant 2 : index
    %c11_87 = arith.constant 11 : index
    %216 = memref.load %arg2[%c2_86, %c11_87] : memref<4x27xf32, #tpu.memory_space<smem>>
    %217 = vector.broadcast %216 : f32 to vector<16x16xf32>
    %218 = arith.mulf %217, %207 : vector<16x16xf32>
    %219 = arith.addf %201, %218 : vector<16x16xf32>
    %c3_88 = arith.constant 3 : index
    %c11_89 = arith.constant 11 : index
    %220 = memref.load %arg2[%c3_88, %c11_89] : memref<4x27xf32, #tpu.memory_space<smem>>
    %221 = vector.broadcast %220 : f32 to vector<16x16xf32>
    %222 = arith.mulf %221, %207 : vector<16x16xf32>
    %223 = arith.addf %205, %222 : vector<16x16xf32>
    %224 = vector.extract_strided_slice %3 {offsets = [1, 1, 0], sizes = [1, 16, 16], strides = [1, 1, 1]} : vector<3x18x18xf32> to vector<1x16x16xf32>
    %225 = vector.shape_cast %224 : vector<1x16x16xf32> to vector<16x16xf32>
    %c0_90 = arith.constant 0 : index
    %c12 = arith.constant 12 : index
    %226 = memref.load %arg2[%c0_90, %c12] : memref<4x27xf32, #tpu.memory_space<smem>>
    %227 = vector.broadcast %226 : f32 to vector<16x16xf32>
    %228 = arith.mulf %227, %225 : vector<16x16xf32>
    %229 = arith.addf %211, %228 : vector<16x16xf32>
    %c1_91 = arith.constant 1 : index
    %c12_92 = arith.constant 12 : index
    %230 = memref.load %arg2[%c1_91, %c12_92] : memref<4x27xf32, #tpu.memory_space<smem>>
    %231 = vector.broadcast %230 : f32 to vector<16x16xf32>
    %232 = arith.mulf %231, %225 : vector<16x16xf32>
    %233 = arith.addf %215, %232 : vector<16x16xf32>
    %c2_93 = arith.constant 2 : index
    %c12_94 = arith.constant 12 : index
    %234 = memref.load %arg2[%c2_93, %c12_94] : memref<4x27xf32, #tpu.memory_space<smem>>
    %235 = vector.broadcast %234 : f32 to vector<16x16xf32>
    %236 = arith.mulf %235, %225 : vector<16x16xf32>
    %237 = arith.addf %219, %236 : vector<16x16xf32>
    %c3_95 = arith.constant 3 : index
    %c12_96 = arith.constant 12 : index
    %238 = memref.load %arg2[%c3_95, %c12_96] : memref<4x27xf32, #tpu.memory_space<smem>>
    %239 = vector.broadcast %238 : f32 to vector<16x16xf32>
    %240 = arith.mulf %239, %225 : vector<16x16xf32>
    %241 = arith.addf %223, %240 : vector<16x16xf32>
    %242 = vector.extract_strided_slice %3 {offsets = [1, 1, 1], sizes = [1, 16, 16], strides = [1, 1, 1]} : vector<3x18x18xf32> to vector<1x16x16xf32>
    %243 = vector.shape_cast %242 : vector<1x16x16xf32> to vector<16x16xf32>
    %c0_97 = arith.constant 0 : index
    %c13 = arith.constant 13 : index
    %244 = memref.load %arg2[%c0_97, %c13] : memref<4x27xf32, #tpu.memory_space<smem>>
    %245 = vector.broadcast %244 : f32 to vector<16x16xf32>
    %246 = arith.mulf %245, %243 : vector<16x16xf32>
    %247 = arith.addf %229, %246 : vector<16x16xf32>
    %c1_98 = arith.constant 1 : index
    %c13_99 = arith.constant 13 : index
    %248 = memref.load %arg2[%c1_98, %c13_99] : memref<4x27xf32, #tpu.memory_space<smem>>
    %249 = vector.broadcast %248 : f32 to vector<16x16xf32>
    %250 = arith.mulf %249, %243 : vector<16x16xf32>
    %251 = arith.addf %233, %250 : vector<16x16xf32>
    %c2_100 = arith.constant 2 : index
    %c13_101 = arith.constant 13 : index
    %252 = memref.load %arg2[%c2_100, %c13_101] : memref<4x27xf32, #tpu.memory_space<smem>>
    %253 = vector.broadcast %252 : f32 to vector<16x16xf32>
    %254 = arith.mulf %253, %243 : vector<16x16xf32>
    %255 = arith.addf %237, %254 : vector<16x16xf32>
    %c3_102 = arith.constant 3 : index
    %c13_103 = arith.constant 13 : index
    %256 = memref.load %arg2[%c3_102, %c13_103] : memref<4x27xf32, #tpu.memory_space<smem>>
    %257 = vector.broadcast %256 : f32 to vector<16x16xf32>
    %258 = arith.mulf %257, %243 : vector<16x16xf32>
    %259 = arith.addf %241, %258 : vector<16x16xf32>
    %260 = vector.extract_strided_slice %3 {offsets = [1, 1, 2], sizes = [1, 16, 16], strides = [1, 1, 1]} : vector<3x18x18xf32> to vector<1x16x16xf32>
    %261 = vector.shape_cast %260 : vector<1x16x16xf32> to vector<16x16xf32>
    %c0_104 = arith.constant 0 : index
    %c14 = arith.constant 14 : index
    %262 = memref.load %arg2[%c0_104, %c14] : memref<4x27xf32, #tpu.memory_space<smem>>
    %263 = vector.broadcast %262 : f32 to vector<16x16xf32>
    %264 = arith.mulf %263, %261 : vector<16x16xf32>
    %265 = arith.addf %247, %264 : vector<16x16xf32>
    %c1_105 = arith.constant 1 : index
    %c14_106 = arith.constant 14 : index
    %266 = memref.load %arg2[%c1_105, %c14_106] : memref<4x27xf32, #tpu.memory_space<smem>>
    %267 = vector.broadcast %266 : f32 to vector<16x16xf32>
    %268 = arith.mulf %267, %261 : vector<16x16xf32>
    %269 = arith.addf %251, %268 : vector<16x16xf32>
    %c2_107 = arith.constant 2 : index
    %c14_108 = arith.constant 14 : index
    %270 = memref.load %arg2[%c2_107, %c14_108] : memref<4x27xf32, #tpu.memory_space<smem>>
    %271 = vector.broadcast %270 : f32 to vector<16x16xf32>
    %272 = arith.mulf %271, %261 : vector<16x16xf32>
    %273 = arith.addf %255, %272 : vector<16x16xf32>
    %c3_109 = arith.constant 3 : index
    %c14_110 = arith.constant 14 : index
    %274 = memref.load %arg2[%c3_109, %c14_110] : memref<4x27xf32, #tpu.memory_space<smem>>
    %275 = vector.broadcast %274 : f32 to vector<16x16xf32>
    %276 = arith.mulf %275, %261 : vector<16x16xf32>
    %277 = arith.addf %259, %276 : vector<16x16xf32>
    %278 = vector.extract_strided_slice %3 {offsets = [1, 2, 0], sizes = [1, 16, 16], strides = [1, 1, 1]} : vector<3x18x18xf32> to vector<1x16x16xf32>
    %279 = vector.shape_cast %278 : vector<1x16x16xf32> to vector<16x16xf32>
    %c0_111 = arith.constant 0 : index
    %c15 = arith.constant 15 : index
    %280 = memref.load %arg2[%c0_111, %c15] : memref<4x27xf32, #tpu.memory_space<smem>>
    %281 = vector.broadcast %280 : f32 to vector<16x16xf32>
    %282 = arith.mulf %281, %279 : vector<16x16xf32>
    %283 = arith.addf %265, %282 : vector<16x16xf32>
    %c1_112 = arith.constant 1 : index
    %c15_113 = arith.constant 15 : index
    %284 = memref.load %arg2[%c1_112, %c15_113] : memref<4x27xf32, #tpu.memory_space<smem>>
    %285 = vector.broadcast %284 : f32 to vector<16x16xf32>
    %286 = arith.mulf %285, %279 : vector<16x16xf32>
    %287 = arith.addf %269, %286 : vector<16x16xf32>
    %c2_114 = arith.constant 2 : index
    %c15_115 = arith.constant 15 : index
    %288 = memref.load %arg2[%c2_114, %c15_115] : memref<4x27xf32, #tpu.memory_space<smem>>
    %289 = vector.broadcast %288 : f32 to vector<16x16xf32>
    %290 = arith.mulf %289, %279 : vector<16x16xf32>
    %291 = arith.addf %273, %290 : vector<16x16xf32>
    %c3_116 = arith.constant 3 : index
    %c15_117 = arith.constant 15 : index
    %292 = memref.load %arg2[%c3_116, %c15_117] : memref<4x27xf32, #tpu.memory_space<smem>>
    %293 = vector.broadcast %292 : f32 to vector<16x16xf32>
    %294 = arith.mulf %293, %279 : vector<16x16xf32>
    %295 = arith.addf %277, %294 : vector<16x16xf32>
    %296 = vector.extract_strided_slice %3 {offsets = [1, 2, 1], sizes = [1, 16, 16], strides = [1, 1, 1]} : vector<3x18x18xf32> to vector<1x16x16xf32>
    %297 = vector.shape_cast %296 : vector<1x16x16xf32> to vector<16x16xf32>
    %c0_118 = arith.constant 0 : index
    %c16 = arith.constant 16 : index
    %298 = memref.load %arg2[%c0_118, %c16] : memref<4x27xf32, #tpu.memory_space<smem>>
    %299 = vector.broadcast %298 : f32 to vector<16x16xf32>
    %300 = arith.mulf %299, %297 : vector<16x16xf32>
    %301 = arith.addf %283, %300 : vector<16x16xf32>
    %c1_119 = arith.constant 1 : index
    %c16_120 = arith.constant 16 : index
    %302 = memref.load %arg2[%c1_119, %c16_120] : memref<4x27xf32, #tpu.memory_space<smem>>
    %303 = vector.broadcast %302 : f32 to vector<16x16xf32>
    %304 = arith.mulf %303, %297 : vector<16x16xf32>
    %305 = arith.addf %287, %304 : vector<16x16xf32>
    %c2_121 = arith.constant 2 : index
    %c16_122 = arith.constant 16 : index
    %306 = memref.load %arg2[%c2_121, %c16_122] : memref<4x27xf32, #tpu.memory_space<smem>>
    %307 = vector.broadcast %306 : f32 to vector<16x16xf32>
    %308 = arith.mulf %307, %297 : vector<16x16xf32>
    %309 = arith.addf %291, %308 : vector<16x16xf32>
    %c3_123 = arith.constant 3 : index
    %c16_124 = arith.constant 16 : index
    %310 = memref.load %arg2[%c3_123, %c16_124] : memref<4x27xf32, #tpu.memory_space<smem>>
    %311 = vector.broadcast %310 : f32 to vector<16x16xf32>
    %312 = arith.mulf %311, %297 : vector<16x16xf32>
    %313 = arith.addf %295, %312 : vector<16x16xf32>
    %314 = vector.extract_strided_slice %3 {offsets = [1, 2, 2], sizes = [1, 16, 16], strides = [1, 1, 1]} : vector<3x18x18xf32> to vector<1x16x16xf32>
    %315 = vector.shape_cast %314 : vector<1x16x16xf32> to vector<16x16xf32>
    %c0_125 = arith.constant 0 : index
    %c17 = arith.constant 17 : index
    %316 = memref.load %arg2[%c0_125, %c17] : memref<4x27xf32, #tpu.memory_space<smem>>
    %317 = vector.broadcast %316 : f32 to vector<16x16xf32>
    %318 = arith.mulf %317, %315 : vector<16x16xf32>
    %319 = arith.addf %301, %318 : vector<16x16xf32>
    %c1_126 = arith.constant 1 : index
    %c17_127 = arith.constant 17 : index
    %320 = memref.load %arg2[%c1_126, %c17_127] : memref<4x27xf32, #tpu.memory_space<smem>>
    %321 = vector.broadcast %320 : f32 to vector<16x16xf32>
    %322 = arith.mulf %321, %315 : vector<16x16xf32>
    %323 = arith.addf %305, %322 : vector<16x16xf32>
    %c2_128 = arith.constant 2 : index
    %c17_129 = arith.constant 17 : index
    %324 = memref.load %arg2[%c2_128, %c17_129] : memref<4x27xf32, #tpu.memory_space<smem>>
    %325 = vector.broadcast %324 : f32 to vector<16x16xf32>
    %326 = arith.mulf %325, %315 : vector<16x16xf32>
    %327 = arith.addf %309, %326 : vector<16x16xf32>
    %c3_130 = arith.constant 3 : index
    %c17_131 = arith.constant 17 : index
    %328 = memref.load %arg2[%c3_130, %c17_131] : memref<4x27xf32, #tpu.memory_space<smem>>
    %329 = vector.broadcast %328 : f32 to vector<16x16xf32>
    %330 = arith.mulf %329, %315 : vector<16x16xf32>
    %331 = arith.addf %313, %330 : vector<16x16xf32>
    %332 = vector.extract_strided_slice %3 {offsets = [2, 0, 0], sizes = [1, 16, 16], strides = [1, 1, 1]} : vector<3x18x18xf32> to vector<1x16x16xf32>
    %333 = vector.shape_cast %332 : vector<1x16x16xf32> to vector<16x16xf32>
    %c0_132 = arith.constant 0 : index
    %c18 = arith.constant 18 : index
    %334 = memref.load %arg2[%c0_132, %c18] : memref<4x27xf32, #tpu.memory_space<smem>>
    %335 = vector.broadcast %334 : f32 to vector<16x16xf32>
    %336 = arith.mulf %335, %333 : vector<16x16xf32>
    %337 = arith.addf %319, %336 : vector<16x16xf32>
    %c1_133 = arith.constant 1 : index
    %c18_134 = arith.constant 18 : index
    %338 = memref.load %arg2[%c1_133, %c18_134] : memref<4x27xf32, #tpu.memory_space<smem>>
    %339 = vector.broadcast %338 : f32 to vector<16x16xf32>
    %340 = arith.mulf %339, %333 : vector<16x16xf32>
    %341 = arith.addf %323, %340 : vector<16x16xf32>
    %c2_135 = arith.constant 2 : index
    %c18_136 = arith.constant 18 : index
    %342 = memref.load %arg2[%c2_135, %c18_136] : memref<4x27xf32, #tpu.memory_space<smem>>
    %343 = vector.broadcast %342 : f32 to vector<16x16xf32>
    %344 = arith.mulf %343, %333 : vector<16x16xf32>
    %345 = arith.addf %327, %344 : vector<16x16xf32>
    %c3_137 = arith.constant 3 : index
    %c18_138 = arith.constant 18 : index
    %346 = memref.load %arg2[%c3_137, %c18_138] : memref<4x27xf32, #tpu.memory_space<smem>>
    %347 = vector.broadcast %346 : f32 to vector<16x16xf32>
    %348 = arith.mulf %347, %333 : vector<16x16xf32>
    %349 = arith.addf %331, %348 : vector<16x16xf32>
    %350 = vector.extract_strided_slice %3 {offsets = [2, 0, 1], sizes = [1, 16, 16], strides = [1, 1, 1]} : vector<3x18x18xf32> to vector<1x16x16xf32>
    %351 = vector.shape_cast %350 : vector<1x16x16xf32> to vector<16x16xf32>
    %c0_139 = arith.constant 0 : index
    %c19 = arith.constant 19 : index
    %352 = memref.load %arg2[%c0_139, %c19] : memref<4x27xf32, #tpu.memory_space<smem>>
    %353 = vector.broadcast %352 : f32 to vector<16x16xf32>
    %354 = arith.mulf %353, %351 : vector<16x16xf32>
    %355 = arith.addf %337, %354 : vector<16x16xf32>
    %c1_140 = arith.constant 1 : index
    %c19_141 = arith.constant 19 : index
    %356 = memref.load %arg2[%c1_140, %c19_141] : memref<4x27xf32, #tpu.memory_space<smem>>
    %357 = vector.broadcast %356 : f32 to vector<16x16xf32>
    %358 = arith.mulf %357, %351 : vector<16x16xf32>
    %359 = arith.addf %341, %358 : vector<16x16xf32>
    %c2_142 = arith.constant 2 : index
    %c19_143 = arith.constant 19 : index
    %360 = memref.load %arg2[%c2_142, %c19_143] : memref<4x27xf32, #tpu.memory_space<smem>>
    %361 = vector.broadcast %360 : f32 to vector<16x16xf32>
    %362 = arith.mulf %361, %351 : vector<16x16xf32>
    %363 = arith.addf %345, %362 : vector<16x16xf32>
    %c3_144 = arith.constant 3 : index
    %c19_145 = arith.constant 19 : index
    %364 = memref.load %arg2[%c3_144, %c19_145] : memref<4x27xf32, #tpu.memory_space<smem>>
    %365 = vector.broadcast %364 : f32 to vector<16x16xf32>
    %366 = arith.mulf %365, %351 : vector<16x16xf32>
    %367 = arith.addf %349, %366 : vector<16x16xf32>
    %368 = vector.extract_strided_slice %3 {offsets = [2, 0, 2], sizes = [1, 16, 16], strides = [1, 1, 1]} : vector<3x18x18xf32> to vector<1x16x16xf32>
    %369 = vector.shape_cast %368 : vector<1x16x16xf32> to vector<16x16xf32>
    %c0_146 = arith.constant 0 : index
    %c20 = arith.constant 20 : index
    %370 = memref.load %arg2[%c0_146, %c20] : memref<4x27xf32, #tpu.memory_space<smem>>
    %371 = vector.broadcast %370 : f32 to vector<16x16xf32>
    %372 = arith.mulf %371, %369 : vector<16x16xf32>
    %373 = arith.addf %355, %372 : vector<16x16xf32>
    %c1_147 = arith.constant 1 : index
    %c20_148 = arith.constant 20 : index
    %374 = memref.load %arg2[%c1_147, %c20_148] : memref<4x27xf32, #tpu.memory_space<smem>>
    %375 = vector.broadcast %374 : f32 to vector<16x16xf32>
    %376 = arith.mulf %375, %369 : vector<16x16xf32>
    %377 = arith.addf %359, %376 : vector<16x16xf32>
    %c2_149 = arith.constant 2 : index
    %c20_150 = arith.constant 20 : index
    %378 = memref.load %arg2[%c2_149, %c20_150] : memref<4x27xf32, #tpu.memory_space<smem>>
    %379 = vector.broadcast %378 : f32 to vector<16x16xf32>
    %380 = arith.mulf %379, %369 : vector<16x16xf32>
    %381 = arith.addf %363, %380 : vector<16x16xf32>
    %c3_151 = arith.constant 3 : index
    %c20_152 = arith.constant 20 : index
    %382 = memref.load %arg2[%c3_151, %c20_152] : memref<4x27xf32, #tpu.memory_space<smem>>
    %383 = vector.broadcast %382 : f32 to vector<16x16xf32>
    %384 = arith.mulf %383, %369 : vector<16x16xf32>
    %385 = arith.addf %367, %384 : vector<16x16xf32>
    %386 = vector.extract_strided_slice %3 {offsets = [2, 1, 0], sizes = [1, 16, 16], strides = [1, 1, 1]} : vector<3x18x18xf32> to vector<1x16x16xf32>
    %387 = vector.shape_cast %386 : vector<1x16x16xf32> to vector<16x16xf32>
    %c0_153 = arith.constant 0 : index
    %c21 = arith.constant 21 : index
    %388 = memref.load %arg2[%c0_153, %c21] : memref<4x27xf32, #tpu.memory_space<smem>>
    %389 = vector.broadcast %388 : f32 to vector<16x16xf32>
    %390 = arith.mulf %389, %387 : vector<16x16xf32>
    %391 = arith.addf %373, %390 : vector<16x16xf32>
    %c1_154 = arith.constant 1 : index
    %c21_155 = arith.constant 21 : index
    %392 = memref.load %arg2[%c1_154, %c21_155] : memref<4x27xf32, #tpu.memory_space<smem>>
    %393 = vector.broadcast %392 : f32 to vector<16x16xf32>
    %394 = arith.mulf %393, %387 : vector<16x16xf32>
    %395 = arith.addf %377, %394 : vector<16x16xf32>
    %c2_156 = arith.constant 2 : index
    %c21_157 = arith.constant 21 : index
    %396 = memref.load %arg2[%c2_156, %c21_157] : memref<4x27xf32, #tpu.memory_space<smem>>
    %397 = vector.broadcast %396 : f32 to vector<16x16xf32>
    %398 = arith.mulf %397, %387 : vector<16x16xf32>
    %399 = arith.addf %381, %398 : vector<16x16xf32>
    %c3_158 = arith.constant 3 : index
    %c21_159 = arith.constant 21 : index
    %400 = memref.load %arg2[%c3_158, %c21_159] : memref<4x27xf32, #tpu.memory_space<smem>>
    %401 = vector.broadcast %400 : f32 to vector<16x16xf32>
    %402 = arith.mulf %401, %387 : vector<16x16xf32>
    %403 = arith.addf %385, %402 : vector<16x16xf32>
    %404 = vector.extract_strided_slice %3 {offsets = [2, 1, 1], sizes = [1, 16, 16], strides = [1, 1, 1]} : vector<3x18x18xf32> to vector<1x16x16xf32>
    %405 = vector.shape_cast %404 : vector<1x16x16xf32> to vector<16x16xf32>
    %c0_160 = arith.constant 0 : index
    %c22 = arith.constant 22 : index
    %406 = memref.load %arg2[%c0_160, %c22] : memref<4x27xf32, #tpu.memory_space<smem>>
    %407 = vector.broadcast %406 : f32 to vector<16x16xf32>
    %408 = arith.mulf %407, %405 : vector<16x16xf32>
    %409 = arith.addf %391, %408 : vector<16x16xf32>
    %c1_161 = arith.constant 1 : index
    %c22_162 = arith.constant 22 : index
    %410 = memref.load %arg2[%c1_161, %c22_162] : memref<4x27xf32, #tpu.memory_space<smem>>
    %411 = vector.broadcast %410 : f32 to vector<16x16xf32>
    %412 = arith.mulf %411, %405 : vector<16x16xf32>
    %413 = arith.addf %395, %412 : vector<16x16xf32>
    %c2_163 = arith.constant 2 : index
    %c22_164 = arith.constant 22 : index
    %414 = memref.load %arg2[%c2_163, %c22_164] : memref<4x27xf32, #tpu.memory_space<smem>>
    %415 = vector.broadcast %414 : f32 to vector<16x16xf32>
    %416 = arith.mulf %415, %405 : vector<16x16xf32>
    %417 = arith.addf %399, %416 : vector<16x16xf32>
    %c3_165 = arith.constant 3 : index
    %c22_166 = arith.constant 22 : index
    %418 = memref.load %arg2[%c3_165, %c22_166] : memref<4x27xf32, #tpu.memory_space<smem>>
    %419 = vector.broadcast %418 : f32 to vector<16x16xf32>
    %420 = arith.mulf %419, %405 : vector<16x16xf32>
    %421 = arith.addf %403, %420 : vector<16x16xf32>
    %422 = vector.extract_strided_slice %3 {offsets = [2, 1, 2], sizes = [1, 16, 16], strides = [1, 1, 1]} : vector<3x18x18xf32> to vector<1x16x16xf32>
    %423 = vector.shape_cast %422 : vector<1x16x16xf32> to vector<16x16xf32>
    %c0_167 = arith.constant 0 : index
    %c23 = arith.constant 23 : index
    %424 = memref.load %arg2[%c0_167, %c23] : memref<4x27xf32, #tpu.memory_space<smem>>
    %425 = vector.broadcast %424 : f32 to vector<16x16xf32>
    %426 = arith.mulf %425, %423 : vector<16x16xf32>
    %427 = arith.addf %409, %426 : vector<16x16xf32>
    %c1_168 = arith.constant 1 : index
    %c23_169 = arith.constant 23 : index
    %428 = memref.load %arg2[%c1_168, %c23_169] : memref<4x27xf32, #tpu.memory_space<smem>>
    %429 = vector.broadcast %428 : f32 to vector<16x16xf32>
    %430 = arith.mulf %429, %423 : vector<16x16xf32>
    %431 = arith.addf %413, %430 : vector<16x16xf32>
    %c2_170 = arith.constant 2 : index
    %c23_171 = arith.constant 23 : index
    %432 = memref.load %arg2[%c2_170, %c23_171] : memref<4x27xf32, #tpu.memory_space<smem>>
    %433 = vector.broadcast %432 : f32 to vector<16x16xf32>
    %434 = arith.mulf %433, %423 : vector<16x16xf32>
    %435 = arith.addf %417, %434 : vector<16x16xf32>
    %c3_172 = arith.constant 3 : index
    %c23_173 = arith.constant 23 : index
    %436 = memref.load %arg2[%c3_172, %c23_173] : memref<4x27xf32, #tpu.memory_space<smem>>
    %437 = vector.broadcast %436 : f32 to vector<16x16xf32>
    %438 = arith.mulf %437, %423 : vector<16x16xf32>
    %439 = arith.addf %421, %438 : vector<16x16xf32>
    %440 = vector.extract_strided_slice %3 {offsets = [2, 2, 0], sizes = [1, 16, 16], strides = [1, 1, 1]} : vector<3x18x18xf32> to vector<1x16x16xf32>
    %441 = vector.shape_cast %440 : vector<1x16x16xf32> to vector<16x16xf32>
    %c0_174 = arith.constant 0 : index
    %c24 = arith.constant 24 : index
    %442 = memref.load %arg2[%c0_174, %c24] : memref<4x27xf32, #tpu.memory_space<smem>>
    %443 = vector.broadcast %442 : f32 to vector<16x16xf32>
    %444 = arith.mulf %443, %441 : vector<16x16xf32>
    %445 = arith.addf %427, %444 : vector<16x16xf32>
    %c1_175 = arith.constant 1 : index
    %c24_176 = arith.constant 24 : index
    %446 = memref.load %arg2[%c1_175, %c24_176] : memref<4x27xf32, #tpu.memory_space<smem>>
    %447 = vector.broadcast %446 : f32 to vector<16x16xf32>
    %448 = arith.mulf %447, %441 : vector<16x16xf32>
    %449 = arith.addf %431, %448 : vector<16x16xf32>
    %c2_177 = arith.constant 2 : index
    %c24_178 = arith.constant 24 : index
    %450 = memref.load %arg2[%c2_177, %c24_178] : memref<4x27xf32, #tpu.memory_space<smem>>
    %451 = vector.broadcast %450 : f32 to vector<16x16xf32>
    %452 = arith.mulf %451, %441 : vector<16x16xf32>
    %453 = arith.addf %435, %452 : vector<16x16xf32>
    %c3_179 = arith.constant 3 : index
    %c24_180 = arith.constant 24 : index
    %454 = memref.load %arg2[%c3_179, %c24_180] : memref<4x27xf32, #tpu.memory_space<smem>>
    %455 = vector.broadcast %454 : f32 to vector<16x16xf32>
    %456 = arith.mulf %455, %441 : vector<16x16xf32>
    %457 = arith.addf %439, %456 : vector<16x16xf32>
    %458 = vector.extract_strided_slice %3 {offsets = [2, 2, 1], sizes = [1, 16, 16], strides = [1, 1, 1]} : vector<3x18x18xf32> to vector<1x16x16xf32>
    %459 = vector.shape_cast %458 : vector<1x16x16xf32> to vector<16x16xf32>
    %c0_181 = arith.constant 0 : index
    %c25 = arith.constant 25 : index
    %460 = memref.load %arg2[%c0_181, %c25] : memref<4x27xf32, #tpu.memory_space<smem>>
    %461 = vector.broadcast %460 : f32 to vector<16x16xf32>
    %462 = arith.mulf %461, %459 : vector<16x16xf32>
    %463 = arith.addf %445, %462 : vector<16x16xf32>
    %c1_182 = arith.constant 1 : index
    %c25_183 = arith.constant 25 : index
    %464 = memref.load %arg2[%c1_182, %c25_183] : memref<4x27xf32, #tpu.memory_space<smem>>
    %465 = vector.broadcast %464 : f32 to vector<16x16xf32>
    %466 = arith.mulf %465, %459 : vector<16x16xf32>
    %467 = arith.addf %449, %466 : vector<16x16xf32>
    %c2_184 = arith.constant 2 : index
    %c25_185 = arith.constant 25 : index
    %468 = memref.load %arg2[%c2_184, %c25_185] : memref<4x27xf32, #tpu.memory_space<smem>>
    %469 = vector.broadcast %468 : f32 to vector<16x16xf32>
    %470 = arith.mulf %469, %459 : vector<16x16xf32>
    %471 = arith.addf %453, %470 : vector<16x16xf32>
    %c3_186 = arith.constant 3 : index
    %c25_187 = arith.constant 25 : index
    %472 = memref.load %arg2[%c3_186, %c25_187] : memref<4x27xf32, #tpu.memory_space<smem>>
    %473 = vector.broadcast %472 : f32 to vector<16x16xf32>
    %474 = arith.mulf %473, %459 : vector<16x16xf32>
    %475 = arith.addf %457, %474 : vector<16x16xf32>
    %476 = vector.extract_strided_slice %3 {offsets = [2, 2, 2], sizes = [1, 16, 16], strides = [1, 1, 1]} : vector<3x18x18xf32> to vector<1x16x16xf32>
    %477 = vector.shape_cast %476 : vector<1x16x16xf32> to vector<16x16xf32>
    %c0_188 = arith.constant 0 : index
    %c26 = arith.constant 26 : index
    %478 = memref.load %arg2[%c0_188, %c26] : memref<4x27xf32, #tpu.memory_space<smem>>
    %479 = vector.broadcast %478 : f32 to vector<16x16xf32>
    %480 = arith.mulf %479, %477 : vector<16x16xf32>
    %481 = arith.addf %463, %480 : vector<16x16xf32>
    %c1_189 = arith.constant 1 : index
    %c26_190 = arith.constant 26 : index
    %482 = memref.load %arg2[%c1_189, %c26_190] : memref<4x27xf32, #tpu.memory_space<smem>>
    %483 = vector.broadcast %482 : f32 to vector<16x16xf32>
    %484 = arith.mulf %483, %477 : vector<16x16xf32>
    %485 = arith.addf %467, %484 : vector<16x16xf32>
    %c2_191 = arith.constant 2 : index
    %c26_192 = arith.constant 26 : index
    %486 = memref.load %arg2[%c2_191, %c26_192] : memref<4x27xf32, #tpu.memory_space<smem>>
    %487 = vector.broadcast %486 : f32 to vector<16x16xf32>
    %488 = arith.mulf %487, %477 : vector<16x16xf32>
    %489 = arith.addf %471, %488 : vector<16x16xf32>
    %c3_193 = arith.constant 3 : index
    %c26_194 = arith.constant 26 : index
    %490 = memref.load %arg2[%c3_193, %c26_194] : memref<4x27xf32, #tpu.memory_space<smem>>
    %491 = vector.broadcast %490 : f32 to vector<16x16xf32>
    %492 = arith.mulf %491, %477 : vector<16x16xf32>
    %493 = arith.addf %475, %492 : vector<16x16xf32>
    %494 = arith.truncf %481 : vector<16x16xf32> to vector<16x16xbf16>
    %c0_195 = arith.constant 0 : index
    %c0_196 = arith.constant 0 : index
    %c0_197 = arith.constant 0 : index
    %c0_198 = arith.constant 0 : index
    %c0_199 = arith.constant 0 : index
    %495 = vector.load %arg4[%c0_195, %c0_196, %c0_197, %c0_198, %c0_199] : memref<4x1x1x16x16xbf16, #tpu.memory_space<vmem>>, vector<1x1x1x16x16xbf16>
    %496 = vector.shape_cast %495 : vector<1x1x1x16x16xbf16> to vector<16x16xbf16>
    %497 = vector.shape_cast %494 : vector<16x16xbf16> to vector<1x1x1x16x16xbf16>
    tpu.vector_store %arg4[%c0_195, %c0_196, %c0_197, %c0_198, %c0_199], %497 {strides = array<i32>} : memref<4x1x1x16x16xbf16, #tpu.memory_space<vmem>>, vector<1x1x1x16x16xbf16>,
    %498 = arith.truncf %485 : vector<16x16xf32> to vector<16x16xbf16>
    %c1_200 = arith.constant 1 : index
    %c0_201 = arith.constant 0 : index
    %c0_202 = arith.constant 0 : index
    %c0_203 = arith.constant 0 : index
    %c0_204 = arith.constant 0 : index
    %499 = vector.load %arg4[%c1_200, %c0_201, %c0_202, %c0_203, %c0_204] : memref<4x1x1x16x16xbf16, #tpu.memory_space<vmem>>, vector<1x1x1x16x16xbf16>
    %500 = vector.shape_cast %499 : vector<1x1x1x16x16xbf16> to vector<16x16xbf16>
    %501 = vector.shape_cast %498 : vector<16x16xbf16> to vector<1x1x1x16x16xbf16>
    tpu.vector_store %arg4[%c1_200, %c0_201, %c0_202, %c0_203, %c0_204], %501 {strides = array<i32>} : memref<4x1x1x16x16xbf16, #tpu.memory_space<vmem>>, vector<1x1x1x16x16xbf16>,
    %502 = arith.truncf %489 : vector<16x16xf32> to vector<16x16xbf16>
    %c2_205 = arith.constant 2 : index
    %c0_206 = arith.constant 0 : index
    %c0_207 = arith.constant 0 : index
    %c0_208 = arith.constant 0 : index
    %c0_209 = arith.constant 0 : index
    %503 = vector.load %arg4[%c2_205, %c0_206, %c0_207, %c0_208, %c0_209] : memref<4x1x1x16x16xbf16, #tpu.memory_space<vmem>>, vector<1x1x1x16x16xbf16>
    %504 = vector.shape_cast %503 : vector<1x1x1x16x16xbf16> to vector<16x16xbf16>
    %505 = vector.shape_cast %502 : vector<16x16xbf16> to vector<1x1x1x16x16xbf16>
    tpu.vector_store %arg4[%c2_205, %c0_206, %c0_207, %c0_208, %c0_209], %505 {strides = array<i32>} : memref<4x1x1x16x16xbf16, #tpu.memory_space<vmem>>, vector<1x1x1x16x16xbf16>,
    %506 = arith.truncf %493 : vector<16x16xf32> to vector<16x16xbf16>
    %c3_210 = arith.constant 3 : index
    %c0_211 = arith.constant 0 : index
    %c0_212 = arith.constant 0 : index
    %c0_213 = arith.constant 0 : index
    %c0_214 = arith.constant 0 : index
    %507 = vector.load %arg4[%c3_210, %c0_211, %c0_212, %c0_213, %c0_214] : memref<4x1x1x16x16xbf16, #tpu.memory_space<vmem>>, vector<1x1x1x16x16xbf16>
    %508 = vector.shape_cast %507 : vector<1x1x1x16x16xbf16> to vector<16x16xbf16>
    %509 = vector.shape_cast %506 : vector<16x16xbf16> to vector<1x1x1x16x16xbf16>
    tpu.vector_store %arg4[%c3_210, %c0_211, %c0_212, %c0_213, %c0_214], %509 {strides = array<i32>} : memref<4x1x1x16x16xbf16, #tpu.memory_space<vmem>>, vector<1x1x1x16x16xbf16>,
    return
  }
  func.func @transform_0(%arg0: i32, %arg1: i32) -> (i32, i32) {
    %c0_i32 = arith.constant 0 : i32
    %c0_i32_0 = arith.constant 0 : i32
    %c0_i32_1 = arith.constant 0 : i32
    return %c0_i32, %c0_i32_0 : i32, i32
  }
  func.func @transform_1(%arg0: i32, %arg1: i32) -> (i32, i32, i32, i32) {
    %c0_i32 = arith.constant 0 : i32
    %c0_i32_0 = arith.constant 0 : i32
    %c0_i32_1 = arith.constant 0 : i32
    %c0_i32_2 = arith.constant 0 : i32
    return %arg0, %c0_i32, %c0_i32_0, %c0_i32_1 : i32, i32, i32, i32
  }
  func.func @transform_2(%arg0: i32, %arg1: i32) -> (i32, i32, i32, i32, i32) {
    %c0_i32 = arith.constant 0 : i32
    %c0_i32_0 = arith.constant 0 : i32
    %c0_i32_1 = arith.constant 0 : i32
    %c0_i32_2 = arith.constant 0 : i32
    return %c0_i32, %arg0, %arg1, %c0_i32_0, %c0_i32_1 : i32, i32, i32, i32, i32
  }
}

module attributes {stable_mosaic.version = 11 : i64} {
  func.func @_conv_matmul_kernel(%arg0: i32, %arg1: memref<8x256xbf16, #tpu.memory_space<vmem>>, %arg2: memref<256x1024xbf16, #tpu.memory_space<vmem>>, %arg3: memref<8x1024xbf16, #tpu.memory_space<vmem>>) attributes {dimension_semantics = [#tpu.dimension_semantics<parallel>], iteration_bounds = array<i64: 1>, scalar_prefetch = 0 : i64, scratch_operands = 0 : i64, tpu.core_type = #tpu.core_type<tc>, window_params = [{pipeline_mode = #tpu.pipeline_mode<synchronous>, transform_indices = @transform_0, window_bounds = array<i64: 8, 256>}, {transform_indices = @transform_1, window_bounds = array<i64: 256, 1024>}, {transform_indices = @transform_2, window_bounds = array<i64: 8, 1024>}]} {
    %c0 = arith.constant 0 : index
    %c0_0 = arith.constant 0 : index
    %0 = vector.load %arg1[%c0, %c0_0] : memref<8x256xbf16, #tpu.memory_space<vmem>>, vector<8x256xbf16>
    %c0_1 = arith.constant 0 : index
    %c0_2 = arith.constant 0 : index
    %1 = vector.load %arg2[%c0_1, %c0_2] : memref<256x1024xbf16, #tpu.memory_space<vmem>>, vector<256x1024xbf16>
    %cst = arith.constant dense<0.000000e+00> : vector<8x1024xf32>
    %2 = tpu.matmul %0, %1, %cst {dimension_numbers = #tpu.dot_dimension_numbers<[1], [0], [0], [1], [0, 0, 1, 1], [], []>} : vector<8x256xbf16>, vector<256x1024xbf16>, vector<8x1024xf32> -> vector<8x1024xf32>
    %cst_3 = arith.constant 2.000000e-01 : f32
    %3 = vector.broadcast %cst_3 : f32 to vector<8x1024xf32>
    %4 = arith.mulf %2, %3 : vector<8x1024xf32>
    %5 = arith.maximumf %2, %4 : vector<8x1024xf32>
    %6 = arith.truncf %5 : vector<8x1024xf32> to vector<8x1024xbf16>
    %c0_4 = arith.constant 0 : index
    %c0_5 = arith.constant 0 : index
    %7 = vector.load %arg3[%c0_4, %c0_5] : memref<8x1024xbf16, #tpu.memory_space<vmem>>, vector<8x1024xbf16>
    tpu.vector_store %arg3[%c0_4, %c0_5], %6 {strides = array<i32>} : memref<8x1024xbf16, #tpu.memory_space<vmem>>, vector<8x1024xbf16>,
    return
  }
  func.func @transform_0(%arg0: i32) -> (i32, i32) {
    %c0_i32 = arith.constant 0 : i32
    %c0_i32_0 = arith.constant 0 : i32
    %c0_i32_1 = arith.constant 0 : i32
    return %c0_i32, %c0_i32_0 : i32, i32
  }
  func.func @transform_1(%arg0: i32) -> (i32, i32) {
    %c0_i32 = arith.constant 0 : i32
    %c0_i32_0 = arith.constant 0 : i32
    return %c0_i32, %arg0 : i32, i32
  }
  func.func @transform_2(%arg0: i32) -> (i32, i32) {
    %c0_i32 = arith.constant 0 : i32
    %c0_i32_0 = arith.constant 0 : i32
    return %c0_i32, %arg0 : i32, i32
  }
}

module attributes {stable_mosaic.version = 11 : i64} {
  func.func @_conv_matmul_kernel(%arg0: i32, %arg1: memref<16x512xbf16, #tpu.memory_space<vmem>>, %arg2: memref<512x128xbf16, #tpu.memory_space<vmem>>, %arg3: memref<16x128xbf16, #tpu.memory_space<vmem>>) attributes {dimension_semantics = [#tpu.dimension_semantics<parallel>], iteration_bounds = array<i64: 1>, scalar_prefetch = 0 : i64, scratch_operands = 0 : i64, tpu.core_type = #tpu.core_type<tc>, window_params = [{pipeline_mode = #tpu.pipeline_mode<synchronous>, transform_indices = @transform_0, window_bounds = array<i64: 16, 512>}, {transform_indices = @transform_1, window_bounds = array<i64: 512, 128>}, {transform_indices = @transform_2, window_bounds = array<i64: 16, 128>}]} {
    %c0 = arith.constant 0 : index
    %c0_0 = arith.constant 0 : index
    %0 = vector.load %arg1[%c0, %c0_0] : memref<16x512xbf16, #tpu.memory_space<vmem>>, vector<16x512xbf16>
    %c0_1 = arith.constant 0 : index
    %c0_2 = arith.constant 0 : index
    %1 = vector.load %arg2[%c0_1, %c0_2] : memref<512x128xbf16, #tpu.memory_space<vmem>>, vector<512x128xbf16>
    %cst = arith.constant dense<0.000000e+00> : vector<16x128xf32>
    %2 = tpu.matmul %0, %1, %cst {dimension_numbers = #tpu.dot_dimension_numbers<[1], [0], [0], [1], [0, 0, 1, 1], [], []>} : vector<16x512xbf16>, vector<512x128xbf16>, vector<16x128xf32> -> vector<16x128xf32>
    %cst_3 = arith.constant 2.000000e-01 : f32
    %3 = vector.broadcast %cst_3 : f32 to vector<16x128xf32>
    %4 = arith.mulf %2, %3 : vector<16x128xf32>
    %5 = arith.maximumf %2, %4 : vector<16x128xf32>
    %6 = arith.truncf %5 : vector<16x128xf32> to vector<16x128xbf16>
    %c0_4 = arith.constant 0 : index
    %c0_5 = arith.constant 0 : index
    %7 = vector.load %arg3[%c0_4, %c0_5] : memref<16x128xbf16, #tpu.memory_space<vmem>>, vector<16x128xbf16>
    tpu.vector_store %arg3[%c0_4, %c0_5], %6 {strides = array<i32>} : memref<16x128xbf16, #tpu.memory_space<vmem>>, vector<16x128xbf16>,
    return
  }
  func.func @transform_0(%arg0: i32) -> (i32, i32) {
    %c0_i32 = arith.constant 0 : i32
    %c0_i32_0 = arith.constant 0 : i32
    %c0_i32_1 = arith.constant 0 : i32
    return %c0_i32, %c0_i32_0 : i32, i32
  }
  func.func @transform_1(%arg0: i32) -> (i32, i32) {
    %c0_i32 = arith.constant 0 : i32
    %c0_i32_0 = arith.constant 0 : i32
    return %c0_i32, %arg0 : i32, i32
  }
  func.func @transform_2(%arg0: i32) -> (i32, i32) {
    %c0_i32 = arith.constant 0 : i32
    %c0_i32_0 = arith.constant 0 : i32
    return %c0_i32, %arg0 : i32, i32
  }
}

module attributes {stable_mosaic.version = 11 : i64} {
  func.func @_conv_proj_kernel(%arg0: i32, %arg1: i32, %arg2: memref<32x1024xbf16, #tpu.memory_space<vmem>>, %arg3: memref<1x1024x8xbf16, #tpu.memory_space<vmem>>, %arg4: memref<1x1x32xf32, #tpu.memory_space<vmem>>, %arg5: memref<1x1x8xf32, #tpu.memory_space<vmem>>) attributes {dimension_semantics = [#tpu.dimension_semantics<parallel>, #tpu.dimension_semantics<parallel>], iteration_bounds = array<i64: 2, 1>, scalar_prefetch = 0 : i64, scratch_operands = 0 : i64, tpu.core_type = #tpu.core_type<tc>, window_params = [{pipeline_mode = #tpu.pipeline_mode<synchronous>, transform_indices = @transform_0, window_bounds = array<i64: 32, 1024>}, {transform_indices = @transform_1, window_bounds = array<i64: 1, 1024, 8>}, {transform_indices = @transform_2, window_bounds = array<i64: 1, 1, 32>}, {transform_indices = @transform_3, window_bounds = array<i64: 1, 1, 8>}]} {
    %c0 = arith.constant 0 : index
    %c0_0 = arith.constant 0 : index
    %0 = vector.load %arg2[%c0, %c0_0] : memref<32x1024xbf16, #tpu.memory_space<vmem>>, vector<32x1024xbf16>
    %c0_1 = arith.constant 0 : index
    %c0_2 = arith.constant 0 : index
    %c0_3 = arith.constant 0 : index
    %1 = vector.load %arg3[%c0_1, %c0_2, %c0_3] : memref<1x1024x8xbf16, #tpu.memory_space<vmem>>, vector<1x1024x8xbf16>
    %2 = vector.shape_cast %1 : vector<1x1024x8xbf16> to vector<1024x8xbf16>
    %cst = arith.constant dense<0.000000e+00> : vector<32x8xf32>
    %3 = tpu.matmul %0, %2, %cst {dimension_numbers = #tpu.dot_dimension_numbers<[1], [0], [0], [1], [0, 0, 1, 1], [], []>} : vector<32x1024xbf16>, vector<1024x8xbf16>, vector<32x8xf32> -> vector<32x8xf32>
    %cst_4 = arith.constant 2.000000e-01 : f32
    %4 = vector.broadcast %cst_4 : f32 to vector<32x8xf32>
    %5 = arith.mulf %3, %4 : vector<32x8xf32>
    %6 = arith.maximumf %3, %5 : vector<32x8xf32>
    %c0_5 = arith.constant 0 : index
    %c0_6 = arith.constant 0 : index
    %c0_7 = arith.constant 0 : index
    %7 = vector.load %arg4[%c0_5, %c0_6, %c0_7] : memref<1x1x32xf32, #tpu.memory_space<vmem>>, vector<1x1x32xf32>
    %8 = vector.shape_cast %7 : vector<1x1x32xf32> to vector<1x32xf32>
    %cst_8 = arith.constant dense<0.000000e+00> : vector<1x8xf32>
    %9 = tpu.matmul %8, %6, %cst_8 {dimension_numbers = #tpu.dot_dimension_numbers<[1], [0], [0], [1], [0, 0, 1, 1], [], []>} : vector<1x32xf32>, vector<32x8xf32>, vector<1x8xf32> -> vector<1x8xf32>
    %c0_9 = arith.constant 0 : index
    %c0_10 = arith.constant 0 : index
    %c0_11 = arith.constant 0 : index
    %10 = vector.load %arg5[%c0_9, %c0_10, %c0_11] : memref<1x1x8xf32, #tpu.memory_space<vmem>>, vector<1x1x8xf32>
    %11 = vector.shape_cast %10 : vector<1x1x8xf32> to vector<1x8xf32>
    %12 = vector.shape_cast %9 : vector<1x8xf32> to vector<1x1x8xf32>
    tpu.vector_store %arg5[%c0_9, %c0_10, %c0_11], %12 {strides = array<i32>} : memref<1x1x8xf32, #tpu.memory_space<vmem>>, vector<1x1x8xf32>,
    return
  }
  func.func @transform_0(%arg0: i32, %arg1: i32) -> (i32, i32) {
    %c0_i32 = arith.constant 0 : i32
    %c0_i32_0 = arith.constant 0 : i32
    %c0_i32_1 = arith.constant 0 : i32
    return %c0_i32, %c0_i32_0 : i32, i32
  }
  func.func @transform_1(%arg0: i32, %arg1: i32) -> (i32, i32, i32) {
    %c0_i32 = arith.constant 0 : i32
    %c0_i32_0 = arith.constant 0 : i32
    return %arg0, %c0_i32, %arg1 : i32, i32, i32
  }
  func.func @transform_2(%arg0: i32, %arg1: i32) -> (i32, i32, i32) {
    %c0_i32 = arith.constant 0 : i32
    %c0_i32_0 = arith.constant 0 : i32
    %c0_i32_1 = arith.constant 0 : i32
    return %arg0, %c0_i32, %c0_i32_0 : i32, i32, i32
  }
  func.func @transform_3(%arg0: i32, %arg1: i32) -> (i32, i32, i32) {
    %c0_i32 = arith.constant 0 : i32
    %c0_i32_0 = arith.constant 0 : i32
    return %arg0, %c0_i32, %arg1 : i32, i32, i32
  }
}

</mosaic_0001>

<llo_original>
// kernel: discriminator_forward.4
$region0: #{discriminator_forward.4}
  #allocation0 [shape = 'u32[]', space=smem, size = 0x4, offset = 0x4, fixed_abs, tag = 'smem constant byte address 0x4 - core index']
  #allocation1 [shape = 'u32[144,128]{1,0:T(1,128)}', space=vmem, size = 0x12000, scoped, tag = 'internal scratch']
  %s0 = inlined_call_operand.vmem [shape: f32[4,27], index: 0, kind: input, shape index: {}]
  %s1 = inlined_call_operand.vmem [shape: bf16[2,18,18,18], index: 1, kind: input, shape index: {}]
  %s2 = inlined_call_operand.vmem [shape: bf16[4,2,16,16,16], index: 2, kind: output, shape index: {}]
  %s3 = sld [smem:[#allocation0]]
  $region82: #{discriminator_forward.4} parent=0
    _
  %s5 = ssub.s32 1, %s3
  %s6 = scalar_select 0, %s5, %s3
  $region1: #{discriminator_forward.4} parent=0
    #allocation2 [shape = 'u8[2048]{0}', space=smem, size = 0x800, scoped, tag = 'input window, operand 0, single buffered']
    #allocation3 [shape = 's32[2]{0}', space=sflag, size = 0x8, scoped, tag = 'scoped memory for discriminator_forward.4']
    #allocation4 [shape = 'u8[32768]{0}', space=vmem, size = 0x8000, scoped, tag = 'output window, operand 0']
    %7 = vsyncpa [#allocation3], 0
    loop: start=0, step=1, limit=34
    $region2: #{discriminator_forward.4} parent=1 // loop_pre_header
      _
    $region3: #{discriminator_forward.4} parent=1 // loop_header
      %s9 = sphi 0, %s13
      %p10 = scmp.ge.s32.totalorder %s9, 34
      %s16 = sphi 0, %s28
      %s17 = sphi 0, %s24
      %s18 = sphi 0, %s16
      %s19 = sphi 0, %s17
      %s20 = sphi 0, %s18
      %s21 = sphi 0, %s19
      %s29 = sphi 0, %s29
      %s31 = sphi 0, %s29
      %s32 = sphi 0, %s31
      %s46 = sphi 0, %s32
      %s52 = sphi 0, %s54
      %s55 = sphi 0, %s52
      %s56 = sphi 0, %s55
      %s72 = sphi 0, %s56
      %s80 = sphi 0, %s82
      %s83 = sphi 0, %s80
      %s84 = sphi 0, %s83
      %s100 = sphi 0, %s84
    $region4: #{discriminator_forward.4} parent=1 // loop_header_branch
      %12 = sbr.rel (%p10) target = $region8
    $region5: #{discriminator_forward.4} parent=1 // loop_body
      %s14 = ssub.s32 %s9, 1
      %s15 = ssub.s32 %s9, 2
      %s22 = sadd.s32 1, %s17
      %p23 = scmp.ge.s32.totalorder %s22, 16
      %s24 = scalar_select %p23, 0, %s22
      %s25 = sadd.s32 1, %s16
      %s26 = scalar_select %p23, %s25, %s16
      %p27 = scmp.ge.s32.totalorder %s26, 2
      %s28 = scalar_select %p27, 0, %s26
      %s30 = sadd.s32 %s29, 1
      %p33 = scmp.eq.s32.totalorder %s9, 31
      %p34 = scmp.ne.s32.totalorder %s29, %s31
      %p35 = scmp.eq.s32.totalorder %s9, 0
      %p36 = por %p34, %p35
      %p37 = scmp.ne.s32.totalorder %s29, %s31
      %p38 = scmp.eq.s32.totalorder %s14, 31
      %p39 = por %p37, %p38
      %p40 = scmp.ne.s32.totalorder %s31, %s32
      %p41 = scmp.eq.s32.totalorder %s14, 0
      %p42 = por %p40, %p41
      %p43 = scmp.ne.s32.totalorder %s31, %s32
      %p44 = scmp.eq.s32.totalorder %s15, 31
      %p45 = por %p43, %p44
      %p47 = scmp.ne.s32.totalorder %s32, %s46
      %p48 = scmp.eq.s32.totalorder %s15, 0
      %p49 = por %p47, %p48
      %s50 = ssub.s32 %s16, %s28
      %p51 = scmp.eq.s32.totalorder %s50, 0
      %s53 = sadd.s32 %s52, 1
      %s54 = scalar_select %p51, %s52, %s53
      %p57 = pneg %p51
      %p58 = scmp.eq.s32.totalorder %s9, 31
      %p59 = por %p57, %p58
      %p60 = scmp.ne.s32.totalorder %s52, %s55
      %p61 = scmp.eq.s32.totalorder %s9, 0
      %p62 = por %p60, %p61
      %p63 = scmp.ne.s32.totalorder %s52, %s55
      %p64 = scmp.eq.s32.totalorder %s14, 31
      %p65 = por %p63, %p64
      %p66 = scmp.ne.s32.totalorder %s55, %s56
      %p67 = scmp.eq.s32.totalorder %s14, 0
      %p68 = por %p66, %p67
      %p69 = scmp.ne.s32.totalorder %s55, %s56
      %p70 = scmp.eq.s32.totalorder %s15, 31
      %p71 = por %p69, %p70
      %p73 = scmp.ne.s32.totalorder %s56, %s72
      %p74 = scmp.eq.s32.totalorder %s15, 0
      %p75 = por %p73, %p74
      %s76 = ssub.s32 %s16, %s28
      %s77 = ssub.s32 %s17, %s24
      %s78 = sor.u32 %s76, %s77
      %p79 = scmp.eq.s32.totalorder %s78, 0
      %s81 = sadd.s32 %s80, 1
      %s82 = scalar_select %p79, %s80, %s81
      %p85 = pneg %p79
      %p86 = scmp.eq.s32.totalorder %s9, 31
      %p87 = por %p85, %p86
      %p88 = scmp.ne.s32.totalorder %s80, %s83
      %p89 = scmp.eq.s32.totalorder %s9, 0
      %p90 = por %p88, %p89
      %p91 = scmp.ne.s32.totalorder %s80, %s83
      %p92 = scmp.eq.s32.totalorder %s14, 31
      %p93 = por %p91, %p92
      %p94 = scmp.ne.s32.totalorder %s83, %s84
      %p95 = scmp.eq.s32.totalorder %s14, 0
      %p96 = por %p94, %p95
      %p97 = scmp.ne.s32.totalorder %s83, %s84
      %p98 = scmp.eq.s32.totalorder %s15, 31
      %p99 = por %p97, %p98
      %p101 = scmp.ne.s32.totalorder %s84, %s100
      %p102 = scmp.eq.s32.totalorder %s15, 0
      %p103 = por %p101, %p102
      %p104 = scmp.le.s32.totalorder 1, %s9
      %p105 = scmp.lt.s32.totalorder %s9, 33
      %p106 = pnand %p104, %p105
      %p107 = pneg %p106
      // Predicated region
      $region9: #{discriminator_forward.4} parent=5 // pred_check
        _
      $region10: #{discriminator_forward.4} parent=5 // pred_check_branch
        %109 = sbr.rel (%p106) target = $region12
      $region11: #{discriminator_forward.4} parent=5 // pred_region
        %s110 = ssub.s32 %s9, 1
        // Predicated region
        $region13: #{discriminator_forward.4} parent=11 // pred_check
          %p111 = pneg %p42
        $region14: #{discriminator_forward.4} parent=11 // pred_check_branch
          %113 = sbr.rel (%p111) target = $region16
        $region15: #{discriminator_forward.4} parent=11 // pred_region
          %s115 = ssub.s32 64, 64
          %116 = vsyncadd [#allocation3], %s115
          %s118 = sshll.u32 %s0, 4
          %s119 = int_to_ptr.vmem [resolvable:$true] %s118
          %121 = dma.vmem_to_smem %s119, 64, [#allocation2], [#allocation3]
        $region16: #{discriminator_forward.4} parent=11 // pred_fallthru
          _
      $region12: #{discriminator_forward.4} parent=5 // pred_fallthru
        _
      %p122 = scmp.lt.s32.totalorder %s9, 32
      // Predicated region
      $region17: #{discriminator_forward.4} parent=5 // pred_check
        %p123 = pneg %p122
      $region18: #{discriminator_forward.4} parent=5 // pred_check_branch
        %125 = sbr.rel (%p123) target = $region20
      $region19: #{discriminator_forward.4} parent=5 // pred_region
        // Predicated region
        $region21: #{discriminator_forward.4} parent=19 // pred_check
          %p126 = pneg %p62
        $region22: #{discriminator_forward.4} parent=19 // pred_check_branch
          %128 = sbr.rel (%p126) target = $region24
        $region23: #{discriminator_forward.4} parent=19 // pred_region
          %p129 = scmp.lt.s32.totalorder %s16, 1
          %s130 = scalar_select %p129, %s16, 1
          %s131 = smul.addr %s130, 54
          %s132 = smul.addr %s131, 4
          %s133 = scalar_lea.vmem %s1, %s132
        $region24: #{discriminator_forward.4} parent=19 // pred_fallthru
          _
      $region20: #{discriminator_forward.4} parent=5 // pred_fallthru
        _
      %p134 = scmp.le.s32.totalorder 1, %s9
      %p135 = scmp.lt.s32.totalorder %s9, 33
      %p136 = pnand %p134, %p135
      %p137 = pneg %p136
      // Predicated region
      $region25: #{discriminator_forward.4} parent=5 // pred_check
        _
      $region26: #{discriminator_forward.4} parent=5 // pred_check_branch
        %139 = sbr.rel (%p136) target = $region28
      $region27: #{discriminator_forward.4} parent=5 // pred_region
        %s140 = ssub.s32 %s9, 1
        // Predicated region
        $region29: #{discriminator_forward.4} parent=27 // pred_check
          %p141 = pneg %p42
        $region30: #{discriminator_forward.4} parent=27 // pred_check_branch
          %143 = sbr.rel (%p141) target = $region32
        $region31: #{discriminator_forward.4} parent=27 // pred_region
          %144 = dma.done [#allocation3], 64
        $region32: #{discriminator_forward.4} parent=27 // pred_fallthru
          _
        %145 = sfence
        %p146 = pneg %p42
        %p147 = pneg %p39
        %p148 = scmp.lt.s32.totalorder %s18, 1
        %s149 = scalar_select %p148, %s18, 1
        %s150 = smul.addr %s149, 54
        %s151 = smul.addr %s150, 4
        %s152 = scalar_lea.vmem %s1, %s151
        %p153 = pneg %p68
        %p154 = pneg %p65
        %p155 = pneg %p96
        %p156 = pneg %p93
        %s157 = sand.u32 %s83, 1
        %s158 = sand.u32 %s83, 1
        %s159 = smul.addr %s158, 32
        %s160 = scalar_lea.vmem [#allocation4], %s159
        %p161 = scmp.lt.s32.totalorder %s18, 1
        %s162 = scalar_select %p161, %s18, 1
        %s163 = smul.addr %s162, 54
        %s164 = smul.addr %s163, 4
        %s165 = scalar_lea.vmem %s1, %s164
        %s166 = smul.u32 %s19, 3
        %s167 = smul.addr %s166, 4
        %s168 = scalar_lea.vmem %s165, %s167
        %v169 = vld [vmem:[%s168] sm:$0xf]
        %v170 = vld [vmem:[%s168 + $0x4] sm:$0xf]
        %v171 = vld [vmem:[%s168 + $0x8] sm:$0x1]
        %v172 = vld [vmem:[%s168 + $0xc] sm:$0xf]
        %v173 = vld [vmem:[%s168 + $0x10] sm:$0xf]
        %v174 = vld [vmem:[%s168 + $0x14] sm:$0x1]
        %v175 = vld [vmem:[%s168 + $0x18] sm:$0xf]
        %v176 = vld [vmem:[%s168 + $0x1c] sm:$0xf]
        %v177 = vld [vmem:[%s168 + $0x20] sm:$0x1]
        %v178 = vunpack.c.l.bf16 %v169
        %v179 = vunpack.c.l.bf16 %v170
        %v180 = vunpack.c.l.bf16 %v171
        %v181 = vunpack.c.l.bf16 %v172
        %v182 = vunpack.c.l.bf16 %v173
        %v183 = vunpack.c.l.bf16 %v174
        %v184 = vunpack.c.l.bf16 %v175
        %v185 = vunpack.c.l.bf16 %v176
        %v186 = vunpack.c.l.bf16 %v177
        %s187 = sld [smem:[#allocation2]]
        %v188 = vstv %s187
        %v189 = vmul.f32 %v188, %v178
        %v190 = vmul.f32 %v188, %v179
        %v191 = vadd.f32 %v189, 0.0
        %v192 = vadd.f32 %v190, 0.0
        %s193 = sld [smem:[#allocation2 + $0x80]]
        %v194 = vstv %s193
        %v195 = vmul.f32 %v194, %v178
        %v196 = vmul.f32 %v194, %v179
        %v197 = vadd.f32 %v195, 0.0
        %v198 = vadd.f32 %v196, 0.0
        %s199 = sld [smem:[#allocation2 + $0x100]]
        %v200 = vstv %s199
        %v201 = vmul.f32 %v200, %v178
        %v202 = vmul.f32 %v200, %v179
        %v203 = vadd.f32 %v201, 0.0
        %v204 = vadd.f32 %v202, 0.0
        %s205 = sld [smem:[#allocation2 + $0x180]]
        %v206 = vstv %s205
        %v207 = vmul.f32 %v206, %v178
        %v208 = vmul.f32 %v206, %v179
        %v209 = vadd.f32 %v207, 0.0
        %v210 = vadd.f32 %v208, 0.0
        %s211 = sld [smem:[#allocation2 + $0x1]]
        %v212 = vstv %s211
        %v213 = vmul.f32 %v212, %v178
        %v214 = vmul.f32 %v212, %v179
        %217 = vrot.lane.b32.xlu0 %v213, 127
        %v218 = vpop.permute.xlu0 %217
        %219 = vrot.lane.b32.xlu0 %v214, 127
        %v220 = vpop.permute.xlu0 %219
        %v223 = vadd.f32 %v191, %v218
        %v224 = vadd.f32 %v192, %v220
        %s225 = sld [smem:[#allocation2 + $0x81]]
        %v226 = vstv %s225
        %v227 = vmul.f32 %v226, %v178
        %v228 = vmul.f32 %v226, %v179
        %231 = vrot.lane.b32.xlu0 %v227, 127
        %v232 = vpop.permute.xlu0 %231
        %233 = vrot.lane.b32.xlu0 %v228, 127
        %v234 = vpop.permute.xlu0 %233
        %v237 = vadd.f32 %v197, %v232
        %v238 = vadd.f32 %v198, %v234
        %s239 = sld [smem:[#allocation2 + $0x101]]
        %v240 = vstv %s239
        %v241 = vmul.f32 %v240, %v178
        %v242 = vmul.f32 %v240, %v179
        %245 = vrot.lane.b32.xlu0 %v241, 127
        %v246 = vpop.permute.xlu0 %245
        %247 = vrot.lane.b32.xlu0 %v242, 127
        %v248 = vpop.permute.xlu0 %247
        %v251 = vadd.f32 %v203, %v246
        %v252 = vadd.f32 %v204, %v248
        %s253 = sld [smem:[#allocation2 + $0x181]]
        %v254 = vstv %s253
        %v255 = vmul.f32 %v254, %v178
        %v256 = vmul.f32 %v254, %v179
        %259 = vrot.lane.b32.xlu0 %v255, 127
        %v260 = vpop.permute.xlu0 %259
        %261 = vrot.lane.b32.xlu0 %v256, 127
        %v262 = vpop.permute.xlu0 %261
        %v265 = vadd.f32 %v209, %v260
        %v266 = vadd.f32 %v210, %v262
        %s267 = sld [smem:[#allocation2 + $0x2]]
        %v268 = vstv %s267
        %v269 = vmul.f32 %v268, %v178
        %v270 = vmul.f32 %v268, %v179
        %273 = vrot.lane.b32.xlu0 %v269, 126
        %v274 = vpop.permute.xlu0 %273
        %275 = vrot.lane.b32.xlu0 %v270, 126
        %v276 = vpop.permute.xlu0 %275
        %v279 = vadd.f32 %v223, %v274
        %v280 = vadd.f32 %v224, %v276
        %s281 = sld [smem:[#allocation2 + $0x82]]
        %v282 = vstv %s281
        %v283 = vmul.f32 %v282, %v178
        %v284 = vmul.f32 %v282, %v179
        %287 = vrot.lane.b32.xlu0 %v283, 126
        %v288 = vpop.permute.xlu0 %287
        %289 = vrot.lane.b32.xlu0 %v284, 126
        %v290 = vpop.permute.xlu0 %289
        %v293 = vadd.f32 %v237, %v288
        %v294 = vadd.f32 %v238, %v290
        %s295 = sld [smem:[#allocation2 + $0x102]]
        %v296 = vstv %s295
        %v297 = vmul.f32 %v296, %v178
        %v298 = vmul.f32 %v296, %v179
        %301 = vrot.lane.b32.xlu0 %v297, 126
        %v302 = vpop.permute.xlu0 %301
        %303 = vrot.lane.b32.xlu0 %v298, 126
        %v304 = vpop.permute.xlu0 %303
        %v307 = vadd.f32 %v251, %v302
        %v308 = vadd.f32 %v252, %v304
        %s309 = sld [smem:[#allocation2 + $0x182]]
        %v310 = vstv %s309
        %v311 = vmul.f32 %v310, %v178
        %v312 = vmul.f32 %v310, %v179
        %315 = vrot.lane.b32.xlu0 %v311, 126
        %v316 = vpop.permute.xlu0 %315
        %317 = vrot.lane.b32.xlu0 %v312, 126
        %v318 = vpop.permute.xlu0 %317
        %v321 = vadd.f32 %v265, %v316
        %v322 = vadd.f32 %v266, %v318
        %s323 = sld [smem:[#allocation2 + $0x3]]
        %v324 = vstv %s323
        %v325 = vmul.f32 %v324, %v178
        %v326 = vmul.f32 %v324, %v179
        %v327 = vmul.f32 %v324, %v180
        %vm331 = vcmask 1046528
        %v332 = vrot.slane %v325, 1
        %v333 = vrot.slane %v326, 1
        %v334 = vsel %vm331, %v332, %v333
        %v335 = vrot.slane %v327, 1
        %v336 = vsel %vm331, %v333, %v335
        %v339 = vadd.f32 %v279, %v334
        %v340 = vadd.f32 %v280, %v336
        %s341 = sld [smem:[#allocation2 + $0x83]]
        %v342 = vstv %s341
        %v343 = vmul.f32 %v342, %v178
        %v344 = vmul.f32 %v342, %v179
        %v345 = vmul.f32 %v342, %v180
        %v349 = vrot.slane %v343, 1
        %v350 = vrot.slane %v344, 1
        %v351 = vsel %vm331, %v349, %v350
        %v352 = vrot.slane %v345, 1
        %v353 = vsel %vm331, %v350, %v352
        %v356 = vadd.f32 %v293, %v351
        %v357 = vadd.f32 %v294, %v353
        %s358 = sld [smem:[#allocation2 + $0x103]]
        %v359 = vstv %s358
        %v360 = vmul.f32 %v359, %v178
        %v361 = vmul.f32 %v359, %v179
        %v362 = vmul.f32 %v359, %v180
        %v366 = vrot.slane %v360, 1
        %v367 = vrot.slane %v361, 1
        %v368 = vsel %vm331, %v366, %v367
        %v369 = vrot.slane %v362, 1
        %v370 = vsel %vm331, %v367, %v369
        %v373 = vadd.f32 %v307, %v368
        %v374 = vadd.f32 %v308, %v370
        %s375 = sld [smem:[#allocation2 + $0x183]]
        %v376 = vstv %s375
        %v377 = vmul.f32 %v376, %v178
        %v378 = vmul.f32 %v376, %v179
        %v379 = vmul.f32 %v376, %v180
        %v383 = vrot.slane %v377, 1
        %v384 = vrot.slane %v378, 1
        %v385 = vsel %vm331, %v383, %v384
        %v386 = vrot.slane %v379, 1
        %v387 = vsel %vm331, %v384, %v386
        %v390 = vadd.f32 %v321, %v385
        %v391 = vadd.f32 %v322, %v387
        %s392 = sld [smem:[#allocation2 + $0x4]]
        %v393 = vstv %s392
        %v394 = vmul.f32 %v393, %v178
        %v395 = vmul.f32 %v393, %v179
        %v396 = vmul.f32 %v393, %v180
        %v400 = vrot.slane %v394, 1
        %v401 = vrot.slane %v395, 1
        %v402 = vsel %vm331, %v400, %v401
        %v403 = vrot.slane %v396, 1
        %v404 = vsel %vm331, %v401, %v403
        %405 = vrot.lane.b32.xlu0 %v402, 127
        %v406 = vpop.permute.xlu0 %405
        %407 = vrot.lane.b32.xlu0 %v404, 127
        %v408 = vpop.permute.xlu0 %407
        %v411 = vadd.f32 %v339, %v406
        %v412 = vadd.f32 %v340, %v408
        %s413 = sld [smem:[#allocation2 + $0x84]]
        %v414 = vstv %s413
        %v415 = vmul.f32 %v414, %v178
        %v416 = vmul.f32 %v414, %v179
        %v417 = vmul.f32 %v414, %v180
        %v421 = vrot.slane %v415, 1
        %v422 = vrot.slane %v416, 1
        %v423 = vsel %vm331, %v421, %v422
        %v424 = vrot.slane %v417, 1
        %v425 = vsel %vm331, %v422, %v424
        %426 = vrot.lane.b32.xlu0 %v423, 127
        %v427 = vpop.permute.xlu0 %426
        %428 = vrot.lane.b32.xlu0 %v425, 127
        %v429 = vpop.permute.xlu0 %428
        %v432 = vadd.f32 %v356, %v427
        %v433 = vadd.f32 %v357, %v429
        %s434 = sld [smem:[#allocation2 + $0x104]]
        %v435 = vstv %s434
        %v436 = vmul.f32 %v435, %v178
        %v437 = vmul.f32 %v435, %v179
        %v438 = vmul.f32 %v435, %v180
        %v442 = vrot.slane %v436, 1
        %v443 = vrot.slane %v437, 1
        %v444 = vsel %vm331, %v442, %v443
        %v445 = vrot.slane %v438, 1
        %v446 = vsel %vm331, %v443, %v445
        %447 = vrot.lane.b32.xlu0 %v444, 127
        %v448 = vpop.permute.xlu0 %447
        %449 = vrot.lane.b32.xlu0 %v446, 127
        %v450 = vpop.permute.xlu0 %449
        %v453 = vadd.f32 %v373, %v448
        %v454 = vadd.f32 %v374, %v450
        %s455 = sld [smem:[#allocation2 + $0x184]]
        %v456 = vstv %s455
        %v457 = vmul.f32 %v456, %v178
        %v458 = vmul.f32 %v456, %v179
        %v459 = vmul.f32 %v456, %v180
        %v463 = vrot.slane %v457, 1
        %v464 = vrot.slane %v458, 1
        %v465 = vsel %vm331, %v463, %v464
        %v466 = vrot.slane %v459, 1
        %v467 = vsel %vm331, %v464, %v466
        %468 = vrot.lane.b32.xlu0 %v465, 127
        %v469 = vpop.permute.xlu0 %468
        %470 = vrot.lane.b32.xlu0 %v467, 127
        %v471 = vpop.permute.xlu0 %470
        %v474 = vadd.f32 %v390, %v469
        %v475 = vadd.f32 %v391, %v471
        %s476 = sld [smem:[#allocation2 + $0x5]]
        %v477 = vstv %s476
        %v478 = vmul.f32 %v477, %v178
        %v479 = vmul.f32 %v477, %v179
        %v480 = vmul.f32 %v477, %v180
        %v484 = vrot.slane %v478, 1
        %v485 = vrot.slane %v479, 1
        %v486 = vsel %vm331, %v484, %v485
        %v487 = vrot.slane %v480, 1
        %v488 = vsel %vm331, %v485, %v487
        %489 = vrot.lane.b32.xlu0 %v486, 126
        %v490 = vpop.permute.xlu0 %489
        %491 = vrot.lane.b32.xlu0 %v488, 126
        %v492 = vpop.permute.xlu0 %491
        %v495 = vadd.f32 %v411, %v490
        %v496 = vadd.f32 %v412, %v492
        %s497 = sld [smem:[#allocation2 + $0x85]]
        %v498 = vstv %s497
        %v499 = vmul.f32 %v498, %v178
        %v500 = vmul.f32 %v498, %v179
        %v501 = vmul.f32 %v498, %v180
        %v505 = vrot.slane %v499, 1
        %v506 = vrot.slane %v500, 1
        %v507 = vsel %vm331, %v505, %v506
        %v508 = vrot.slane %v501, 1
        %v509 = vsel %vm331, %v506, %v508
        %510 = vrot.lane.b32.xlu0 %v507, 126
        %v511 = vpop.permute.xlu0 %510
        %512 = vrot.lane.b32.xlu0 %v509, 126
        %v513 = vpop.permute.xlu0 %512
        %v516 = vadd.f32 %v432, %v511
        %v517 = vadd.f32 %v433, %v513
        %s518 = sld [smem:[#allocation2 + $0x105]]
        %v519 = vstv %s518
        %v520 = vmul.f32 %v519, %v178
        %v521 = vmul.f32 %v519, %v179
        %v522 = vmul.f32 %v519, %v180
        %v526 = vrot.slane %v520, 1
        %v527 = vrot.slane %v521, 1
        %v528 = vsel %vm331, %v526, %v527
        %v529 = vrot.slane %v522, 1
        %v530 = vsel %vm331, %v527, %v529
        %531 = vrot.lane.b32.xlu0 %v528, 126
        %v532 = vpop.permute.xlu0 %531
        %533 = vrot.lane.b32.xlu0 %v530, 126
        %v534 = vpop.permute.xlu0 %533
        %v537 = vadd.f32 %v453, %v532
        %v538 = vadd.f32 %v454, %v534
        %s539 = sld [smem:[#allocation2 + $0x185]]
        %v540 = vstv %s539
        %v541 = vmul.f32 %v540, %v178
        %v542 = vmul.f32 %v540, %v179
        %v543 = vmul.f32 %v540, %v180
        %v547 = vrot.slane %v541, 1
        %v548 = vrot.slane %v542, 1
        %v549 = vsel %vm331, %v547, %v548
        %v550 = vrot.slane %v543, 1
        %v551 = vsel %vm331, %v548, %v550
        %552 = vrot.lane.b32.xlu0 %v549, 126
        %v553 = vpop.permute.xlu0 %552
        %554 = vrot.lane.b32.xlu0 %v551, 126
        %v555 = vpop.permute.xlu0 %554
        %v558 = vadd.f32 %v474, %v553
        %v559 = vadd.f32 %v475, %v555
        %s560 = sld [smem:[#allocation2 + $0x6]]
        %v561 = vstv %s560
        %v562 = vmul.f32 %v561, %v178
        %v563 = vmul.f32 %v561, %v179
        %v564 = vmul.f32 %v561, %v180
        %vm568 = vcmask 1045504
        %v569 = vrot.slane %v562, 2
        %v570 = vrot.slane %v563, 2
        %v571 = vsel %vm568, %v569, %v570
        %v572 = vrot.slane %v564, 2
        %v573 = vsel %vm568, %v570, %v572
        %v576 = vadd.f32 %v495, %v571
        %v577 = vadd.f32 %v496, %v573
        %s578 = sld [smem:[#allocation2 + $0x86]]
        %v579 = vstv %s578
        %v580 = vmul.f32 %v579, %v178
        %v581 = vmul.f32 %v579, %v179
        %v582 = vmul.f32 %v579, %v180
        %v586 = vrot.slane %v580, 2
        %v587 = vrot.slane %v581, 2
        %v588 = vsel %vm568, %v586, %v587
        %v589 = vrot.slane %v582, 2
        %v590 = vsel %vm568, %v587, %v589
        %v593 = vadd.f32 %v516, %v588
        %v594 = vadd.f32 %v517, %v590
        %s595 = sld [smem:[#allocation2 + $0x106]]
        %v596 = vstv %s595
        %v597 = vmul.f32 %v596, %v178
        %v598 = vmul.f32 %v596, %v179
        %v599 = vmul.f32 %v596, %v180
        %v603 = vrot.slane %v597, 2
        %v604 = vrot.slane %v598, 2
        %v605 = vsel %vm568, %v603, %v604
        %v606 = vrot.slane %v599, 2
        %v607 = vsel %vm568, %v604, %v606
        %v610 = vadd.f32 %v537, %v605
        %v611 = vadd.f32 %v538, %v607
        %s612 = sld [smem:[#allocation2 + $0x186]]
        %v613 = vstv %s612
        %v614 = vmul.f32 %v613, %v178
        %v615 = vmul.f32 %v613, %v179
        %v616 = vmul.f32 %v613, %v180
        %v620 = vrot.slane %v614, 2
        %v621 = vrot.slane %v615, 2
        %v622 = vsel %vm568, %v620, %v621
        %v623 = vrot.slane %v616, 2
        %v624 = vsel %vm568, %v621, %v623
        %v627 = vadd.f32 %v558, %v622
        %v628 = vadd.f32 %v559, %v624
        %s629 = sld [smem:[#allocation2 + $0x7]]
        %v630 = vstv %s629
        %v631 = vmul.f32 %v630, %v178
        %v632 = vmul.f32 %v630, %v179
        %v633 = vmul.f32 %v630, %v180
        %v637 = vrot.slane %v631, 2
        %v638 = vrot.slane %v632, 2
        %v639 = vsel %vm568, %v637, %v638
        %v640 = vrot.slane %v633, 2
        %v641 = vsel %vm568, %v638, %v640
        %642 = vrot.lane.b32.xlu0 %v639, 127
        %v643 = vpop.permute.xlu0 %642
        %644 = vrot.lane.b32.xlu0 %v641, 127
        %v645 = vpop.permute.xlu0 %644
        %v648 = vadd.f32 %v576, %v643
        %v649 = vadd.f32 %v577, %v645
        %s650 = sld [smem:[#allocation2 + $0x87]]
        %v651 = vstv %s650
        %v652 = vmul.f32 %v651, %v178
        %v653 = vmul.f32 %v651, %v179
        %v654 = vmul.f32 %v651, %v180
        %v658 = vrot.slane %v652, 2
        %v659 = vrot.slane %v653, 2
        %v660 = vsel %vm568, %v658, %v659
        %v661 = vrot.slane %v654, 2
        %v662 = vsel %vm568, %v659, %v661
        %663 = vrot.lane.b32.xlu0 %v660, 127
        %v664 = vpop.permute.xlu0 %663
        %665 = vrot.lane.b32.xlu0 %v662, 127
        %v666 = vpop.permute.xlu0 %665
        %v669 = vadd.f32 %v593, %v664
        %v670 = vadd.f32 %v594, %v666
        %s671 = sld [smem:[#allocation2 + $0x107]]
        %v672 = vstv %s671
        %v673 = vmul.f32 %v672, %v178
        %v674 = vmul.f32 %v672, %v179
        %v675 = vmul.f32 %v672, %v180
        %v679 = vrot.slane %v673, 2
        %v680 = vrot.slane %v674, 2
        %v681 = vsel %vm568, %v679, %v680
        %v682 = vrot.slane %v675, 2
        %v683 = vsel %vm568, %v680, %v682
        %684 = vrot.lane.b32.xlu0 %v681, 127
        %v685 = vpop.permute.xlu0 %684
        %686 = vrot.lane.b32.xlu0 %v683, 127
        %v687 = vpop.permute.xlu0 %686
        %v690 = vadd.f32 %v610, %v685
        %v691 = vadd.f32 %v611, %v687
        %s692 = sld [smem:[#allocation2 + $0x187]]
        %v693 = vstv %s692
        %v694 = vmul.f32 %v693, %v178
        %v695 = vmul.f32 %v693, %v179
        %v696 = vmul.f32 %v693, %v180
        %v700 = vrot.slane %v694, 2
        %v701 = vrot.slane %v695, 2
        %v702 = vsel %vm568, %v700, %v701
        %v703 = vrot.slane %v696, 2
        %v704 = vsel %vm568, %v701, %v703
        %705 = vrot.lane.b32.xlu0 %v702, 127
        %v706 = vpop.permute.xlu0 %705
        %707 = vrot.lane.b32.xlu0 %v704, 127
        %v708 = vpop.permute.xlu0 %707
        %v711 = vadd.f32 %v627, %v706
        %v712 = vadd.f32 %v628, %v708
        %s713 = sld [smem:[#allocation2 + $0x8]]
        %v714 = vstv %s713
        %v715 = vmul.f32 %v714, %v178
        %v716 = vmul.f32 %v714, %v179
        %v717 = vmul.f32 %v714, %v180
        %v721 = vrot.slane %v715, 2
        %v722 = vrot.slane %v716, 2
        %v723 = vsel %vm568, %v721, %v722
        %v724 = vrot.slane %v717, 2
        %v725 = vsel %vm568, %v722, %v724
        %726 = vrot.lane.b32.xlu0 %v723, 126
        %v727 = vpop.permute.xlu0 %726
        %728 = vrot.lane.b32.xlu0 %v725, 126
        %v729 = vpop.permute.xlu0 %728
        %v732 = vadd.f32 %v648, %v727
        %v733 = vadd.f32 %v649, %v729
        %s734 = sld [smem:[#allocation2 + $0x88]]
        %v735 = vstv %s734
        %v736 = vmul.f32 %v735, %v178
        %v737 = vmul.f32 %v735, %v179
        %v738 = vmul.f32 %v735, %v180
        %v742 = vrot.slane %v736, 2
        %v743 = vrot.slane %v737, 2
        %v744 = vsel %vm568, %v742, %v743
        %v745 = vrot.slane %v738, 2
        %v746 = vsel %vm568, %v743, %v745
        %747 = vrot.lane.b32.xlu0 %v744, 126
        %v748 = vpop.permute.xlu0 %747
        %749 = vrot.lane.b32.xlu0 %v746, 126
        %v750 = vpop.permute.xlu0 %749
        %v753 = vadd.f32 %v669, %v748
        %v754 = vadd.f32 %v670, %v750
        %s755 = sld [smem:[#allocation2 + $0x108]]
        %v756 = vstv %s755
        %v757 = vmul.f32 %v756, %v178
        %v758 = vmul.f32 %v756, %v179
        %v759 = vmul.f32 %v756, %v180
        %v763 = vrot.slane %v757, 2
        %v764 = vrot.slane %v758, 2
        %v765 = vsel %vm568, %v763, %v764
        %v766 = vrot.slane %v759, 2
        %v767 = vsel %vm568, %v764, %v766
        %768 = vrot.lane.b32.xlu0 %v765, 126
        %v769 = vpop.permute.xlu0 %768
        %770 = vrot.lane.b32.xlu0 %v767, 126
        %v771 = vpop.permute.xlu0 %770
        %v774 = vadd.f32 %v690, %v769
        %v775 = vadd.f32 %v691, %v771
        %s776 = sld [smem:[#allocation2 + $0x188]]
        %v777 = vstv %s776
        %v778 = vmul.f32 %v777, %v178
        %v779 = vmul.f32 %v777, %v179
        %v780 = vmul.f32 %v777, %v180
        %v784 = vrot.slane %v778, 2
        %v785 = vrot.slane %v779, 2
        %v786 = vsel %vm568, %v784, %v785
        %v787 = vrot.slane %v780, 2
        %v788 = vsel %vm568, %v785, %v787
        %789 = vrot.lane.b32.xlu0 %v786, 126
        %v790 = vpop.permute.xlu0 %789
        %791 = vrot.lane.b32.xlu0 %v788, 126
        %v792 = vpop.permute.xlu0 %791
        %v795 = vadd.f32 %v711, %v790
        %v796 = vadd.f32 %v712, %v792
        %s797 = sld [smem:[#allocation2 + $0x9]]
        %v798 = vstv %s797
        %v799 = vmul.f32 %v798, %v181
        %v800 = vmul.f32 %v798, %v182
        %v801 = vadd.f32 %v732, %v799
        %v802 = vadd.f32 %v733, %v800
        %s803 = sld [smem:[#allocation2 + $0x89]]
        %v804 = vstv %s803
        %v805 = vmul.f32 %v804, %v181
        %v806 = vmul.f32 %v804, %v182
        %v807 = vadd.f32 %v753, %v805
        %v808 = vadd.f32 %v754, %v806
        %s809 = sld [smem:[#allocation2 + $0x109]]
        %v810 = vstv %s809
        %v811 = vmul.f32 %v810, %v181
        %v812 = vmul.f32 %v810, %v182
        %v813 = vadd.f32 %v774, %v811
        %v814 = vadd.f32 %v775, %v812
        %s815 = sld [smem:[#allocation2 + $0x189]]
        %v816 = vstv %s815
        %v817 = vmul.f32 %v816, %v181
        %v818 = vmul.f32 %v816, %v182
        %v819 = vadd.f32 %v795, %v817
        %v820 = vadd.f32 %v796, %v818
        %s821 = sld [smem:[#allocation2 + $0xa]]
        %v822 = vstv %s821
        %v823 = vmul.f32 %v822, %v181
        %v824 = vmul.f32 %v822, %v182
        %827 = vrot.lane.b32.xlu0 %v823, 127
        %v828 = vpop.permute.xlu0 %827
        %829 = vrot.lane.b32.xlu0 %v824, 127
        %v830 = vpop.permute.xlu0 %829
        %v833 = vadd.f32 %v801, %v828
        %v834 = vadd.f32 %v802, %v830
        %s835 = sld [smem:[#allocation2 + $0x8a]]
        %v836 = vstv %s835
        %v837 = vmul.f32 %v836, %v181
        %v838 = vmul.f32 %v836, %v182
        %841 = vrot.lane.b32.xlu0 %v837, 127
        %v842 = vpop.permute.xlu0 %841
        %843 = vrot.lane.b32.xlu0 %v838, 127
        %v844 = vpop.permute.xlu0 %843
        %v847 = vadd.f32 %v807, %v842
        %v848 = vadd.f32 %v808, %v844
        %s849 = sld [smem:[#allocation2 + $0x10a]]
        %v850 = vstv %s849
        %v851 = vmul.f32 %v850, %v181
        %v852 = vmul.f32 %v850, %v182
        %855 = vrot.lane.b32.xlu0 %v851, 127
        %v856 = vpop.permute.xlu0 %855
        %857 = vrot.lane.b32.xlu0 %v852, 127
        %v858 = vpop.permute.xlu0 %857
        %v861 = vadd.f32 %v813, %v856
        %v862 = vadd.f32 %v814, %v858
        %s863 = sld [smem:[#allocation2 + $0x18a]]
        %v864 = vstv %s863
        %v865 = vmul.f32 %v864, %v181
        %v866 = vmul.f32 %v864, %v182
        %869 = vrot.lane.b32.xlu0 %v865, 127
        %v870 = vpop.permute.xlu0 %869
        %871 = vrot.lane.b32.xlu0 %v866, 127
        %v872 = vpop.permute.xlu0 %871
        %v875 = vadd.f32 %v819, %v870
        %v876 = vadd.f32 %v820, %v872
        %s877 = sld [smem:[#allocation2 + $0xb]]
        %v878 = vstv %s877
        %v879 = vmul.f32 %v878, %v181
        %v880 = vmul.f32 %v878, %v182
        %883 = vrot.lane.b32.xlu0 %v879, 126
        %v884 = vpop.permute.xlu0 %883
        %885 = vrot.lane.b32.xlu0 %v880, 126
        %v886 = vpop.permute.xlu0 %885
        %v889 = vadd.f32 %v833, %v884
        %v890 = vadd.f32 %v834, %v886
        %s891 = sld [smem:[#allocation2 + $0x8b]]
        %v892 = vstv %s891
        %v893 = vmul.f32 %v892, %v181
        %v894 = vmul.f32 %v892, %v182
        %897 = vrot.lane.b32.xlu0 %v893, 126
        %v898 = vpop.permute.xlu0 %897
        %899 = vrot.lane.b32.xlu0 %v894, 126
        %v900 = vpop.permute.xlu0 %899
        %v903 = vadd.f32 %v847, %v898
        %v904 = vadd.f32 %v848, %v900
        %s905 = sld [smem:[#allocation2 + $0x10b]]
        %v906 = vstv %s905
        %v907 = vmul.f32 %v906, %v181
        %v908 = vmul.f32 %v906, %v182
        %911 = vrot.lane.b32.xlu0 %v907, 126
        %v912 = vpop.permute.xlu0 %911
        %913 = vrot.lane.b32.xlu0 %v908, 126
        %v914 = vpop.permute.xlu0 %913
        %v917 = vadd.f32 %v861, %v912
        %v918 = vadd.f32 %v862, %v914
        %s919 = sld [smem:[#allocation2 + $0x18b]]
        %v920 = vstv %s919
        %v921 = vmul.f32 %v920, %v181
        %v922 = vmul.f32 %v920, %v182
        %925 = vrot.lane.b32.xlu0 %v921, 126
        %v926 = vpop.permute.xlu0 %925
        %927 = vrot.lane.b32.xlu0 %v922, 126
        %v928 = vpop.permute.xlu0 %927
        %v931 = vadd.f32 %v875, %v926
        %v932 = vadd.f32 %v876, %v928
        %s933 = sld [smem:[#allocation2 + $0xc]]
        %v934 = vstv %s933
        %v935 = vmul.f32 %v934, %v181
        %v936 = vmul.f32 %v934, %v182
        %v937 = vmul.f32 %v934, %v183
        %v941 = vrot.slane %v935, 1
        %v942 = vrot.slane %v936, 1
        %v943 = vsel %vm331, %v941, %v942
        %v944 = vrot.slane %v937, 1
        %v945 = vsel %vm331, %v942, %v944
        %v948 = vadd.f32 %v889, %v943
        %v949 = vadd.f32 %v890, %v945
        %s950 = sld [smem:[#allocation2 + $0x8c]]
        %v951 = vstv %s950
        %v952 = vmul.f32 %v951, %v181
        %v953 = vmul.f32 %v951, %v182
        %v954 = vmul.f32 %v951, %v183
        %v958 = vrot.slane %v952, 1
        %v959 = vrot.slane %v953, 1
        %v960 = vsel %vm331, %v958, %v959
        %v961 = vrot.slane %v954, 1
        %v962 = vsel %vm331, %v959, %v961
        %v965 = vadd.f32 %v903, %v960
        %v966 = vadd.f32 %v904, %v962
        %s967 = sld [smem:[#allocation2 + $0x10c]]
        %v968 = vstv %s967
        %v969 = vmul.f32 %v968, %v181
        %v970 = vmul.f32 %v968, %v182
        %v971 = vmul.f32 %v968, %v183
        %v975 = vrot.slane %v969, 1
        %v976 = vrot.slane %v970, 1
        %v977 = vsel %vm331, %v975, %v976
        %v978 = vrot.slane %v971, 1
        %v979 = vsel %vm331, %v976, %v978
        %v982 = vadd.f32 %v917, %v977
        %v983 = vadd.f32 %v918, %v979
        %s984 = sld [smem:[#allocation2 + $0x18c]]
        %v985 = vstv %s984
        %v986 = vmul.f32 %v985, %v181
        %v987 = vmul.f32 %v985, %v182
        %v988 = vmul.f32 %v985, %v183
        %v992 = vrot.slane %v986, 1
        %v993 = vrot.slane %v987, 1
        %v994 = vsel %vm331, %v992, %v993
        %v995 = vrot.slane %v988, 1
        %v996 = vsel %vm331, %v993, %v995
        %v999 = vadd.f32 %v931, %v994
        %v1000 = vadd.f32 %v932, %v996
        %s1001 = sld [smem:[#allocation2 + $0xd]]
        %v1002 = vstv %s1001
        %v1003 = vmul.f32 %v1002, %v181
        %v1004 = vmul.f32 %v1002, %v182
        %v1005 = vmul.f32 %v1002, %v183
        %v1009 = vrot.slane %v1003, 1
        %v1010 = vrot.slane %v1004, 1
        %v1011 = vsel %vm331, %v1009, %v1010
        %v1012 = vrot.slane %v1005, 1
        %v1013 = vsel %vm331, %v1010, %v1012
        %1014 = vrot.lane.b32.xlu0 %v1011, 127
        %v1015 = vpop.permute.xlu0 %1014
        %1016 = vrot.lane.b32.xlu0 %v1013, 127
        %v1017 = vpop.permute.xlu0 %1016
        %v1020 = vadd.f32 %v948, %v1015
        %v1021 = vadd.f32 %v949, %v1017
        %s1022 = sld [smem:[#allocation2 + $0x8d]]
        %v1023 = vstv %s1022
        %v1024 = vmul.f32 %v1023, %v181
        %v1025 = vmul.f32 %v1023, %v182
        %v1026 = vmul.f32 %v1023, %v183
        %v1030 = vrot.slane %v1024, 1
        %v1031 = vrot.slane %v1025, 1
        %v1032 = vsel %vm331, %v1030, %v1031
        %v1033 = vrot.slane %v1026, 1
        %v1034 = vsel %vm331, %v1031, %v1033
        %1035 = vrot.lane.b32.xlu0 %v1032, 127
        %v1036 = vpop.permute.xlu0 %1035
        %1037 = vrot.lane.b32.xlu0 %v1034, 127
        %v1038 = vpop.permute.xlu0 %1037
        %v1041 = vadd.f32 %v965, %v1036
        %v1042 = vadd.f32 %v966, %v1038
        %s1043 = sld [smem:[#allocation2 + $0x10d]]
        %v1044 = vstv %s1043
        %v1045 = vmul.f32 %v1044, %v181
        %v1046 = vmul.f32 %v1044, %v182
        %v1047 = vmul.f32 %v1044, %v183
        %v1051 = vrot.slane %v1045, 1
        %v1052 = vrot.slane %v1046, 1
        %v1053 = vsel %vm331, %v1051, %v1052
        %v1054 = vrot.slane %v1047, 1
        %v1055 = vsel %vm331, %v1052, %v1054
        %1056 = vrot.lane.b32.xlu0 %v1053, 127
        %v1057 = vpop.permute.xlu0 %1056
        %1058 = vrot.lane.b32.xlu0 %v1055, 127
        %v1059 = vpop.permute.xlu0 %1058
        %v1062 = vadd.f32 %v982, %v1057
        %v1063 = vadd.f32 %v983, %v1059
        %s1064 = sld [smem:[#allocation2 + $0x18d]]
        %v1065 = vstv %s1064
        %v1066 = vmul.f32 %v1065, %v181
        %v1067 = vmul.f32 %v1065, %v182
        %v1068 = vmul.f32 %v1065, %v183
        %v1072 = vrot.slane %v1066, 1
        %v1073 = vrot.slane %v1067, 1
        %v1074 = vsel %vm331, %v1072, %v1073
        %v1075 = vrot.slane %v1068, 1
        %v1076 = vsel %vm331, %v1073, %v1075
        %1077 = vrot.lane.b32.xlu0 %v1074, 127
        %v1078 = vpop.permute.xlu0 %1077
        %1079 = vrot.lane.b32.xlu0 %v1076, 127
        %v1080 = vpop.permute.xlu0 %1079
        %v1083 = vadd.f32 %v999, %v1078
        %v1084 = vadd.f32 %v1000, %v1080
        %s1085 = sld [smem:[#allocation2 + $0xe]]
        %v1086 = vstv %s1085
        %v1087 = vmul.f32 %v1086, %v181
        %v1088 = vmul.f32 %v1086, %v182
        %v1089 = vmul.f32 %v1086, %v183
        %v1093 = vrot.slane %v1087, 1
        %v1094 = vrot.slane %v1088, 1
        %v1095 = vsel %vm331, %v1093, %v1094
        %v1096 = vrot.slane %v1089, 1
        %v1097 = vsel %vm331, %v1094, %v1096
        %1098 = vrot.lane.b32.xlu0 %v1095, 126
        %v1099 = vpop.permute.xlu0 %1098
        %1100 = vrot.lane.b32.xlu0 %v1097, 126
        %v1101 = vpop.permute.xlu0 %1100
        %v1104 = vadd.f32 %v1020, %v1099
        %v1105 = vadd.f32 %v1021, %v1101
        %s1106 = sld [smem:[#allocation2 + $0x8e]]
        %v1107 = vstv %s1106
        %v1108 = vmul.f32 %v1107, %v181
        %v1109 = vmul.f32 %v1107, %v182
        %v1110 = vmul.f32 %v1107, %v183
        %v1114 = vrot.slane %v1108, 1
        %v1115 = vrot.slane %v1109, 1
        %v1116 = vsel %vm331, %v1114, %v1115
        %v1117 = vrot.slane %v1110, 1
        %v1118 = vsel %vm331, %v1115, %v1117
        %1119 = vrot.lane.b32.xlu0 %v1116, 126
        %v1120 = vpop.permute.xlu0 %1119
        %1121 = vrot.lane.b32.xlu0 %v1118, 126
        %v1122 = vpop.permute.xlu0 %1121
        %v1125 = vadd.f32 %v1041, %v1120
        %v1126 = vadd.f32 %v1042, %v1122
        %s1127 = sld [smem:[#allocation2 + $0x10e]]
        %v1128 = vstv %s1127
        %v1129 = vmul.f32 %v1128, %v181
        %v1130 = vmul.f32 %v1128, %v182
        %v1131 = vmul.f32 %v1128, %v183
        %v1135 = vrot.slane %v1129, 1
        %v1136 = vrot.slane %v1130, 1
        %v1137 = vsel %vm331, %v1135, %v1136
        %v1138 = vrot.slane %v1131, 1
        %v1139 = vsel %vm331, %v1136, %v1138
        %1140 = vrot.lane.b32.xlu0 %v1137, 126
        %v1141 = vpop.permute.xlu0 %1140
        %1142 = vrot.lane.b32.xlu0 %v1139, 126
        %v1143 = vpop.permute.xlu0 %1142
        %v1146 = vadd.f32 %v1062, %v1141
        %v1147 = vadd.f32 %v1063, %v1143
        %s1148 = sld [smem:[#allocation2 + $0x18e]]
        %v1149 = vstv %s1148
        %v1150 = vmul.f32 %v1149, %v181
        %v1151 = vmul.f32 %v1149, %v182
        %v1152 = vmul.f32 %v1149, %v183
        %v1156 = vrot.slane %v1150, 1
        %v1157 = vrot.slane %v1151, 1
        %v1158 = vsel %vm331, %v1156, %v1157
        %v1159 = vrot.slane %v1152, 1
        %v1160 = vsel %vm331, %v1157, %v1159
        %1161 = vrot.lane.b32.xlu0 %v1158, 126
        %v1162 = vpop.permute.xlu0 %1161
        %1163 = vrot.lane.b32.xlu0 %v1160, 126
        %v1164 = vpop.permute.xlu0 %1163
        %v1167 = vadd.f32 %v1083, %v1162
        %v1168 = vadd.f32 %v1084, %v1164
        %s1169 = sld [smem:[#allocation2 + $0xf]]
        %v1170 = vstv %s1169
        %v1171 = vmul.f32 %v1170, %v181
        %v1172 = vmul.f32 %v1170, %v182
        %v1173 = vmul.f32 %v1170, %v183
        %v1177 = vrot.slane %v1171, 2
        %v1178 = vrot.slane %v1172, 2
        %v1179 = vsel %vm568, %v1177, %v1178
        %v1180 = vrot.slane %v1173, 2
        %v1181 = vsel %vm568, %v1178, %v1180
        %v1184 = vadd.f32 %v1104, %v1179
        %v1185 = vadd.f32 %v1105, %v1181
        %s1186 = sld [smem:[#allocation2 + $0x8f]]
        %v1187 = vstv %s1186
        %v1188 = vmul.f32 %v1187, %v181
        %v1189 = vmul.f32 %v1187, %v182
        %v1190 = vmul.f32 %v1187, %v183
        %v1194 = vrot.slane %v1188, 2
        %v1195 = vrot.slane %v1189, 2
        %v1196 = vsel %vm568, %v1194, %v1195
        %v1197 = vrot.slane %v1190, 2
        %v1198 = vsel %vm568, %v1195, %v1197
        %v1201 = vadd.f32 %v1125, %v1196
        %v1202 = vadd.f32 %v1126, %v1198
        %s1203 = sld [smem:[#allocation2 + $0x10f]]
        %v1204 = vstv %s1203
        %v1205 = vmul.f32 %v1204, %v181
        %v1206 = vmul.f32 %v1204, %v182
        %v1207 = vmul.f32 %v1204, %v183
        %v1211 = vrot.slane %v1205, 2
        %v1212 = vrot.slane %v1206, 2
        %v1213 = vsel %vm568, %v1211, %v1212
        %v1214 = vrot.slane %v1207, 2
        %v1215 = vsel %vm568, %v1212, %v1214
        %v1218 = vadd.f32 %v1146, %v1213
        %v1219 = vadd.f32 %v1147, %v1215
        %s1220 = sld [smem:[#allocation2 + $0x18f]]
        %v1221 = vstv %s1220
        %v1222 = vmul.f32 %v1221, %v181
        %v1223 = vmul.f32 %v1221, %v182
        %v1224 = vmul.f32 %v1221, %v183
        %v1228 = vrot.slane %v1222, 2
        %v1229 = vrot.slane %v1223, 2
        %v1230 = vsel %vm568, %v1228, %v1229
        %v1231 = vrot.slane %v1224, 2
        %v1232 = vsel %vm568, %v1229, %v1231
        %v1235 = vadd.f32 %v1167, %v1230
        %v1236 = vadd.f32 %v1168, %v1232
        %s1237 = sld [smem:[#allocation2 + $0x10]]
        %v1238 = vstv %s1237
        %v1239 = vmul.f32 %v1238, %v181
        %v1240 = vmul.f32 %v1238, %v182
        %v1241 = vmul.f32 %v1238, %v183
        %v1245 = vrot.slane %v1239, 2
        %v1246 = vrot.slane %v1240, 2
        %v1247 = vsel %vm568, %v1245, %v1246
        %v1248 = vrot.slane %v1241, 2
        %v1249 = vsel %vm568, %v1246, %v1248
        %1250 = vrot.lane.b32.xlu0 %v1247, 127
        %v1251 = vpop.permute.xlu0 %1250
        %1252 = vrot.lane.b32.xlu0 %v1249, 127
        %v1253 = vpop.permute.xlu0 %1252
        %v1256 = vadd.f32 %v1184, %v1251
        %v1257 = vadd.f32 %v1185, %v1253
        %s1258 = sld [smem:[#allocation2 + $0x90]]
        %v1259 = vstv %s1258
        %v1260 = vmul.f32 %v1259, %v181
        %v1261 = vmul.f32 %v1259, %v182
        %v1262 = vmul.f32 %v1259, %v183
        %v1266 = vrot.slane %v1260, 2
        %v1267 = vrot.slane %v1261, 2
        %v1268 = vsel %vm568, %v1266, %v1267
        %v1269 = vrot.slane %v1262, 2
        %v1270 = vsel %vm568, %v1267, %v1269
        %1271 = vrot.lane.b32.xlu0 %v1268, 127
        %v1272 = vpop.permute.xlu0 %1271
        %1273 = vrot.lane.b32.xlu0 %v1270, 127
        %v1274 = vpop.permute.xlu0 %1273
        %v1277 = vadd.f32 %v1201, %v1272
        %v1278 = vadd.f32 %v1202, %v1274
        %s1279 = sld [smem:[#allocation2 + $0x110]]
        %v1280 = vstv %s1279
        %v1281 = vmul.f32 %v1280, %v181
        %v1282 = vmul.f32 %v1280, %v182
        %v1283 = vmul.f32 %v1280, %v183
        %v1287 = vrot.slane %v1281, 2
        %v1288 = vrot.slane %v1282, 2
        %v1289 = vsel %vm568, %v1287, %v1288
        %v1290 = vrot.slane %v1283, 2
        %v1291 = vsel %vm568, %v1288, %v1290
        %1292 = vrot.lane.b32.xlu0 %v1289, 127
        %v1293 = vpop.permute.xlu0 %1292
        %1294 = vrot.lane.b32.xlu0 %v1291, 127
        %v1295 = vpop.permute.xlu0 %1294
        %v1298 = vadd.f32 %v1218, %v1293
        %v1299 = vadd.f32 %v1219, %v1295
        %s1300 = sld [smem:[#allocation2 + $0x190]]
        %v1301 = vstv %s1300
        %v1302 = vmul.f32 %v1301, %v181
        %v1303 = vmul.f32 %v1301, %v182
        %v1304 = vmul.f32 %v1301, %v183
        %v1308 = vrot.slane %v1302, 2
        %v1309 = vrot.slane %v1303, 2
        %v1310 = vsel %vm568, %v1308, %v1309
        %v1311 = vrot.slane %v1304, 2
        %v1312 = vsel %vm568, %v1309, %v1311
        %1313 = vrot.lane.b32.xlu0 %v1310, 127
        %v1314 = vpop.permute.xlu0 %1313
        %1315 = vrot.lane.b32.xlu0 %v1312, 127
        %v1316 = vpop.permute.xlu0 %1315
        %v1319 = vadd.f32 %v1235, %v1314
        %v1320 = vadd.f32 %v1236, %v1316
        %s1321 = sld [smem:[#allocation2 + $0x11]]
        %v1322 = vstv %s1321
        %v1323 = vmul.f32 %v1322, %v181
        %v1324 = vmul.f32 %v1322, %v182
        %v1325 = vmul.f32 %v1322, %v183
        %v1329 = vrot.slane %v1323, 2
        %v1330 = vrot.slane %v1324, 2
        %v1331 = vsel %vm568, %v1329, %v1330
        %v1332 = vrot.slane %v1325, 2
        %v1333 = vsel %vm568, %v1330, %v1332
        %1334 = vrot.lane.b32.xlu0 %v1331, 126
        %v1335 = vpop.permute.xlu0 %1334
        %1336 = vrot.lane.b32.xlu0 %v1333, 126
        %v1337 = vpop.permute.xlu0 %1336
        %v1340 = vadd.f32 %v1256, %v1335
        %v1341 = vadd.f32 %v1257, %v1337
        %s1342 = sld [smem:[#allocation2 + $0x91]]
        %v1343 = vstv %s1342
        %v1344 = vmul.f32 %v1343, %v181
        %v1345 = vmul.f32 %v1343, %v182
        %v1346 = vmul.f32 %v1343, %v183
        %v1350 = vrot.slane %v1344, 2
        %v1351 = vrot.slane %v1345, 2
        %v1352 = vsel %vm568, %v1350, %v1351
        %v1353 = vrot.slane %v1346, 2
        %v1354 = vsel %vm568, %v1351, %v1353
        %1355 = vrot.lane.b32.xlu0 %v1352, 126
        %v1356 = vpop.permute.xlu0 %1355
        %1357 = vrot.lane.b32.xlu0 %v1354, 126
        %v1358 = vpop.permute.xlu0 %1357
        %v1361 = vadd.f32 %v1277, %v1356
        %v1362 = vadd.f32 %v1278, %v1358
        %s1363 = sld [smem:[#allocation2 + $0x111]]
        %v1364 = vstv %s1363
        %v1365 = vmul.f32 %v1364, %v181
        %v1366 = vmul.f32 %v1364, %v182
        %v1367 = vmul.f32 %v1364, %v183
        %v1371 = vrot.slane %v1365, 2
        %v1372 = vrot.slane %v1366, 2
        %v1373 = vsel %vm568, %v1371, %v1372
        %v1374 = vrot.slane %v1367, 2
        %v1375 = vsel %vm568, %v1372, %v1374
        %1376 = vrot.lane.b32.xlu0 %v1373, 126
        %v1377 = vpop.permute.xlu0 %1376
        %1378 = vrot.lane.b32.xlu0 %v1375, 126
        %v1379 = vpop.permute.xlu0 %1378
        %v1382 = vadd.f32 %v1298, %v1377
        %v1383 = vadd.f32 %v1299, %v1379
        %s1384 = sld [smem:[#allocation2 + $0x191]]
        %v1385 = vstv %s1384
        %v1386 = vmul.f32 %v1385, %v181
        %v1387 = vmul.f32 %v1385, %v182
        %v1388 = vmul.f32 %v1385, %v183
        %v1392 = vrot.slane %v1386, 2
        %v1393 = vrot.slane %v1387, 2
        %v1394 = vsel %vm568, %v1392, %v1393
        %v1395 = vrot.slane %v1388, 2
        %v1396 = vsel %vm568, %v1393, %v1395
        %1397 = vrot.lane.b32.xlu0 %v1394, 126
        %v1398 = vpop.permute.xlu0 %1397
        %1399 = vrot.lane.b32.xlu0 %v1396, 126
        %v1400 = vpop.permute.xlu0 %1399
        %v1403 = vadd.f32 %v1319, %v1398
        %v1404 = vadd.f32 %v1320, %v1400
        %s1405 = sld [smem:[#allocation2 + $0x12]]
        %v1406 = vstv %s1405
        %v1407 = vmul.f32 %v1406, %v184
        %v1408 = vmul.f32 %v1406, %v185
        %v1409 = vadd.f32 %v1340, %v1407
        %v1410 = vadd.f32 %v1341, %v1408
        %s1411 = sld [smem:[#allocation2 + $0x92]]
        %v1412 = vstv %s1411
        %v1413 = vmul.f32 %v1412, %v184
        %v1414 = vmul.f32 %v1412, %v185
        %v1415 = vadd.f32 %v1361, %v1413
        %v1416 = vadd.f32 %v1362, %v1414
        %s1417 = sld [smem:[#allocation2 + $0x112]]
        %v1418 = vstv %s1417
        %v1419 = vmul.f32 %v1418, %v184
        %v1420 = vmul.f32 %v1418, %v185
        %v1421 = vadd.f32 %v1382, %v1419
        %v1422 = vadd.f32 %v1383, %v1420
        %s1423 = sld [smem:[#allocation2 + $0x192]]
        %v1424 = vstv %s1423
        %v1425 = vmul.f32 %v1424, %v184
        %v1426 = vmul.f32 %v1424, %v185
        %v1427 = vadd.f32 %v1403, %v1425
        %v1428 = vadd.f32 %v1404, %v1426
        %s1429 = sld [smem:[#allocation2 + $0x13]]
        %v1430 = vstv %s1429
        %v1431 = vmul.f32 %v1430, %v184
        %v1432 = vmul.f32 %v1430, %v185
        %1435 = vrot.lane.b32.xlu0 %v1431, 127
        %v1436 = vpop.permute.xlu0 %1435
        %1437 = vrot.lane.b32.xlu0 %v1432, 127
        %v1438 = vpop.permute.xlu0 %1437
        %v1441 = vadd.f32 %v1409, %v1436
        %v1442 = vadd.f32 %v1410, %v1438
        %s1443 = sld [smem:[#allocation2 + $0x93]]
        %v1444 = vstv %s1443
        %v1445 = vmul.f32 %v1444, %v184
        %v1446 = vmul.f32 %v1444, %v185
        %1449 = vrot.lane.b32.xlu0 %v1445, 127
        %v1450 = vpop.permute.xlu0 %1449
        %1451 = vrot.lane.b32.xlu0 %v1446, 127
        %v1452 = vpop.permute.xlu0 %1451
        %v1455 = vadd.f32 %v1415, %v1450
        %v1456 = vadd.f32 %v1416, %v1452
        %s1457 = sld [smem:[#allocation2 + $0x113]]
        %v1458 = vstv %s1457
        %v1459 = vmul.f32 %v1458, %v184
        %v1460 = vmul.f32 %v1458, %v185
        %1463 = vrot.lane.b32.xlu0 %v1459, 127
        %v1464 = vpop.permute.xlu0 %1463
        %1465 = vrot.lane.b32.xlu0 %v1460, 127
        %v1466 = vpop.permute.xlu0 %1465
        %v1469 = vadd.f32 %v1421, %v1464
        %v1470 = vadd.f32 %v1422, %v1466
        %s1471 = sld [smem:[#allocation2 + $0x193]]
        %v1472 = vstv %s1471
        %v1473 = vmul.f32 %v1472, %v184
        %v1474 = vmul.f32 %v1472, %v185
        %1477 = vrot.lane.b32.xlu0 %v1473, 127
        %v1478 = vpop.permute.xlu0 %1477
        %1479 = vrot.lane.b32.xlu0 %v1474, 127
        %v1480 = vpop.permute.xlu0 %1479
        %v1483 = vadd.f32 %v1427, %v1478
        %v1484 = vadd.f32 %v1428, %v1480
        %s1485 = sld [smem:[#allocation2 + $0x14]]
        %v1486 = vstv %s1485
        %v1487 = vmul.f32 %v1486, %v184
        %v1488 = vmul.f32 %v1486, %v185
        %1491 = vrot.lane.b32.xlu0 %v1487, 126
        %v1492 = vpop.permute.xlu0 %1491
        %1493 = vrot.lane.b32.xlu0 %v1488, 126
        %v1494 = vpop.permute.xlu0 %1493
        %v1497 = vadd.f32 %v1441, %v1492
        %v1498 = vadd.f32 %v1442, %v1494
        %s1499 = sld [smem:[#allocation2 + $0x94]]
        %v1500 = vstv %s1499
        %v1501 = vmul.f32 %v1500, %v184
        %v1502 = vmul.f32 %v1500, %v185
        %1505 = vrot.lane.b32.xlu0 %v1501, 126
        %v1506 = vpop.permute.xlu0 %1505
        %1507 = vrot.lane.b32.xlu0 %v1502, 126
        %v1508 = vpop.permute.xlu0 %1507
        %v1511 = vadd.f32 %v1455, %v1506
        %v1512 = vadd.f32 %v1456, %v1508
        %s1513 = sld [smem:[#allocation2 + $0x114]]
        %v1514 = vstv %s1513
        %v1515 = vmul.f32 %v1514, %v184
        %v1516 = vmul.f32 %v1514, %v185
        %1519 = vrot.lane.b32.xlu0 %v1515, 126
        %v1520 = vpop.permute.xlu0 %1519
        %1521 = vrot.lane.b32.xlu0 %v1516, 126
        %v1522 = vpop.permute.xlu0 %1521
        %v1525 = vadd.f32 %v1469, %v1520
        %v1526 = vadd.f32 %v1470, %v1522
        %s1527 = sld [smem:[#allocation2 + $0x194]]
        %v1528 = vstv %s1527
        %v1529 = vmul.f32 %v1528, %v184
        %v1530 = vmul.f32 %v1528, %v185
        %1533 = vrot.lane.b32.xlu0 %v1529, 126
        %v1534 = vpop.permute.xlu0 %1533
        %1535 = vrot.lane.b32.xlu0 %v1530, 126
        %v1536 = vpop.permute.xlu0 %1535
        %v1539 = vadd.f32 %v1483, %v1534
        %v1540 = vadd.f32 %v1484, %v1536
        %s1541 = sld [smem:[#allocation2 + $0x15]]
        %v1542 = vstv %s1541
        %v1543 = vmul.f32 %v1542, %v184
        %v1544 = vmul.f32 %v1542, %v185
        %v1545 = vmul.f32 %v1542, %v186
        %v1549 = vrot.slane %v1543, 1
        %v1550 = vrot.slane %v1544, 1
        %v1551 = vsel %vm331, %v1549, %v1550
        %v1552 = vrot.slane %v1545, 1
        %v1553 = vsel %vm331, %v1550, %v1552
        %v1556 = vadd.f32 %v1497, %v1551
        %v1557 = vadd.f32 %v1498, %v1553
        %s1558 = sld [smem:[#allocation2 + $0x95]]
        %v1559 = vstv %s1558
        %v1560 = vmul.f32 %v1559, %v184
        %v1561 = vmul.f32 %v1559, %v185
        %v1562 = vmul.f32 %v1559, %v186
        %v1566 = vrot.slane %v1560, 1
        %v1567 = vrot.slane %v1561, 1
        %v1568 = vsel %vm331, %v1566, %v1567
        %v1569 = vrot.slane %v1562, 1
        %v1570 = vsel %vm331, %v1567, %v1569
        %v1573 = vadd.f32 %v1511, %v1568
        %v1574 = vadd.f32 %v1512, %v1570
        %s1575 = sld [smem:[#allocation2 + $0x115]]
        %v1576 = vstv %s1575
        %v1577 = vmul.f32 %v1576, %v184
        %v1578 = vmul.f32 %v1576, %v185
        %v1579 = vmul.f32 %v1576, %v186
        %v1583 = vrot.slane %v1577, 1
        %v1584 = vrot.slane %v1578, 1
        %v1585 = vsel %vm331, %v1583, %v1584
        %v1586 = vrot.slane %v1579, 1
        %v1587 = vsel %vm331, %v1584, %v1586
        %v1590 = vadd.f32 %v1525, %v1585
        %v1591 = vadd.f32 %v1526, %v1587
        %s1592 = sld [smem:[#allocation2 + $0x195]]
        %v1593 = vstv %s1592
        %v1594 = vmul.f32 %v1593, %v184
        %v1595 = vmul.f32 %v1593, %v185
        %v1596 = vmul.f32 %v1593, %v186
        %v1600 = vrot.slane %v1594, 1
        %v1601 = vrot.slane %v1595, 1
        %v1602 = vsel %vm331, %v1600, %v1601
        %v1603 = vrot.slane %v1596, 1
        %v1604 = vsel %vm331, %v1601, %v1603
        %v1607 = vadd.f32 %v1539, %v1602
        %v1608 = vadd.f32 %v1540, %v1604
        %s1609 = sld [smem:[#allocation2 + $0x16]]
        %v1610 = vstv %s1609
        %v1611 = vmul.f32 %v1610, %v184
        %v1612 = vmul.f32 %v1610, %v185
        %v1613 = vmul.f32 %v1610, %v186
        %v1617 = vrot.slane %v1611, 1
        %v1618 = vrot.slane %v1612, 1
        %v1619 = vsel %vm331, %v1617, %v1618
        %v1620 = vrot.slane %v1613, 1
        %v1621 = vsel %vm331, %v1618, %v1620
        %1622 = vrot.lane.b32.xlu0 %v1619, 127
        %v1623 = vpop.permute.xlu0 %1622
        %1624 = vrot.lane.b32.xlu0 %v1621, 127
        %v1625 = vpop.permute.xlu0 %1624
        %v1628 = vadd.f32 %v1556, %v1623
        %v1629 = vadd.f32 %v1557, %v1625
        %s1630 = sld [smem:[#allocation2 + $0x96]]
        %v1631 = vstv %s1630
        %v1632 = vmul.f32 %v1631, %v184
        %v1633 = vmul.f32 %v1631, %v185
        %v1634 = vmul.f32 %v1631, %v186
        %v1638 = vrot.slane %v1632, 1
        %v1639 = vrot.slane %v1633, 1
        %v1640 = vsel %vm331, %v1638, %v1639
        %v1641 = vrot.slane %v1634, 1
        %v1642 = vsel %vm331, %v1639, %v1641
        %1643 = vrot.lane.b32.xlu0 %v1640, 127
        %v1644 = vpop.permute.xlu0 %1643
        %1645 = vrot.lane.b32.xlu0 %v1642, 127
        %v1646 = vpop.permute.xlu0 %1645
        %v1649 = vadd.f32 %v1573, %v1644
        %v1650 = vadd.f32 %v1574, %v1646
        %s1651 = sld [smem:[#allocation2 + $0x116]]
        %v1652 = vstv %s1651
        %v1653 = vmul.f32 %v1652, %v184
        %v1654 = vmul.f32 %v1652, %v185
        %v1655 = vmul.f32 %v1652, %v186
        %v1659 = vrot.slane %v1653, 1
        %v1660 = vrot.slane %v1654, 1
        %v1661 = vsel %vm331, %v1659, %v1660
        %v1662 = vrot.slane %v1655, 1
        %v1663 = vsel %vm331, %v1660, %v1662
        %1664 = vrot.lane.b32.xlu0 %v1661, 127
        %v1665 = vpop.permute.xlu0 %1664
        %1666 = vrot.lane.b32.xlu0 %v1663, 127
        %v1667 = vpop.permute.xlu0 %1666
        %v1670 = vadd.f32 %v1590, %v1665
        %v1671 = vadd.f32 %v1591, %v1667
        %s1672 = sld [smem:[#allocation2 + $0x196]]
        %v1673 = vstv %s1672
        %v1674 = vmul.f32 %v1673, %v184
        %v1675 = vmul.f32 %v1673, %v185
        %v1676 = vmul.f32 %v1673, %v186
        %v1680 = vrot.slane %v1674, 1
        %v1681 = vrot.slane %v1675, 1
        %v1682 = vsel %vm331, %v1680, %v1681
        %v1683 = vrot.slane %v1676, 1
        %v1684 = vsel %vm331, %v1681, %v1683
        %1685 = vrot.lane.b32.xlu0 %v1682, 127
        %v1686 = vpop.permute.xlu0 %1685
        %1687 = vrot.lane.b32.xlu0 %v1684, 127
        %v1688 = vpop.permute.xlu0 %1687
        %v1691 = vadd.f32 %v1607, %v1686
        %v1692 = vadd.f32 %v1608, %v1688
        %s1693 = sld [smem:[#allocation2 + $0x17]]
        %v1694 = vstv %s1693
        %v1695 = vmul.f32 %v1694, %v184
        %v1696 = vmul.f32 %v1694, %v185
        %v1697 = vmul.f32 %v1694, %v186
        %v1701 = vrot.slane %v1695, 1
        %v1702 = vrot.slane %v1696, 1
        %v1703 = vsel %vm331, %v1701, %v1702
        %v1704 = vrot.slane %v1697, 1
        %v1705 = vsel %vm331, %v1702, %v1704
        %1706 = vrot.lane.b32.xlu0 %v1703, 126
        %v1707 = vpop.permute.xlu0 %1706
        %1708 = vrot.lane.b32.xlu0 %v1705, 126
        %v1709 = vpop.permute.xlu0 %1708
        %v1712 = vadd.f32 %v1628, %v1707
        %v1713 = vadd.f32 %v1629, %v1709
        %s1714 = sld [smem:[#allocation2 + $0x97]]
        %v1715 = vstv %s1714
        %v1716 = vmul.f32 %v1715, %v184
        %v1717 = vmul.f32 %v1715, %v185
        %v1718 = vmul.f32 %v1715, %v186
        %v1722 = vrot.slane %v1716, 1
        %v1723 = vrot.slane %v1717, 1
        %v1724 = vsel %vm331, %v1722, %v1723
        %v1725 = vrot.slane %v1718, 1
        %v1726 = vsel %vm331, %v1723, %v1725
        %1727 = vrot.lane.b32.xlu0 %v1724, 126
        %v1728 = vpop.permute.xlu0 %1727
        %1729 = vrot.lane.b32.xlu0 %v1726, 126
        %v1730 = vpop.permute.xlu0 %1729
        %v1733 = vadd.f32 %v1649, %v1728
        %v1734 = vadd.f32 %v1650, %v1730
        %s1735 = sld [smem:[#allocation2 + $0x117]]
        %v1736 = vstv %s1735
        %v1737 = vmul.f32 %v1736, %v184
        %v1738 = vmul.f32 %v1736, %v185
        %v1739 = vmul.f32 %v1736, %v186
        %v1743 = vrot.slane %v1737, 1
        %v1744 = vrot.slane %v1738, 1
        %v1745 = vsel %vm331, %v1743, %v1744
        %v1746 = vrot.slane %v1739, 1
        %v1747 = vsel %vm331, %v1744, %v1746
        %1748 = vrot.lane.b32.xlu0 %v1745, 126
        %v1749 = vpop.permute.xlu0 %1748
        %1750 = vrot.lane.b32.xlu0 %v1747, 126
        %v1751 = vpop.permute.xlu0 %1750
        %v1754 = vadd.f32 %v1670, %v1749
        %v1755 = vadd.f32 %v1671, %v1751
        %s1756 = sld [smem:[#allocation2 + $0x197]]
        %v1757 = vstv %s1756
        %v1758 = vmul.f32 %v1757, %v184
        %v1759 = vmul.f32 %v1757, %v185
        %v1760 = vmul.f32 %v1757, %v186
        %v1764 = vrot.slane %v1758, 1
        %v1765 = vrot.slane %v1759, 1
        %v1766 = vsel %vm331, %v1764, %v1765
        %v1767 = vrot.slane %v1760, 1
        %v1768 = vsel %vm331, %v1765, %v1767
        %1769 = vrot.lane.b32.xlu0 %v1766, 126
        %v1770 = vpop.permute.xlu0 %1769
        %1771 = vrot.lane.b32.xlu0 %v1768, 126
        %v1772 = vpop.permute.xlu0 %1771
        %v1775 = vadd.f32 %v1691, %v1770
        %v1776 = vadd.f32 %v1692, %v1772
        %s1777 = sld [smem:[#allocation2 + $0x18]]
        %v1778 = vstv %s1777
        %v1779 = vmul.f32 %v1778, %v184
        %v1780 = vmul.f32 %v1778, %v185
        %v1781 = vmul.f32 %v1778, %v186
        %v1785 = vrot.slane %v1779, 2
        %v1786 = vrot.slane %v1780, 2
        %v1787 = vsel %vm568, %v1785, %v1786
        %v1788 = vrot.slane %v1781, 2
        %v1789 = vsel %vm568, %v1786, %v1788
        %v1792 = vadd.f32 %v1712, %v1787
        %v1793 = vadd.f32 %v1713, %v1789
        %s1794 = sld [smem:[#allocation2 + $0x98]]
        %v1795 = vstv %s1794
        %v1796 = vmul.f32 %v1795, %v184
        %v1797 = vmul.f32 %v1795, %v185
        %v1798 = vmul.f32 %v1795, %v186
        %v1802 = vrot.slane %v1796, 2
        %v1803 = vrot.slane %v1797, 2
        %v1804 = vsel %vm568, %v1802, %v1803
        %v1805 = vrot.slane %v1798, 2
        %v1806 = vsel %vm568, %v1803, %v1805
        %v1809 = vadd.f32 %v1733, %v1804
        %v1810 = vadd.f32 %v1734, %v1806
        %s1811 = sld [smem:[#allocation2 + $0x118]]
        %v1812 = vstv %s1811
        %v1813 = vmul.f32 %v1812, %v184
        %v1814 = vmul.f32 %v1812, %v185
        %v1815 = vmul.f32 %v1812, %v186
        %v1819 = vrot.slane %v1813, 2
        %v1820 = vrot.slane %v1814, 2
        %v1821 = vsel %vm568, %v1819, %v1820
        %v1822 = vrot.slane %v1815, 2
        %v1823 = vsel %vm568, %v1820, %v1822
        %v1826 = vadd.f32 %v1754, %v1821
        %v1827 = vadd.f32 %v1755, %v1823
        %s1828 = sld [smem:[#allocation2 + $0x198]]
        %v1829 = vstv %s1828
        %v1830 = vmul.f32 %v1829, %v184
        %v1831 = vmul.f32 %v1829, %v185
        %v1832 = vmul.f32 %v1829, %v186
        %v1836 = vrot.slane %v1830, 2
        %v1837 = vrot.slane %v1831, 2
        %v1838 = vsel %vm568, %v1836, %v1837
        %v1839 = vrot.slane %v1832, 2
        %v1840 = vsel %vm568, %v1837, %v1839
        %v1843 = vadd.f32 %v1775, %v1838
        %v1844 = vadd.f32 %v1776, %v1840
        %s1845 = sld [smem:[#allocation2 + $0x19]]
        %v1846 = vstv %s1845
        %v1847 = vmul.f32 %v1846, %v184
        %v1848 = vmul.f32 %v1846, %v185
        %v1849 = vmul.f32 %v1846, %v186
        %v1853 = vrot.slane %v1847, 2
        %v1854 = vrot.slane %v1848, 2
        %v1855 = vsel %vm568, %v1853, %v1854
        %v1856 = vrot.slane %v1849, 2
        %v1857 = vsel %vm568, %v1854, %v1856
        %1858 = vrot.lane.b32.xlu0 %v1855, 127
        %v1859 = vpop.permute.xlu0 %1858
        %1860 = vrot.lane.b32.xlu0 %v1857, 127
        %v1861 = vpop.permute.xlu0 %1860
        %v1864 = vadd.f32 %v1792, %v1859
        %v1865 = vadd.f32 %v1793, %v1861
        %s1866 = sld [smem:[#allocation2 + $0x99]]
        %v1867 = vstv %s1866
        %v1868 = vmul.f32 %v1867, %v184
        %v1869 = vmul.f32 %v1867, %v185
        %v1870 = vmul.f32 %v1867, %v186
        %v1874 = vrot.slane %v1868, 2
        %v1875 = vrot.slane %v1869, 2
        %v1876 = vsel %vm568, %v1874, %v1875
        %v1877 = vrot.slane %v1870, 2
        %v1878 = vsel %vm568, %v1875, %v1877
        %1879 = vrot.lane.b32.xlu0 %v1876, 127
        %v1880 = vpop.permute.xlu0 %1879
        %1881 = vrot.lane.b32.xlu0 %v1878, 127
        %v1882 = vpop.permute.xlu0 %1881
        %v1885 = vadd.f32 %v1809, %v1880
        %v1886 = vadd.f32 %v1810, %v1882
        %s1887 = sld [smem:[#allocation2 + $0x119]]
        %v1888 = vstv %s1887
        %v1889 = vmul.f32 %v1888, %v184
        %v1890 = vmul.f32 %v1888, %v185
        %v1891 = vmul.f32 %v1888, %v186
        %v1895 = vrot.slane %v1889, 2
        %v1896 = vrot.slane %v1890, 2
        %v1897 = vsel %vm568, %v1895, %v1896
        %v1898 = vrot.slane %v1891, 2
        %v1899 = vsel %vm568, %v1896, %v1898
        %1900 = vrot.lane.b32.xlu0 %v1897, 127
        %v1901 = vpop.permute.xlu0 %1900
        %1902 = vrot.lane.b32.xlu0 %v1899, 127
        %v1903 = vpop.permute.xlu0 %1902
        %v1906 = vadd.f32 %v1826, %v1901
        %v1907 = vadd.f32 %v1827, %v1903
        %s1908 = sld [smem:[#allocation2 + $0x199]]
        %v1909 = vstv %s1908
        %v1910 = vmul.f32 %v1909, %v184
        %v1911 = vmul.f32 %v1909, %v185
        %v1912 = vmul.f32 %v1909, %v186
        %v1916 = vrot.slane %v1910, 2
        %v1917 = vrot.slane %v1911, 2
        %v1918 = vsel %vm568, %v1916, %v1917
        %v1919 = vrot.slane %v1912, 2
        %v1920 = vsel %vm568, %v1917, %v1919
        %1921 = vrot.lane.b32.xlu0 %v1918, 127
        %v1922 = vpop.permute.xlu0 %1921
        %1923 = vrot.lane.b32.xlu0 %v1920, 127
        %v1924 = vpop.permute.xlu0 %1923
        %v1927 = vadd.f32 %v1843, %v1922
        %v1928 = vadd.f32 %v1844, %v1924
        %s1929 = sld [smem:[#allocation2 + $0x1a]]
        %v1930 = vstv %s1929
        %v1931 = vmul.f32 %v1930, %v184
        %v1932 = vmul.f32 %v1930, %v185
        %v1933 = vmul.f32 %v1930, %v186
        %v1937 = vrot.slane %v1931, 2
        %v1938 = vrot.slane %v1932, 2
        %v1939 = vsel %vm568, %v1937, %v1938
        %v1940 = vrot.slane %v1933, 2
        %v1941 = vsel %vm568, %v1938, %v1940
        %1942 = vrot.lane.b32.xlu0 %v1939, 126
        %v1943 = vpop.permute.xlu0 %1942
        %1944 = vrot.lane.b32.xlu0 %v1941, 126
        %v1945 = vpop.permute.xlu0 %1944
        %v1948 = vadd.f32 %v1864, %v1943
        %v1949 = vadd.f32 %v1865, %v1945
        %s1950 = sld [smem:[#allocation2 + $0x9a]]
        %v1951 = vstv %s1950
        %v1952 = vmul.f32 %v1951, %v184
        %v1953 = vmul.f32 %v1951, %v185
        %v1954 = vmul.f32 %v1951, %v186
        %v1958 = vrot.slane %v1952, 2
        %v1959 = vrot.slane %v1953, 2
        %v1960 = vsel %vm568, %v1958, %v1959
        %v1961 = vrot.slane %v1954, 2
        %v1962 = vsel %vm568, %v1959, %v1961
        %1963 = vrot.lane.b32.xlu0 %v1960, 126
        %v1964 = vpop.permute.xlu0 %1963
        %1965 = vrot.lane.b32.xlu0 %v1962, 126
        %v1966 = vpop.permute.xlu0 %1965
        %v1969 = vadd.f32 %v1885, %v1964
        %v1970 = vadd.f32 %v1886, %v1966
        %s1971 = sld [smem:[#allocation2 + $0x11a]]
        %v1972 = vstv %s1971
        %v1973 = vmul.f32 %v1972, %v184
        %v1974 = vmul.f32 %v1972, %v185
        %v1975 = vmul.f32 %v1972, %v186
        %v1979 = vrot.slane %v1973, 2
        %v1980 = vrot.slane %v1974, 2
        %v1981 = vsel %vm568, %v1979, %v1980
        %v1982 = vrot.slane %v1975, 2
        %v1983 = vsel %vm568, %v1980, %v1982
        %1984 = vrot.lane.b32.xlu0 %v1981, 126
        %v1985 = vpop.permute.xlu0 %1984
        %1986 = vrot.lane.b32.xlu0 %v1983, 126
        %v1987 = vpop.permute.xlu0 %1986
        %v1990 = vadd.f32 %v1906, %v1985
        %v1991 = vadd.f32 %v1907, %v1987
        %s1992 = sld [smem:[#allocation2 + $0x19a]]
        %v1993 = vstv %s1992
        %v1994 = vmul.f32 %v1993, %v184
        %v1995 = vmul.f32 %v1993, %v185
        %v1996 = vmul.f32 %v1993, %v186
        %v2000 = vrot.slane %v1994, 2
        %v2001 = vrot.slane %v1995, 2
        %v2002 = vsel %vm568, %v2000, %v2001
        %v2003 = vrot.slane %v1996, 2
        %v2004 = vsel %vm568, %v2001, %v2003
        %2005 = vrot.lane.b32.xlu0 %v2002, 126
        %v2006 = vpop.permute.xlu0 %2005
        %2007 = vrot.lane.b32.xlu0 %v2004, 126
        %v2008 = vpop.permute.xlu0 %2007
        %v2011 = vadd.f32 %v1927, %v2006
        %v2012 = vadd.f32 %v1928, %v2008
        %v2013 = vpack.c.bf16 %v1949, %v1948
        %v2015 = vunpack.c.l.b16 %v2013
        %v2016 = vunpack.c.h.b16 %v2013
        %v2017 = vpack.c.b16 %v2015, %v2015
        %v2018 = vpack.c.b16 %v2016, %v2016
        %vm2021 = vcmask 125952
        %2022 = vst.msk [vmem:[%s160] sm:$0xf] %vm2021, %v2017
        %2023 = vst.msk [vmem:[%s160 + $0x4] sm:$0xf] %vm2021, %v2018
        %v2024 = vpack.c.bf16 %v1970, %v1969
        %v2026 = vunpack.c.l.b16 %v2024
        %v2027 = vunpack.c.h.b16 %v2024
        %v2028 = vpack.c.b16 %v2026, %v2026
        %v2029 = vpack.c.b16 %v2027, %v2027
        %s2032 = scalar_lea.vmem %s160, 8 [#allocation4]
        %2033 = vst.msk [vmem:[%s2032] sm:$0xf] %vm2021, %v2028
        %2034 = vst.msk [vmem:[%s2032 + $0x4] sm:$0xf] %vm2021, %v2029
        %v2035 = vpack.c.bf16 %v1991, %v1990
        %v2037 = vunpack.c.l.b16 %v2035
        %v2038 = vunpack.c.h.b16 %v2035
        %v2039 = vpack.c.b16 %v2037, %v2037
        %v2040 = vpack.c.b16 %v2038, %v2038
        %s2043 = scalar_lea.vmem %s160, 16 [#allocation4]
        %2044 = vst.msk [vmem:[%s2043] sm:$0xf] %vm2021, %v2039
        %2045 = vst.msk [vmem:[%s2043 + $0x4] sm:$0xf] %vm2021, %v2040
        %v2046 = vpack.c.bf16 %v2012, %v2011
        %v2048 = vunpack.c.l.b16 %v2046
        %v2049 = vunpack.c.h.b16 %v2046
        %v2050 = vpack.c.b16 %v2048, %v2048
        %v2051 = vpack.c.b16 %v2049, %v2049
        %s2054 = scalar_lea.vmem %s160, 24 [#allocation4]
        %2055 = vst.msk [vmem:[%s2054] sm:$0xf] %vm2021, %v2050
        %2056 = vst.msk [vmem:[%s2054 + $0x4] sm:$0xf] %vm2021, %v2051
        %s2057 = sand.u32 %s83, 1
        %s2058 = sand.u32 %s83, 1
        %s2059 = smul.addr %s2058, 32
        %s2060 = scalar_lea.vmem [#allocation4], %s2059
        // Predicated region
        $region33: #{discriminator_forward.4} parent=27 // pred_check
          %p2061 = pneg %p93
        $region34: #{discriminator_forward.4} parent=27 // pred_check_branch
          %2063 = sbr.rel (%p2061) target = $region36
        $region35: #{discriminator_forward.4} parent=27 // pred_region
          %s2064 = smul.addr %s19, 2
          %s2065 = smul.addr %s18, 32
          %s2066 = sadd.s32 %s2064, %s2065
          %s2067 = smul.addr %s2066, 4
          %s2068 = scalar_lea.vmem %s2, %s2067
          // Predicated region
          $region37: #{discriminator_forward.4} parent=35 // pred_check
            _
          $region38: #{discriminator_forward.4} parent=35 // pred_check_branch
            %2070 = sbr.rel (0) target = $region40
          $region39: #{discriminator_forward.4} parent=35 // pred_region
            // Predicated region
            $region41: #{discriminator_forward.4} parent=39 // pred_check
              _
            $region42: #{discriminator_forward.4} parent=39 // pred_check_branch
              %2072 = sbr.rel target = $region44
            $region43: #{discriminator_forward.4} parent=39 // pred_region
              // Predicated region
              $region56: #{discriminator_forward.4} parent=43 // pred_check
                _
              $region57: #{discriminator_forward.4} parent=43 // pred_check_branch
                %2102 = sbr.rel (0) target = $region59
              $region58: #{discriminator_forward.4} parent=43 // pred_region
                loop: start=0, step=1, limit=1
                $region60: #{discriminator_forward.4} parent=58 // loop_pre_header
                  _
                $region61: #{discriminator_forward.4} parent=58 // loop_header
                  %s2104 = sphi 0, %s2108
                  %p2105 = scmp.ge.s32.totalorder %s2104, 1
                  %s2109 = sphi %s2060, %s2060
                  %s2110 = sphi %s2068, %s2068
                $region62: #{discriminator_forward.4} parent=58 // loop_header_branch
                  %2107 = sbr.rel (%p2105) target = $region66
                $region63: #{discriminator_forward.4} parent=58 // loop_body
                  _
                $region64: #{discriminator_forward.4} parent=58 // loop_footer
                  %s2108 = sadd.s32 1, %s2104
                $region65: #{discriminator_forward.4} parent=58 // loop_footer_branch
                  %2103 = sbr.rel target = $region61
                $region66: #{discriminator_forward.4} parent=58 // loop_exit
                  _
                %s2112 = ssub.s32 16, 1
                loop: start=0, step=1, limit=1
                $region67: #{discriminator_forward.4} parent=58 // loop_pre_header
                  _
                $region68: #{discriminator_forward.4} parent=58 // loop_header
                  %s2114 = sphi 0, %s2118
                  %p2115 = scmp.ge.s32.totalorder %s2114, 1
                  %s2119 = sphi %s2060, %s2060
                  %s2120 = sphi %s2068, %s2068
                $region69: #{discriminator_forward.4} parent=58 // loop_header_branch
                  %2117 = sbr.rel (%p2115) target = $region73
                $region70: #{discriminator_forward.4} parent=58 // loop_body
                  %v2121 = vld [vmem:[%s2119] sm:%s2112]
                  %2122 = vst [vmem:[%s2120] sm:%s2112] %v2121
                  %v2123 = vld [vmem:[%s2119 + $0x4] sm:%s2112]
                  %2124 = vst [vmem:[%s2120 + $0x4] sm:%s2112] %v2123
                  %v2125 = vld [vmem:[%s2119 + $0x8] sm:%s2112]
                  %2126 = vst [vmem:[%s2120 + $0x100] sm:%s2112] %v2125
                  %v2127 = vld [vmem:[%s2119 + $0xc] sm:%s2112]
                  %2128 = vst [vmem:[%s2120 + $0x104] sm:%s2112] %v2127
                  %v2129 = vld [vmem:[%s2119 + $0x10] sm:%s2112]
                  %2130 = vst [vmem:[%s2120 + $0x200] sm:%s2112] %v2129
                  %v2131 = vld [vmem:[%s2119 + $0x14] sm:%s2112]
                  %2132 = vst [vmem:[%s2120 + $0x204] sm:%s2112] %v2131
                  %v2133 = vld [vmem:[%s2119 + $0x18] sm:%s2112]
                  %2134 = vst [vmem:[%s2120 + $0x300] sm:%s2112] %v2133
                  %v2135 = vld [vmem:[%s2119 + $0x1c] sm:%s2112]
                  %2136 = vst [vmem:[%s2120 + $0x304] sm:%s2112] %v2135
                $region71: #{discriminator_forward.4} parent=58 // loop_footer
                  %s2118 = sadd.s32 1, %s2114
                $region72: #{discriminator_forward.4} parent=58 // loop_footer_branch
                  %2113 = sbr.rel target = $region68
                $region73: #{discriminator_forward.4} parent=58 // loop_exit
                  _
              $region59: #{discriminator_forward.4} parent=43 // pred_fallthru
                _
            $region44: #{discriminator_forward.4} parent=39 // pred_fallthru
              _
            // Predicated region
            $region45: #{discriminator_forward.4} parent=39 // pred_check
              _
            $region46: #{discriminator_forward.4} parent=39 // pred_check_branch
              %2074 = sbr.rel (0) target = $region48
            $region47: #{discriminator_forward.4} parent=39 // pred_region
              %s2076 = ssub.s32 16, 1
              loop: start=0, step=1, limit=1
              $region49: #{discriminator_forward.4} parent=47 // loop_pre_header
                _
              $region50: #{discriminator_forward.4} parent=47 // loop_header
                %s2078 = sphi 0, %s2082
                %p2079 = scmp.ge.s32.totalorder %s2078, 1
                %s2083 = sphi %s2060, %s2060
                %s2084 = sphi %s2068, %s2068
              $region51: #{discriminator_forward.4} parent=47 // loop_header_branch
                %2081 = sbr.rel (%p2079) target = $region55
              $region52: #{discriminator_forward.4} parent=47 // loop_body
                %v2085 = vld [vmem:[%s2083] sm:%s2076]
                %2086 = vst [vmem:[%s2084] sm:%s2076] %v2085
                %v2087 = vld [vmem:[%s2083 + $0x4] sm:%s2076]
                %2088 = vst [vmem:[%s2084 + $0x4] sm:%s2076] %v2087
                %v2089 = vld [vmem:[%s2083 + $0x8] sm:%s2076]
                %2090 = vst [vmem:[%s2084 + $0x100] sm:%s2076] %v2089
                %v2091 = vld [vmem:[%s2083 + $0xc] sm:%s2076]
                %2092 = vst [vmem:[%s2084 + $0x104] sm:%s2076] %v2091
                %v2093 = vld [vmem:[%s2083 + $0x10] sm:%s2076]
                %2094 = vst [vmem:[%s2084 + $0x200] sm:%s2076] %v2093
                %v2095 = vld [vmem:[%s2083 + $0x14] sm:%s2076]
                %2096 = vst [vmem:[%s2084 + $0x204] sm:%s2076] %v2095
                %v2097 = vld [vmem:[%s2083 + $0x18] sm:%s2076]
                %2098 = vst [vmem:[%s2084 + $0x300] sm:%s2076] %v2097
                %v2099 = vld [vmem:[%s2083 + $0x1c] sm:%s2076]
                %2100 = vst [vmem:[%s2084 + $0x304] sm:%s2076] %v2099
              $region53: #{discriminator_forward.4} parent=47 // loop_footer
                %s2082 = sadd.s32 1, %s2078
              $region54: #{discriminator_forward.4} parent=47 // loop_footer_branch
                %2077 = sbr.rel target = $region50
              $region55: #{discriminator_forward.4} parent=47 // loop_exit
                _
            $region48: #{discriminator_forward.4} parent=39 // pred_fallthru
              _
          $region40: #{discriminator_forward.4} parent=35 // pred_fallthru
            _
          %2137 = vnop
        $region36: #{discriminator_forward.4} parent=27 // pred_fallthru
          _
      $region28: #{discriminator_forward.4} parent=5 // pred_fallthru
        _
      %p2138 = scmp.le.s32.totalorder 2, %s9
      // Predicated region
      $region74: #{discriminator_forward.4} parent=5 // pred_check
        %p2139 = pneg %p2138
      $region75: #{discriminator_forward.4} parent=5 // pred_check_branch
        %2141 = sbr.rel (%p2139) target = $region77
      $region76: #{discriminator_forward.4} parent=5 // pred_region
        %s2142 = ssub.s32 %s9, 2
        // Predicated region
        $region78: #{discriminator_forward.4} parent=76 // pred_check
          %p2143 = pneg %p99
        $region79: #{discriminator_forward.4} parent=76 // pred_check_branch
          %2145 = sbr.rel (%p2143) target = $region81
        $region80: #{discriminator_forward.4} parent=76 // pred_region
          %s2146 = sand.u32 %s84, 1
          %s2147 = sand.u32 %s84, 1
          %s2148 = smul.addr %s2147, 32
          %s2149 = scalar_lea.vmem [#allocation4], %s2148
        $region81: #{discriminator_forward.4} parent=76 // pred_fallthru
          _
      $region77: #{discriminator_forward.4} parent=5 // pred_fallthru
        _
    $region6: #{discriminator_forward.4} parent=1 // loop_footer
      %s13 = sadd.s32 1, %s9
    $region7: #{discriminator_forward.4} parent=1 // loop_footer_branch
      %8 = sbr.rel target = $region3
    $region8: #{discriminator_forward.4} parent=1 // loop_exit
      _
    %2150 = vsyncpa [#allocation3], 1
    %s2151 = scalar_lea.sflag [#allocation3], 1
    %2152 = vsyncpa %s2151, 1

// kernel: discriminator_forward.5
$region0: #{discriminator_forward.5}
  #allocation0 [shape = 'u32[]', space=smem, size = 0x4, offset = 0x4, fixed_abs, tag = 'smem constant byte address 0x4 - core index']
  #allocation1 [shape = 'u32[144,128]{1,0:T(1,128)}', space=vmem, size = 0x12000, scoped, tag = 'internal scratch']
  %s0 = inlined_call_operand.vmem [shape: bf16[8,256], index: 0, kind: input, shape index: {}]
  %s1 = inlined_call_operand.vmem [shape: bf16[256,1024], index: 1, kind: input, shape index: {}]
  %s2 = inlined_call_operand.vmem [shape: bf16[8,1024], index: 2, kind: output, shape index: {}]
  %s3 = sld [smem:[#allocation0]]
  $region18: #{discriminator_forward.5} parent=0
    _
  %s5 = ssub.s32 1, %s3
  %s6 = scalar_select 0, %s5, %s3
  // Predicated region
  $region2: #{discriminator_forward.5} parent=0 // pred_check
    _
  $region3: #{discriminator_forward.5} parent=0 // pred_check_branch
    %8 = sbr.rel (0) target = $region5
  $region4: #{discriminator_forward.5} parent=0 // pred_region
    _
  $region5: #{discriminator_forward.5} parent=0 // pred_fallthru
    _
  // Predicated region
  $region6: #{discriminator_forward.5} parent=0 // pred_check
    _
  $region7: #{discriminator_forward.5} parent=0 // pred_check_branch
    %10 = sbr.rel (0) target = $region9
  $region8: #{discriminator_forward.5} parent=0 // pred_region
    _
  $region9: #{discriminator_forward.5} parent=0 // pred_fallthru
    _
  %v11 = vld [vmem:[%s0] sm:$0xff]
  %v12 = vld [vmem:[%s1] sm:$0xff]
  %v13 = vld [vmem:[%s1 + $0x8] sm:$0xff]
  %v14 = vld [vmem:[%s1 + $0x10] sm:$0xff]
  %v15 = vld [vmem:[%s1 + $0x18] sm:$0xff]
  %v16 = vld [vmem:[%s1 + $0x20] sm:$0xff]
  %v17 = vld [vmem:[%s1 + $0x28] sm:$0xff]
  %v18 = vld [vmem:[%s1 + $0x30] sm:$0xff]
  %v19 = vld [vmem:[%s1 + $0x38] sm:$0xff]
  %v20 = vld [vmem:[%s1 + $0x40] sm:$0xff]
  %v21 = vld [vmem:[%s1 + $0x48] sm:$0xff]
  %v22 = vld [vmem:[%s1 + $0x50] sm:$0xff]
  %v23 = vld [vmem:[%s1 + $0x58] sm:$0xff]
  %v24 = vld [vmem:[%s1 + $0x60] sm:$0xff]
  %v25 = vld [vmem:[%s1 + $0x68] sm:$0xff]
  %v26 = vld [vmem:[%s1 + $0x70] sm:$0xff]
  %v27 = vld [vmem:[%s1 + $0x78] sm:$0xff]
  %v28 = vld [vmem:[%s1 + $0x80] sm:$0xff]
  %v29 = vld [vmem:[%s1 + $0x88] sm:$0xff]
  %v30 = vld [vmem:[%s1 + $0x90] sm:$0xff]
  %v31 = vld [vmem:[%s1 + $0x98] sm:$0xff]
  %v32 = vld [vmem:[%s1 + $0xa0] sm:$0xff]
  %v33 = vld [vmem:[%s1 + $0xa8] sm:$0xff]
  %v34 = vld [vmem:[%s1 + $0xb0] sm:$0xff]
  %v35 = vld [vmem:[%s1 + $0xb8] sm:$0xff]
  %v36 = vld [vmem:[%s1 + $0xc0] sm:$0xff]
  %v37 = vld [vmem:[%s1 + $0xc8] sm:$0xff]
  %v38 = vld [vmem:[%s1 + $0xd0] sm:$0xff]
  %v39 = vld [vmem:[%s1 + $0xd8] sm:$0xff]
  %v40 = vld [vmem:[%s1 + $0xe0] sm:$0xff]
  %v41 = vld [vmem:[%s1 + $0xe8] sm:$0xff]
  %v42 = vld [vmem:[%s1 + $0xf0] sm:$0xff]
  %v43 = vld [vmem:[%s1 + $0xf8] sm:$0xff]
  %v44 = vld [vmem:[%s1 + $0x100] sm:$0xff]
  %v45 = vld [vmem:[%s1 + $0x108] sm:$0xff]
  %v46 = vld [vmem:[%s1 + $0x110] sm:$0xff]
  %v47 = vld [vmem:[%s1 + $0x118] sm:$0xff]
  %v48 = vld [vmem:[%s1 + $0x120] sm:$0xff]
  %v49 = vld [vmem:[%s1 + $0x128] sm:$0xff]
  %v50 = vld [vmem:[%s1 + $0x130] sm:$0xff]
  %v51 = vld [vmem:[%s1 + $0x138] sm:$0xff]
  %v52 = vld [vmem:[%s1 + $0x140] sm:$0xff]
  %v53 = vld [vmem:[%s1 + $0x148] sm:$0xff]
  %v54 = vld [vmem:[%s1 + $0x150] sm:$0xff]
  %v55 = vld [vmem:[%s1 + $0x158] sm:$0xff]
  %v56 = vld [vmem:[%s1 + $0x160] sm:$0xff]
  %v57 = vld [vmem:[%s1 + $0x168] sm:$0xff]
  %v58 = vld [vmem:[%s1 + $0x170] sm:$0xff]
  %v59 = vld [vmem:[%s1 + $0x178] sm:$0xff]
  %v60 = vld [vmem:[%s1 + $0x180] sm:$0xff]
  %v61 = vld [vmem:[%s1 + $0x188] sm:$0xff]
  %v62 = vld [vmem:[%s1 + $0x190] sm:$0xff]
  %v63 = vld [vmem:[%s1 + $0x198] sm:$0xff]
  %v64 = vld [vmem:[%s1 + $0x1a0] sm:$0xff]
  %v65 = vld [vmem:[%s1 + $0x1a8] sm:$0xff]
  %v66 = vld [vmem:[%s1 + $0x1b0] sm:$0xff]
  %v67 = vld [vmem:[%s1 + $0x1b8] sm:$0xff]
  %v68 = vld [vmem:[%s1 + $0x1c0] sm:$0xff]
  %v69 = vld [vmem:[%s1 + $0x1c8] sm:$0xff]
  %v70 = vld [vmem:[%s1 + $0x1d0] sm:$0xff]
  %v71 = vld [vmem:[%s1 + $0x1d8] sm:$0xff]
  %v72 = vld [vmem:[%s1 + $0x1e0] sm:$0xff]
  %v73 = vld [vmem:[%s1 + $0x1e8] sm:$0xff]
  %v74 = vld [vmem:[%s1 + $0x1f0] sm:$0xff]
  %v75 = vld [vmem:[%s1 + $0x1f8] sm:$0xff]
  %v76 = vld [vmem:[%s1 + $0x200] sm:$0xff]
  %v77 = vld [vmem:[%s1 + $0x208] sm:$0xff]
  %v78 = vld [vmem:[%s1 + $0x210] sm:$0xff]
  %v79 = vld [vmem:[%s1 + $0x218] sm:$0xff]
  %v80 = vld [vmem:[%s1 + $0x220] sm:$0xff]
  %v81 = vld [vmem:[%s1 + $0x228] sm:$0xff]
  %v82 = vld [vmem:[%s1 + $0x230] sm:$0xff]
  %v83 = vld [vmem:[%s1 + $0x238] sm:$0xff]
  %v84 = vld [vmem:[%s1 + $0x240] sm:$0xff]
  %v85 = vld [vmem:[%s1 + $0x248] sm:$0xff]
  %v86 = vld [vmem:[%s1 + $0x250] sm:$0xff]
  %v87 = vld [vmem:[%s1 + $0x258] sm:$0xff]
  %v88 = vld [vmem:[%s1 + $0x260] sm:$0xff]
  %v89 = vld [vmem:[%s1 + $0x268] sm:$0xff]
  %v90 = vld [vmem:[%s1 + $0x270] sm:$0xff]
  %v91 = vld [vmem:[%s1 + $0x278] sm:$0xff]
  %v92 = vld [vmem:[%s1 + $0x280] sm:$0xff]
  %v93 = vld [vmem:[%s1 + $0x288] sm:$0xff]
  %v94 = vld [vmem:[%s1 + $0x290] sm:$0xff]
  %v95 = vld [vmem:[%s1 + $0x298] sm:$0xff]
  %v96 = vld [vmem:[%s1 + $0x2a0] sm:$0xff]
  %v97 = vld [vmem:[%s1 + $0x2a8] sm:$0xff]
  %v98 = vld [vmem:[%s1 + $0x2b0] sm:$0xff]
  %v99 = vld [vmem:[%s1 + $0x2b8] sm:$0xff]
  %v100 = vld [vmem:[%s1 + $0x2c0] sm:$0xff]
  %v101 = vld [vmem:[%s1 + $0x2c8] sm:$0xff]
  %v102 = vld [vmem:[%s1 + $0x2d0] sm:$0xff]
  %v103 = vld [vmem:[%s1 + $0x2d8] sm:$0xff]
  %v104 = vld [vmem:[%s1 + $0x2e0] sm:$0xff]
  %v105 = vld [vmem:[%s1 + $0x2e8] sm:$0xff]
  %v106 = vld [vmem:[%s1 + $0x2f0] sm:$0xff]
  %v107 = vld [vmem:[%s1 + $0x2f8] sm:$0xff]
  %v108 = vld [vmem:[%s1 + $0x300] sm:$0xff]
  %v109 = vld [vmem:[%s1 + $0x308] sm:$0xff]
  %v110 = vld [vmem:[%s1 + $0x310] sm:$0xff]
  %v111 = vld [vmem:[%s1 + $0x318] sm:$0xff]
  %v112 = vld [vmem:[%s1 + $0x320] sm:$0xff]
  %v113 = vld [vmem:[%s1 + $0x328] sm:$0xff]
  %v114 = vld [vmem:[%s1 + $0x330] sm:$0xff]
  %v115 = vld [vmem:[%s1 + $0x338] sm:$0xff]
  %v116 = vld [vmem:[%s1 + $0x340] sm:$0xff]
  %v117 = vld [vmem:[%s1 + $0x348] sm:$0xff]
  %v118 = vld [vmem:[%s1 + $0x350] sm:$0xff]
  %v119 = vld [vmem:[%s1 + $0x358] sm:$0xff]
  %v120 = vld [vmem:[%s1 + $0x360] sm:$0xff]
  %v121 = vld [vmem:[%s1 + $0x368] sm:$0xff]
  %v122 = vld [vmem:[%s1 + $0x370] sm:$0xff]
  %v123 = vld [vmem:[%s1 + $0x378] sm:$0xff]
  %v124 = vld [vmem:[%s1 + $0x380] sm:$0xff]
  %v125 = vld [vmem:[%s1 + $0x388] sm:$0xff]
  %v126 = vld [vmem:[%s1 + $0x390] sm:$0xff]
  %v127 = vld [vmem:[%s1 + $0x398] sm:$0xff]
  %v128 = vld [vmem:[%s1 + $0x3a0] sm:$0xff]
  %v129 = vld [vmem:[%s1 + $0x3a8] sm:$0xff]
  %v130 = vld [vmem:[%s1 + $0x3b0] sm:$0xff]
  %v131 = vld [vmem:[%s1 + $0x3b8] sm:$0xff]
  %v132 = vld [vmem:[%s1 + $0x3c0] sm:$0xff]
  %v133 = vld [vmem:[%s1 + $0x3c8] sm:$0xff]
  %v134 = vld [vmem:[%s1 + $0x3d0] sm:$0xff]
  %v135 = vld [vmem:[%s1 + $0x3d8] sm:$0xff]
  %v136 = vld [vmem:[%s1 + $0x3e0] sm:$0xff]
  %v137 = vld [vmem:[%s1 + $0x3e8] sm:$0xff]
  %v138 = vld [vmem:[%s1 + $0x3f0] sm:$0xff]
  %v139 = vld [vmem:[%s1 + $0x3f8] sm:$0xff]
  %v141 = vunpack.c.l.b16 %v11
  %v142 = vunpack.c.h.b16 %v11
  %v143 = vpack.c.b16 %v141, %v141
  %v144 = vpack.c.b16 %v142, %v142
  %v275 = vunpack.c.l.b16 %v12
  %v276 = vunpack.c.h.b16 %v12
  %v277 = vunpack.c.l.b16 %v13
  %v278 = vunpack.c.h.b16 %v13
  %v279 = vunpack.c.l.b16 %v14
  %v280 = vunpack.c.h.b16 %v14
  %v281 = vunpack.c.l.b16 %v15
  %v282 = vunpack.c.h.b16 %v15
  %v283 = vunpack.c.l.b16 %v16
  %v284 = vunpack.c.h.b16 %v16
  %v285 = vunpack.c.l.b16 %v17
  %v286 = vunpack.c.h.b16 %v17
  %v287 = vunpack.c.l.b16 %v18
  %v288 = vunpack.c.h.b16 %v18
  %v289 = vunpack.c.l.b16 %v19
  %v290 = vunpack.c.h.b16 %v19
  %v291 = vunpack.c.l.b16 %v20
  %v292 = vunpack.c.h.b16 %v20
  %v293 = vunpack.c.l.b16 %v21
  %v294 = vunpack.c.h.b16 %v21
  %v295 = vunpack.c.l.b16 %v22
  %v296 = vunpack.c.h.b16 %v22
  %v297 = vunpack.c.l.b16 %v23
  %v298 = vunpack.c.h.b16 %v23
  %v299 = vunpack.c.l.b16 %v24
  %v300 = vunpack.c.h.b16 %v24
  %v301 = vunpack.c.l.b16 %v25
  %v302 = vunpack.c.h.b16 %v25
  %v303 = vunpack.c.l.b16 %v26
  %v304 = vunpack.c.h.b16 %v26
  %v305 = vunpack.c.l.b16 %v27
  %v306 = vunpack.c.h.b16 %v27
  %v307 = vunpack.c.l.b16 %v28
  %v308 = vunpack.c.h.b16 %v28
  %v309 = vunpack.c.l.b16 %v29
  %v310 = vunpack.c.h.b16 %v29
  %v311 = vunpack.c.l.b16 %v30
  %v312 = vunpack.c.h.b16 %v30
  %v313 = vunpack.c.l.b16 %v31
  %v314 = vunpack.c.h.b16 %v31
  %v315 = vunpack.c.l.b16 %v32
  %v316 = vunpack.c.h.b16 %v32
  %v317 = vunpack.c.l.b16 %v33
  %v318 = vunpack.c.h.b16 %v33
  %v319 = vunpack.c.l.b16 %v34
  %v320 = vunpack.c.h.b16 %v34
  %v321 = vunpack.c.l.b16 %v35
  %v322 = vunpack.c.h.b16 %v35
  %v323 = vunpack.c.l.b16 %v36
  %v324 = vunpack.c.h.b16 %v36
  %v325 = vunpack.c.l.b16 %v37
  %v326 = vunpack.c.h.b16 %v37
  %v327 = vunpack.c.l.b16 %v38
  %v328 = vunpack.c.h.b16 %v38
  %v329 = vunpack.c.l.b16 %v39
  %v330 = vunpack.c.h.b16 %v39
  %v331 = vunpack.c.l.b16 %v40
  %v332 = vunpack.c.h.b16 %v40
  %v333 = vunpack.c.l.b16 %v41
  %v334 = vunpack.c.h.b16 %v41
  %v335 = vunpack.c.l.b16 %v42
  %v336 = vunpack.c.h.b16 %v42
  %v337 = vunpack.c.l.b16 %v43
  %v338 = vunpack.c.h.b16 %v43
  %v339 = vunpack.c.l.b16 %v44
  %v340 = vunpack.c.h.b16 %v44
  %v341 = vunpack.c.l.b16 %v45
  %v342 = vunpack.c.h.b16 %v45
  %v343 = vunpack.c.l.b16 %v46
  %v344 = vunpack.c.h.b16 %v46
  %v345 = vunpack.c.l.b16 %v47
  %v346 = vunpack.c.h.b16 %v47
  %v347 = vunpack.c.l.b16 %v48
  %v348 = vunpack.c.h.b16 %v48
  %v349 = vunpack.c.l.b16 %v49
  %v350 = vunpack.c.h.b16 %v49
  %v351 = vunpack.c.l.b16 %v50
  %v352 = vunpack.c.h.b16 %v50
  %v353 = vunpack.c.l.b16 %v51
  %v354 = vunpack.c.h.b16 %v51
  %v355 = vunpack.c.l.b16 %v52
  %v356 = vunpack.c.h.b16 %v52
  %v357 = vunpack.c.l.b16 %v53
  %v358 = vunpack.c.h.b16 %v53
  %v359 = vunpack.c.l.b16 %v54
  %v360 = vunpack.c.h.b16 %v54
  %v361 = vunpack.c.l.b16 %v55
  %v362 = vunpack.c.h.b16 %v55
  %v363 = vunpack.c.l.b16 %v56
  %v364 = vunpack.c.h.b16 %v56
  %v365 = vunpack.c.l.b16 %v57
  %v366 = vunpack.c.h.b16 %v57
  %v367 = vunpack.c.l.b16 %v58
  %v368 = vunpack.c.h.b16 %v58
  %v369 = vunpack.c.l.b16 %v59
  %v370 = vunpack.c.h.b16 %v59
  %v371 = vunpack.c.l.b16 %v60
  %v372 = vunpack.c.h.b16 %v60
  %v373 = vunpack.c.l.b16 %v61
  %v374 = vunpack.c.h.b16 %v61
  %v375 = vunpack.c.l.b16 %v62
  %v376 = vunpack.c.h.b16 %v62
  %v377 = vunpack.c.l.b16 %v63
  %v378 = vunpack.c.h.b16 %v63
  %v379 = vunpack.c.l.b16 %v64
  %v380 = vunpack.c.h.b16 %v64
  %v381 = vunpack.c.l.b16 %v65
  %v382 = vunpack.c.h.b16 %v65
  %v383 = vunpack.c.l.b16 %v66
  %v384 = vunpack.c.h.b16 %v66
  %v385 = vunpack.c.l.b16 %v67
  %v386 = vunpack.c.h.b16 %v67
  %v387 = vunpack.c.l.b16 %v68
  %v388 = vunpack.c.h.b16 %v68
  %v389 = vunpack.c.l.b16 %v69
  %v390 = vunpack.c.h.b16 %v69
  %v391 = vunpack.c.l.b16 %v70
  %v392 = vunpack.c.h.b16 %v70
  %v393 = vunpack.c.l.b16 %v71
  %v394 = vunpack.c.h.b16 %v71
  %v395 = vunpack.c.l.b16 %v72
  %v396 = vunpack.c.h.b16 %v72
  %v397 = vunpack.c.l.b16 %v73
  %v398 = vunpack.c.h.b16 %v73
  %v399 = vunpack.c.l.b16 %v74
  %v400 = vunpack.c.h.b16 %v74
  %v401 = vunpack.c.l.b16 %v75
  %v402 = vunpack.c.h.b16 %v75
  %v403 = vunpack.c.l.b16 %v76
  %v404 = vunpack.c.h.b16 %v76
  %v405 = vunpack.c.l.b16 %v77
  %v406 = vunpack.c.h.b16 %v77
  %v407 = vunpack.c.l.b16 %v78
  %v408 = vunpack.c.h.b16 %v78
  %v409 = vunpack.c.l.b16 %v79
  %v410 = vunpack.c.h.b16 %v79
  %v411 = vunpack.c.l.b16 %v80
  %v412 = vunpack.c.h.b16 %v80
  %v413 = vunpack.c.l.b16 %v81
  %v414 = vunpack.c.h.b16 %v81
  %v415 = vunpack.c.l.b16 %v82
  %v416 = vunpack.c.h.b16 %v82
  %v417 = vunpack.c.l.b16 %v83
  %v418 = vunpack.c.h.b16 %v83
  %v419 = vunpack.c.l.b16 %v84
  %v420 = vunpack.c.h.b16 %v84
  %v421 = vunpack.c.l.b16 %v85
  %v422 = vunpack.c.h.b16 %v85
  %v423 = vunpack.c.l.b16 %v86
  %v424 = vunpack.c.h.b16 %v86
  %v425 = vunpack.c.l.b16 %v87
  %v426 = vunpack.c.h.b16 %v87
  %v427 = vunpack.c.l.b16 %v88
  %v428 = vunpack.c.h.b16 %v88
  %v429 = vunpack.c.l.b16 %v89
  %v430 = vunpack.c.h.b16 %v89
  %v431 = vunpack.c.l.b16 %v90
  %v432 = vunpack.c.h.b16 %v90
  %v433 = vunpack.c.l.b16 %v91
  %v434 = vunpack.c.h.b16 %v91
  %v435 = vunpack.c.l.b16 %v92
  %v436 = vunpack.c.h.b16 %v92
  %v437 = vunpack.c.l.b16 %v93
  %v438 = vunpack.c.h.b16 %v93
  %v439 = vunpack.c.l.b16 %v94
  %v440 = vunpack.c.h.b16 %v94
  %v441 = vunpack.c.l.b16 %v95
  %v442 = vunpack.c.h.b16 %v95
  %v443 = vunpack.c.l.b16 %v96
  %v444 = vunpack.c.h.b16 %v96
  %v445 = vunpack.c.l.b16 %v97
  %v446 = vunpack.c.h.b16 %v97
  %v447 = vunpack.c.l.b16 %v98
  %v448 = vunpack.c.h.b16 %v98
  %v449 = vunpack.c.l.b16 %v99
  %v450 = vunpack.c.h.b16 %v99
  %v451 = vunpack.c.l.b16 %v100
  %v452 = vunpack.c.h.b16 %v100
  %v453 = vunpack.c.l.b16 %v101
  %v454 = vunpack.c.h.b16 %v101
  %v455 = vunpack.c.l.b16 %v102
  %v456 = vunpack.c.h.b16 %v102
  %v457 = vunpack.c.l.b16 %v103
  %v458 = vunpack.c.h.b16 %v103
  %v459 = vunpack.c.l.b16 %v104
  %v460 = vunpack.c.h.b16 %v104
  %v461 = vunpack.c.l.b16 %v105
  %v462 = vunpack.c.h.b16 %v105
  %v463 = vunpack.c.l.b16 %v106
  %v464 = vunpack.c.h.b16 %v106
  %v465 = vunpack.c.l.b16 %v107
  %v466 = vunpack.c.h.b16 %v107
  %v467 = vunpack.c.l.b16 %v108
  %v468 = vunpack.c.h.b16 %v108
  %v469 = vunpack.c.l.b16 %v109
  %v470 = vunpack.c.h.b16 %v109
  %v471 = vunpack.c.l.b16 %v110
  %v472 = vunpack.c.h.b16 %v110
  %v473 = vunpack.c.l.b16 %v111
  %v474 = vunpack.c.h.b16 %v111
  %v475 = vunpack.c.l.b16 %v112
  %v476 = vunpack.c.h.b16 %v112
  %v477 = vunpack.c.l.b16 %v113
  %v478 = vunpack.c.h.b16 %v113
  %v479 = vunpack.c.l.b16 %v114
  %v480 = vunpack.c.h.b16 %v114
  %v481 = vunpack.c.l.b16 %v115
  %v482 = vunpack.c.h.b16 %v115
  %v483 = vunpack.c.l.b16 %v116
  %v484 = vunpack.c.h.b16 %v116
  %v485 = vunpack.c.l.b16 %v117
  %v486 = vunpack.c.h.b16 %v117
  %v487 = vunpack.c.l.b16 %v118
  %v488 = vunpack.c.h.b16 %v118
  %v489 = vunpack.c.l.b16 %v119
  %v490 = vunpack.c.h.b16 %v119
  %v491 = vunpack.c.l.b16 %v120
  %v492 = vunpack.c.h.b16 %v120
  %v493 = vunpack.c.l.b16 %v121
  %v494 = vunpack.c.h.b16 %v121
  %v495 = vunpack.c.l.b16 %v122
  %v496 = vunpack.c.h.b16 %v122
  %v497 = vunpack.c.l.b16 %v123
  %v498 = vunpack.c.h.b16 %v123
  %v499 = vunpack.c.l.b16 %v124
  %v500 = vunpack.c.h.b16 %v124
  %v501 = vunpack.c.l.b16 %v125
  %v502 = vunpack.c.h.b16 %v125
  %v503 = vunpack.c.l.b16 %v126
  %v504 = vunpack.c.h.b16 %v126
  %v505 = vunpack.c.l.b16 %v127
  %v506 = vunpack.c.h.b16 %v127
  %v507 = vunpack.c.l.b16 %v128
  %v508 = vunpack.c.h.b16 %v128
  %v509 = vunpack.c.l.b16 %v129
  %v510 = vunpack.c.h.b16 %v129
  %v511 = vunpack.c.l.b16 %v130
  %v512 = vunpack.c.h.b16 %v130
  %v513 = vunpack.c.l.b16 %v131
  %v514 = vunpack.c.h.b16 %v131
  %v515 = vunpack.c.l.b16 %v132
  %v516 = vunpack.c.h.b16 %v132
  %v517 = vunpack.c.l.b16 %v133
  %v518 = vunpack.c.h.b16 %v133
  %v519 = vunpack.c.l.b16 %v134
  %v520 = vunpack.c.h.b16 %v134
  %v521 = vunpack.c.l.b16 %v135
  %v522 = vunpack.c.h.b16 %v135
  %v523 = vunpack.c.l.b16 %v136
  %v524 = vunpack.c.h.b16 %v136
  %v525 = vunpack.c.l.b16 %v137
  %v526 = vunpack.c.h.b16 %v137
  %v527 = vunpack.c.l.b16 %v138
  %v528 = vunpack.c.h.b16 %v138
  %v529 = vunpack.c.l.b16 %v139
  %v530 = vunpack.c.h.b16 %v139
  %v531 = vpack.c.b16 %v283, %v275
  %v532 = vpack.c.b16 %v284, %v276
  %v533 = vpack.c.b16 %v285, %v277
  %v534 = vpack.c.b16 %v286, %v278
  %v535 = vpack.c.b16 %v287, %v279
  %v536 = vpack.c.b16 %v288, %v280
  %v537 = vpack.c.b16 %v289, %v281
  %v538 = vpack.c.b16 %v290, %v282
  %v539 = vpack.c.b16 %v299, %v291
  %v540 = vpack.c.b16 %v300, %v292
  %v541 = vpack.c.b16 %v301, %v293
  %v542 = vpack.c.b16 %v302, %v294
  %v543 = vpack.c.b16 %v303, %v295
  %v544 = vpack.c.b16 %v304, %v296
  %v545 = vpack.c.b16 %v305, %v297
  %v546 = vpack.c.b16 %v306, %v298
  %v547 = vpack.c.b16 %v315, %v307
  %v548 = vpack.c.b16 %v316, %v308
  %v549 = vpack.c.b16 %v317, %v309
  %v550 = vpack.c.b16 %v318, %v310
  %v551 = vpack.c.b16 %v319, %v311
  %v552 = vpack.c.b16 %v320, %v312
  %v553 = vpack.c.b16 %v321, %v313
  %v554 = vpack.c.b16 %v322, %v314
  %v555 = vpack.c.b16 %v331, %v323
  %v556 = vpack.c.b16 %v332, %v324
  %v557 = vpack.c.b16 %v333, %v325
  %v558 = vpack.c.b16 %v334, %v326
  %v559 = vpack.c.b16 %v335, %v327
  %v560 = vpack.c.b16 %v336, %v328
  %v561 = vpack.c.b16 %v337, %v329
  %v562 = vpack.c.b16 %v338, %v330
  %v563 = vpack.c.b16 %v347, %v339
  %v564 = vpack.c.b16 %v348, %v340
  %v565 = vpack.c.b16 %v349, %v341
  %v566 = vpack.c.b16 %v350, %v342
  %v567 = vpack.c.b16 %v351, %v343
  %v568 = vpack.c.b16 %v352, %v344
  %v569 = vpack.c.b16 %v353, %v345
  %v570 = vpack.c.b16 %v354, %v346
  %v571 = vpack.c.b16 %v363, %v355
  %v572 = vpack.c.b16 %v364, %v356
  %v573 = vpack.c.b16 %v365, %v357
  %v574 = vpack.c.b16 %v366, %v358
  %v575 = vpack.c.b16 %v367, %v359
  %v576 = vpack.c.b16 %v368, %v360
  %v577 = vpack.c.b16 %v369, %v361
  %v578 = vpack.c.b16 %v370, %v362
  %v579 = vpack.c.b16 %v379, %v371
  %v580 = vpack.c.b16 %v380, %v372
  %v581 = vpack.c.b16 %v381, %v373
  %v582 = vpack.c.b16 %v382, %v374
  %v583 = vpack.c.b16 %v383, %v375
  %v584 = vpack.c.b16 %v384, %v376
  %v585 = vpack.c.b16 %v385, %v377
  %v586 = vpack.c.b16 %v386, %v378
  %v587 = vpack.c.b16 %v395, %v387
  %v588 = vpack.c.b16 %v396, %v388
  %v589 = vpack.c.b16 %v397, %v389
  %v590 = vpack.c.b16 %v398, %v390
  %v591 = vpack.c.b16 %v399, %v391
  %v592 = vpack.c.b16 %v400, %v392
  %v593 = vpack.c.b16 %v401, %v393
  %v594 = vpack.c.b16 %v402, %v394
  %v595 = vpack.c.b16 %v411, %v403
  %v596 = vpack.c.b16 %v412, %v404
  %v597 = vpack.c.b16 %v413, %v405
  %v598 = vpack.c.b16 %v414, %v406
  %v599 = vpack.c.b16 %v415, %v407
  %v600 = vpack.c.b16 %v416, %v408
  %v601 = vpack.c.b16 %v417, %v409
  %v602 = vpack.c.b16 %v418, %v410
  %v603 = vpack.c.b16 %v427, %v419
  %v604 = vpack.c.b16 %v428, %v420
  %v605 = vpack.c.b16 %v429, %v421
  %v606 = vpack.c.b16 %v430, %v422
  %v607 = vpack.c.b16 %v431, %v423
  %v608 = vpack.c.b16 %v432, %v424
  %v609 = vpack.c.b16 %v433, %v425
  %v610 = vpack.c.b16 %v434, %v426
  %v611 = vpack.c.b16 %v443, %v435
  %v612 = vpack.c.b16 %v444, %v436
  %v613 = vpack.c.b16 %v445, %v437
  %v614 = vpack.c.b16 %v446, %v438
  %v615 = vpack.c.b16 %v447, %v439
  %v616 = vpack.c.b16 %v448, %v440
  %v617 = vpack.c.b16 %v449, %v441
  %v618 = vpack.c.b16 %v450, %v442
  %v619 = vpack.c.b16 %v459, %v451
  %v620 = vpack.c.b16 %v460, %v452
  %v621 = vpack.c.b16 %v461, %v453
  %v622 = vpack.c.b16 %v462, %v454
  %v623 = vpack.c.b16 %v463, %v455
  %v624 = vpack.c.b16 %v464, %v456
  %v625 = vpack.c.b16 %v465, %v457
  %v626 = vpack.c.b16 %v466, %v458
  %v627 = vpack.c.b16 %v475, %v467
  %v628 = vpack.c.b16 %v476, %v468
  %v629 = vpack.c.b16 %v477, %v469
  %v630 = vpack.c.b16 %v478, %v470
  %v631 = vpack.c.b16 %v479, %v471
  %v632 = vpack.c.b16 %v480, %v472
  %v633 = vpack.c.b16 %v481, %v473
  %v634 = vpack.c.b16 %v482, %v474
  %v635 = vpack.c.b16 %v491, %v483
  %v636 = vpack.c.b16 %v492, %v484
  %v637 = vpack.c.b16 %v493, %v485
  %v638 = vpack.c.b16 %v494, %v486
  %v639 = vpack.c.b16 %v495, %v487
  %v640 = vpack.c.b16 %v496, %v488
  %v641 = vpack.c.b16 %v497, %v489
  %v642 = vpack.c.b16 %v498, %v490
  %v643 = vpack.c.b16 %v507, %v499
  %v644 = vpack.c.b16 %v508, %v500
  %v645 = vpack.c.b16 %v509, %v501
  %v646 = vpack.c.b16 %v510, %v502
  %v647 = vpack.c.b16 %v511, %v503
  %v648 = vpack.c.b16 %v512, %v504
  %v649 = vpack.c.b16 %v513, %v505
  %v650 = vpack.c.b16 %v514, %v506
  %v651 = vpack.c.b16 %v523, %v515
  %v652 = vpack.c.b16 %v524, %v516
  %v653 = vpack.c.b16 %v525, %v517
  %v654 = vpack.c.b16 %v526, %v518
  %v655 = vpack.c.b16 %v527, %v519
  %v656 = vpack.c.b16 %v528, %v520
  %v657 = vpack.c.b16 %v529, %v521
  %v658 = vpack.c.b16 %v530, %v522
  %787 = vmatprep.subr.bf16.mxu0 %v588
  %788 = vmatpush1.bf16.msra.mxu0 %v587
  %789 = vmatprep.subr.bf16.mxu0 %v580
  %790 = vmatpush1.bf16.msra.mxu0 %v579
  %791 = vmatprep.subr.bf16.mxu0 %v572
  %792 = vmatpush1.bf16.msra.mxu0 %v571
  %793 = vmatprep.subr.bf16.mxu0 %v564
  %794 = vmatpush1.bf16.msra.mxu0 %v563
  %795 = vmatprep.subr.bf16.mxu0 %v556
  %796 = vmatpush1.bf16.msra.mxu0 %v555
  %797 = vmatprep.subr.bf16.mxu0 %v548
  %798 = vmatpush1.bf16.msra.mxu0 %v547
  %799 = vmatprep.subr.bf16.mxu0 %v540
  %800 = vmatpush1.bf16.msra.mxu0 %v539
  %801 = vmatprep.subr.bf16.mxu0 %v532
  %802 = vmatpush1.bf16.msra.mxu0 %v531
  %803 = vmatprep.subr.bf16.mxu0 %v652
  %804 = vmatpush2.bf16.msra.mxu0 %v651
  %805 = vmatprep.subr.bf16.mxu0 %v644
  %806 = vmatpush2.bf16.msra.mxu0 %v643
  %807 = vmatprep.subr.bf16.mxu0 %v636
  %808 = vmatpush2.bf16.msra.mxu0 %v635
  %809 = vmatprep.subr.bf16.mxu0 %v628
  %810 = vmatpush2.bf16.msra.mxu0 %v627
  %811 = vmatprep.subr.bf16.mxu0 %v620
  %812 = vmatpush2.bf16.msra.mxu0 %v619
  %813 = vmatprep.subr.bf16.mxu0 %v612
  %814 = vmatpush2.bf16.msra.mxu0 %v611
  %815 = vmatprep.subr.bf16.mxu0 %v604
  %816 = vmatpush2.bf16.msra.mxu0 %v603
  %817 = vmatprep.subr.bf16.mxu0 %v596
  %818 = vmatpush2.bf16.msra.mxu0 %v595
  %819 = vmatprep.mubr.bf16.mxu0 %v144
  %820 = vmatmul.mubr.bf16.gmra.mxu0 %v143
  %v821 = vpop.f32.mrf.mxu0
  %v822 = vadd.f32 0.0, %v821
  %v823 = vpop.f32.mrf.mxu0
  %v824 = vadd.f32 0.0, %v823
  %v825 = vpop.f32.mrf.mxu0
  %v826 = vpop.f32.mrf.mxu0
  %827 = vdwg.mxu0
  %828 = vmatprep.subr.bf16.mxu0 %v590
  %829 = vmatpush1.bf16.msra.mxu0 %v589
  %830 = vmatprep.subr.bf16.mxu0 %v582
  %831 = vmatpush1.bf16.msra.mxu0 %v581
  %832 = vmatprep.subr.bf16.mxu0 %v574
  %833 = vmatpush1.bf16.msra.mxu0 %v573
  %834 = vmatprep.subr.bf16.mxu0 %v566
  %835 = vmatpush1.bf16.msra.mxu0 %v565
  %836 = vmatprep.subr.bf16.mxu0 %v558
  %837 = vmatpush1.bf16.msra.mxu0 %v557
  %838 = vmatprep.subr.bf16.mxu0 %v550
  %839 = vmatpush1.bf16.msra.mxu0 %v549
  %840 = vmatprep.subr.bf16.mxu0 %v542
  %841 = vmatpush1.bf16.msra.mxu0 %v541
  %842 = vmatprep.subr.bf16.mxu0 %v534
  %843 = vmatpush1.bf16.msra.mxu0 %v533
  %844 = vmatprep.subr.bf16.mxu0 %v654
  %845 = vmatpush2.bf16.msra.mxu0 %v653
  %846 = vmatprep.subr.bf16.mxu0 %v646
  %847 = vmatpush2.bf16.msra.mxu0 %v645
  %848 = vmatprep.subr.bf16.mxu0 %v638
  %849 = vmatpush2.bf16.msra.mxu0 %v637
  %850 = vmatprep.subr.bf16.mxu0 %v630
  %851 = vmatpush2.bf16.msra.mxu0 %v629
  %852 = vmatprep.subr.bf16.mxu0 %v622
  %853 = vmatpush2.bf16.msra.mxu0 %v621
  %854 = vmatprep.subr.bf16.mxu0 %v614
  %855 = vmatpush2.bf16.msra.mxu0 %v613
  %856 = vmatprep.subr.bf16.mxu0 %v606
  %857 = vmatpush2.bf16.msra.mxu0 %v605
  %858 = vmatprep.subr.bf16.mxu0 %v598
  %859 = vmatpush2.bf16.msra.mxu0 %v597
  %860 = vmatprep.mubr.bf16.mxu0 %v144
  %861 = vmatmul.mubr.bf16.gmra.mxu0 %v143
  %v862 = vpop.f32.mrf.mxu0
  %v863 = vadd.f32 0.0, %v862
  %v864 = vpop.f32.mrf.mxu0
  %v865 = vadd.f32 0.0, %v864
  %v866 = vpop.f32.mrf.mxu0
  %v867 = vpop.f32.mrf.mxu0
  %868 = vdwg.mxu0
  %869 = vmatprep.subr.bf16.mxu0 %v592
  %870 = vmatpush1.bf16.msra.mxu0 %v591
  %871 = vmatprep.subr.bf16.mxu0 %v584
  %872 = vmatpush1.bf16.msra.mxu0 %v583
  %873 = vmatprep.subr.bf16.mxu0 %v576
  %874 = vmatpush1.bf16.msra.mxu0 %v575
  %875 = vmatprep.subr.bf16.mxu0 %v568
  %876 = vmatpush1.bf16.msra.mxu0 %v567
  %877 = vmatprep.subr.bf16.mxu0 %v560
  %878 = vmatpush1.bf16.msra.mxu0 %v559
  %879 = vmatprep.subr.bf16.mxu0 %v552
  %880 = vmatpush1.bf16.msra.mxu0 %v551
  %881 = vmatprep.subr.bf16.mxu0 %v544
  %882 = vmatpush1.bf16.msra.mxu0 %v543
  %883 = vmatprep.subr.bf16.mxu0 %v536
  %884 = vmatpush1.bf16.msra.mxu0 %v535
  %885 = vmatprep.subr.bf16.mxu0 %v656
  %886 = vmatpush2.bf16.msra.mxu0 %v655
  %887 = vmatprep.subr.bf16.mxu0 %v648
  %888 = vmatpush2.bf16.msra.mxu0 %v647
  %889 = vmatprep.subr.bf16.mxu0 %v640
  %890 = vmatpush2.bf16.msra.mxu0 %v639
  %891 = vmatprep.subr.bf16.mxu0 %v632
  %892 = vmatpush2.bf16.msra.mxu0 %v631
  %893 = vmatprep.subr.bf16.mxu0 %v624
  %894 = vmatpush2.bf16.msra.mxu0 %v623
  %895 = vmatprep.subr.bf16.mxu0 %v616
  %896 = vmatpush2.bf16.msra.mxu0 %v615
  %897 = vmatprep.subr.bf16.mxu0 %v608
  %898 = vmatpush2.bf16.msra.mxu0 %v607
  %899 = vmatprep.subr.bf16.mxu0 %v600
  %900 = vmatpush2.bf16.msra.mxu0 %v599
  %901 = vmatprep.mubr.bf16.mxu0 %v144
  %902 = vmatmul.mubr.bf16.gmra.mxu0 %v143
  %v903 = vpop.f32.mrf.mxu0
  %v904 = vadd.f32 0.0, %v903
  %v905 = vpop.f32.mrf.mxu0
  %v906 = vadd.f32 0.0, %v905
  %v907 = vpop.f32.mrf.mxu0
  %v908 = vpop.f32.mrf.mxu0
  %909 = vdwg.mxu0
  %910 = vmatprep.subr.bf16.mxu0 %v594
  %911 = vmatpush1.bf16.msra.mxu0 %v593
  %912 = vmatprep.subr.bf16.mxu0 %v586
  %913 = vmatpush1.bf16.msra.mxu0 %v585
  %914 = vmatprep.subr.bf16.mxu0 %v578
  %915 = vmatpush1.bf16.msra.mxu0 %v577
  %916 = vmatprep.subr.bf16.mxu0 %v570
  %917 = vmatpush1.bf16.msra.mxu0 %v569
  %918 = vmatprep.subr.bf16.mxu0 %v562
  %919 = vmatpush1.bf16.msra.mxu0 %v561
  %920 = vmatprep.subr.bf16.mxu0 %v554
  %921 = vmatpush1.bf16.msra.mxu0 %v553
  %922 = vmatprep.subr.bf16.mxu0 %v546
  %923 = vmatpush1.bf16.msra.mxu0 %v545
  %924 = vmatprep.subr.bf16.mxu0 %v538
  %925 = vmatpush1.bf16.msra.mxu0 %v537
  %926 = vmatprep.subr.bf16.mxu0 %v658
  %927 = vmatpush2.bf16.msra.mxu0 %v657
  %928 = vmatprep.subr.bf16.mxu0 %v650
  %929 = vmatpush2.bf16.msra.mxu0 %v649
  %930 = vmatprep.subr.bf16.mxu0 %v642
  %931 = vmatpush2.bf16.msra.mxu0 %v641
  %932 = vmatprep.subr.bf16.mxu0 %v634
  %933 = vmatpush2.bf16.msra.mxu0 %v633
  %934 = vmatprep.subr.bf16.mxu0 %v626
  %935 = vmatpush2.bf16.msra.mxu0 %v625
  %936 = vmatprep.subr.bf16.mxu0 %v618
  %937 = vmatpush2.bf16.msra.mxu0 %v617
  %938 = vmatprep.subr.bf16.mxu0 %v610
  %939 = vmatpush2.bf16.msra.mxu0 %v609
  %940 = vmatprep.subr.bf16.mxu0 %v602
  %941 = vmatpush2.bf16.msra.mxu0 %v601
  %942 = vmatprep.mubr.bf16.mxu0 %v144
  %943 = vmatmul.mubr.bf16.gmra.mxu0 %v143
  %v944 = vpop.f32.mrf.mxu0
  %v945 = vadd.f32 0.0, %v944
  %v946 = vpop.f32.mrf.mxu0
  %v947 = vadd.f32 0.0, %v946
  %v948 = vpop.f32.mrf.mxu0
  %v949 = vpop.f32.mrf.mxu0
  %950 = vdwg.mxu0
  %v951 = vmul.f32 %v822, 0.2
  %v952 = vmul.f32 %v824, 0.2
  %v953 = vmul.f32 %v863, 0.2
  %v954 = vmul.f32 %v865, 0.2
  %v955 = vmul.f32 %v904, 0.2
  %v956 = vmul.f32 %v906, 0.2
  %v957 = vmul.f32 %v945, 0.2
  %v958 = vmul.f32 %v947, 0.2
  %v959 = vmax.f32 %v822, %v951
  %v960 = vmax.f32 %v824, %v952
  %v961 = vmax.f32 %v863, %v953
  %v962 = vmax.f32 %v865, %v954
  %v963 = vmax.f32 %v904, %v955
  %v964 = vmax.f32 %v906, %v956
  %v965 = vmax.f32 %v945, %v957
  %v966 = vmax.f32 %v947, %v958
  %v967 = vpack.c.bf16 %v959, %v959
  %v968 = vpack.c.bf16 %v960, %v960
  %v969 = vpack.c.bf16 %v961, %v961
  %v970 = vpack.c.bf16 %v962, %v962
  %v971 = vpack.c.bf16 %v963, %v963
  %v972 = vpack.c.bf16 %v964, %v964
  %v973 = vpack.c.bf16 %v965, %v965
  %v974 = vpack.c.bf16 %v966, %v966
  %v983 = vunpack.c.l.b16 %v967
  %v984 = vunpack.c.l.b16 %v968
  %v985 = vunpack.c.l.b16 %v969
  %v986 = vunpack.c.l.b16 %v970
  %v987 = vunpack.c.l.b16 %v971
  %v988 = vunpack.c.l.b16 %v972
  %v989 = vunpack.c.l.b16 %v973
  %v990 = vunpack.c.l.b16 %v974
  %v991 = vpack.c.b16 %v984, %v983
  %v992 = vpack.c.b16 %v986, %v985
  %v993 = vpack.c.b16 %v988, %v987
  %v994 = vpack.c.b16 %v990, %v989
  %999 = vst [vmem:[%s2] sm:$0xff] %v991
  %1000 = vst [vmem:[%s2 + $0x8] sm:$0xff] %v992
  %1001 = vst [vmem:[%s2 + $0x10] sm:$0xff] %v993
  %1002 = vst [vmem:[%s2 + $0x18] sm:$0xff] %v994
  // Predicated region
  $region10: #{discriminator_forward.5} parent=0 // pred_check
    _
  $region11: #{discriminator_forward.5} parent=0 // pred_check_branch
    %1004 = sbr.rel (0) target = $region13
  $region12: #{discriminator_forward.5} parent=0 // pred_region
    _
  $region13: #{discriminator_forward.5} parent=0 // pred_fallthru
    _
  // Predicated region
  $region14: #{discriminator_forward.5} parent=0 // pred_check
    _
  $region15: #{discriminator_forward.5} parent=0 // pred_check_branch
    %1006 = sbr.rel (0) target = $region17
  $region16: #{discriminator_forward.5} parent=0 // pred_region
    _
  $region17: #{discriminator_forward.5} parent=0 // pred_fallthru
    _

// kernel: discriminator_forward.6
$region0: #{discriminator_forward.6}
  #allocation0 [shape = 'u32[]', space=smem, size = 0x4, offset = 0x4, fixed_abs, tag = 'smem constant byte address 0x4 - core index']
  #allocation1 [shape = 'u32[144,128]{1,0:T(1,128)}', space=vmem, size = 0x12000, scoped, tag = 'internal scratch']
  %s0 = inlined_call_operand.vmem [shape: bf16[16,512], index: 0, kind: input, shape index: {}]
  %s1 = inlined_call_operand.vmem [shape: bf16[512,128], index: 1, kind: input, shape index: {}]
  %s2 = inlined_call_operand.vmem [shape: bf16[16,128], index: 2, kind: output, shape index: {}]
  %s3 = sld [smem:[#allocation0]]
  $region18: #{discriminator_forward.6} parent=0
    _
  %s5 = ssub.s32 1, %s3
  %s6 = scalar_select 0, %s5, %s3
  // Predicated region
  $region2: #{discriminator_forward.6} parent=0 // pred_check
    _
  $region3: #{discriminator_forward.6} parent=0 // pred_check_branch
    %8 = sbr.rel (0) target = $region5
  $region4: #{discriminator_forward.6} parent=0 // pred_region
    _
  $region5: #{discriminator_forward.6} parent=0 // pred_fallthru
    _
  // Predicated region
  $region6: #{discriminator_forward.6} parent=0 // pred_check
    _
  $region7: #{discriminator_forward.6} parent=0 // pred_check_branch
    %10 = sbr.rel (0) target = $region9
  $region8: #{discriminator_forward.6} parent=0 // pred_region
    _
  $region9: #{discriminator_forward.6} parent=0 // pred_fallthru
    _
  %v12 = vld [vmem:[%s0] sm:$0xff]
  %v13 = vld [vmem:[%s0 + $0x8] sm:$0xff]
  %v14 = vld [vmem:[%s0 + $0x10] sm:$0xff]
  %v15 = vld [vmem:[%s0 + $0x18] sm:$0xff]
  %v16 = vld [vmem:[%s1] sm:$0xf]
  %v17 = vld [vmem:[%s1 + $0x4] sm:$0xf]
  %v18 = vld [vmem:[%s1 + $0x8] sm:$0xf]
  %v19 = vld [vmem:[%s1 + $0xc] sm:$0xf]
  %v20 = vld [vmem:[%s1 + $0x10] sm:$0xf]
  %v21 = vld [vmem:[%s1 + $0x14] sm:$0xf]
  %v22 = vld [vmem:[%s1 + $0x18] sm:$0xf]
  %v23 = vld [vmem:[%s1 + $0x1c] sm:$0xf]
  %v24 = vld [vmem:[%s1 + $0x20] sm:$0xf]
  %v25 = vld [vmem:[%s1 + $0x24] sm:$0xf]
  %v26 = vld [vmem:[%s1 + $0x28] sm:$0xf]
  %v27 = vld [vmem:[%s1 + $0x2c] sm:$0xf]
  %v28 = vld [vmem:[%s1 + $0x30] sm:$0xf]
  %v29 = vld [vmem:[%s1 + $0x34] sm:$0xf]
  %v30 = vld [vmem:[%s1 + $0x38] sm:$0xf]
  %v31 = vld [vmem:[%s1 + $0x3c] sm:$0xf]
  %v32 = vld [vmem:[%s1 + $0x40] sm:$0xf]
  %v33 = vld [vmem:[%s1 + $0x44] sm:$0xf]
  %v34 = vld [vmem:[%s1 + $0x48] sm:$0xf]
  %v35 = vld [vmem:[%s1 + $0x4c] sm:$0xf]
  %v36 = vld [vmem:[%s1 + $0x50] sm:$0xf]
  %v37 = vld [vmem:[%s1 + $0x54] sm:$0xf]
  %v38 = vld [vmem:[%s1 + $0x58] sm:$0xf]
  %v39 = vld [vmem:[%s1 + $0x5c] sm:$0xf]
  %v40 = vld [vmem:[%s1 + $0x60] sm:$0xf]
  %v41 = vld [vmem:[%s1 + $0x64] sm:$0xf]
  %v42 = vld [vmem:[%s1 + $0x68] sm:$0xf]
  %v43 = vld [vmem:[%s1 + $0x6c] sm:$0xf]
  %v44 = vld [vmem:[%s1 + $0x70] sm:$0xf]
  %v45 = vld [vmem:[%s1 + $0x74] sm:$0xf]
  %v46 = vld [vmem:[%s1 + $0x78] sm:$0xf]
  %v47 = vld [vmem:[%s1 + $0x7c] sm:$0xf]
  %v48 = vld [vmem:[%s1 + $0x80] sm:$0xf]
  %v49 = vld [vmem:[%s1 + $0x84] sm:$0xf]
  %v50 = vld [vmem:[%s1 + $0x88] sm:$0xf]
  %v51 = vld [vmem:[%s1 + $0x8c] sm:$0xf]
  %v52 = vld [vmem:[%s1 + $0x90] sm:$0xf]
  %v53 = vld [vmem:[%s1 + $0x94] sm:$0xf]
  %v54 = vld [vmem:[%s1 + $0x98] sm:$0xf]
  %v55 = vld [vmem:[%s1 + $0x9c] sm:$0xf]
  %v56 = vld [vmem:[%s1 + $0xa0] sm:$0xf]
  %v57 = vld [vmem:[%s1 + $0xa4] sm:$0xf]
  %v58 = vld [vmem:[%s1 + $0xa8] sm:$0xf]
  %v59 = vld [vmem:[%s1 + $0xac] sm:$0xf]
  %v60 = vld [vmem:[%s1 + $0xb0] sm:$0xf]
  %v61 = vld [vmem:[%s1 + $0xb4] sm:$0xf]
  %v62 = vld [vmem:[%s1 + $0xb8] sm:$0xf]
  %v63 = vld [vmem:[%s1 + $0xbc] sm:$0xf]
  %v64 = vld [vmem:[%s1 + $0xc0] sm:$0xf]
  %v65 = vld [vmem:[%s1 + $0xc4] sm:$0xf]
  %v66 = vld [vmem:[%s1 + $0xc8] sm:$0xf]
  %v67 = vld [vmem:[%s1 + $0xcc] sm:$0xf]
  %v68 = vld [vmem:[%s1 + $0xd0] sm:$0xf]
  %v69 = vld [vmem:[%s1 + $0xd4] sm:$0xf]
  %v70 = vld [vmem:[%s1 + $0xd8] sm:$0xf]
  %v71 = vld [vmem:[%s1 + $0xdc] sm:$0xf]
  %v72 = vld [vmem:[%s1 + $0xe0] sm:$0xf]
  %v73 = vld [vmem:[%s1 + $0xe4] sm:$0xf]
  %v74 = vld [vmem:[%s1 + $0xe8] sm:$0xf]
  %v75 = vld [vmem:[%s1 + $0xec] sm:$0xf]
  %v76 = vld [vmem:[%s1 + $0xf0] sm:$0xf]
  %v77 = vld [vmem:[%s1 + $0xf4] sm:$0xf]
  %v78 = vld [vmem:[%s1 + $0xf8] sm:$0xf]
  %v79 = vld [vmem:[%s1 + $0xfc] sm:$0xf]
  %v84 = vunpack.c.l.b16 %v12
  %v85 = vunpack.c.h.b16 %v12
  %v86 = vunpack.c.l.b16 %v13
  %v87 = vunpack.c.h.b16 %v13
  %v88 = vunpack.c.l.b16 %v14
  %v89 = vunpack.c.h.b16 %v14
  %v90 = vunpack.c.l.b16 %v15
  %v91 = vunpack.c.h.b16 %v15
  %v92 = vpack.c.b16 %v88, %v84
  %v93 = vpack.c.b16 %v89, %v85
  %v94 = vpack.c.b16 %v90, %v86
  %v95 = vpack.c.b16 %v91, %v87
  %v164 = vunpack.c.l.b16 %v16
  %v165 = vunpack.c.l.b16 %v17
  %v166 = vunpack.c.l.b16 %v18
  %v167 = vunpack.c.l.b16 %v19
  %v168 = vunpack.c.l.b16 %v20
  %v169 = vunpack.c.l.b16 %v21
  %v170 = vunpack.c.l.b16 %v22
  %v171 = vunpack.c.l.b16 %v23
  %v172 = vunpack.c.l.b16 %v24
  %v173 = vunpack.c.l.b16 %v25
  %v174 = vunpack.c.l.b16 %v26
  %v175 = vunpack.c.l.b16 %v27
  %v176 = vunpack.c.l.b16 %v28
  %v177 = vunpack.c.l.b16 %v29
  %v178 = vunpack.c.l.b16 %v30
  %v179 = vunpack.c.l.b16 %v31
  %v180 = vunpack.c.l.b16 %v32
  %v181 = vunpack.c.l.b16 %v33
  %v182 = vunpack.c.l.b16 %v34
  %v183 = vunpack.c.l.b16 %v35
  %v184 = vunpack.c.l.b16 %v36
  %v185 = vunpack.c.l.b16 %v37
  %v186 = vunpack.c.l.b16 %v38
  %v187 = vunpack.c.l.b16 %v39
  %v188 = vunpack.c.l.b16 %v40
  %v189 = vunpack.c.l.b16 %v41
  %v190 = vunpack.c.l.b16 %v42
  %v191 = vunpack.c.l.b16 %v43
  %v192 = vunpack.c.l.b16 %v44
  %v193 = vunpack.c.l.b16 %v45
  %v194 = vunpack.c.l.b16 %v46
  %v195 = vunpack.c.l.b16 %v47
  %v196 = vunpack.c.l.b16 %v48
  %v197 = vunpack.c.l.b16 %v49
  %v198 = vunpack.c.l.b16 %v50
  %v199 = vunpack.c.l.b16 %v51
  %v200 = vunpack.c.l.b16 %v52
  %v201 = vunpack.c.l.b16 %v53
  %v202 = vunpack.c.l.b16 %v54
  %v203 = vunpack.c.l.b16 %v55
  %v204 = vunpack.c.l.b16 %v56
  %v205 = vunpack.c.l.b16 %v57
  %v206 = vunpack.c.l.b16 %v58
  %v207 = vunpack.c.l.b16 %v59
  %v208 = vunpack.c.l.b16 %v60
  %v209 = vunpack.c.l.b16 %v61
  %v210 = vunpack.c.l.b16 %v62
  %v211 = vunpack.c.l.b16 %v63
  %v212 = vunpack.c.l.b16 %v64
  %v213 = vunpack.c.l.b16 %v65
  %v214 = vunpack.c.l.b16 %v66
  %v215 = vunpack.c.l.b16 %v67
  %v216 = vunpack.c.l.b16 %v68
  %v217 = vunpack.c.l.b16 %v69
  %v218 = vunpack.c.l.b16 %v70
  %v219 = vunpack.c.l.b16 %v71
  %v220 = vunpack.c.l.b16 %v72
  %v221 = vunpack.c.l.b16 %v73
  %v222 = vunpack.c.l.b16 %v74
  %v223 = vunpack.c.l.b16 %v75
  %v224 = vunpack.c.l.b16 %v76
  %v225 = vunpack.c.l.b16 %v77
  %v226 = vunpack.c.l.b16 %v78
  %v227 = vunpack.c.l.b16 %v79
  %v228 = vpack.c.b16 %v165, %v164
  %v229 = vpack.c.b16 %v167, %v166
  %v230 = vpack.c.b16 %v169, %v168
  %v231 = vpack.c.b16 %v171, %v170
  %v232 = vpack.c.b16 %v173, %v172
  %v233 = vpack.c.b16 %v175, %v174
  %v234 = vpack.c.b16 %v177, %v176
  %v235 = vpack.c.b16 %v179, %v178
  %v236 = vpack.c.b16 %v181, %v180
  %v237 = vpack.c.b16 %v183, %v182
  %v238 = vpack.c.b16 %v185, %v184
  %v239 = vpack.c.b16 %v187, %v186
  %v240 = vpack.c.b16 %v189, %v188
  %v241 = vpack.c.b16 %v191, %v190
  %v242 = vpack.c.b16 %v193, %v192
  %v243 = vpack.c.b16 %v195, %v194
  %v244 = vpack.c.b16 %v197, %v196
  %v245 = vpack.c.b16 %v199, %v198
  %v246 = vpack.c.b16 %v201, %v200
  %v247 = vpack.c.b16 %v203, %v202
  %v248 = vpack.c.b16 %v205, %v204
  %v249 = vpack.c.b16 %v207, %v206
  %v250 = vpack.c.b16 %v209, %v208
  %v251 = vpack.c.b16 %v211, %v210
  %v252 = vpack.c.b16 %v213, %v212
  %v253 = vpack.c.b16 %v215, %v214
  %v254 = vpack.c.b16 %v217, %v216
  %v255 = vpack.c.b16 %v219, %v218
  %v256 = vpack.c.b16 %v221, %v220
  %v257 = vpack.c.b16 %v223, %v222
  %v258 = vpack.c.b16 %v225, %v224
  %v259 = vpack.c.b16 %v227, %v226
  %292 = vmatprep.subr.bf16.mxu0 0
  %293 = vmatpush1.bf16.msra.mxu0 %v235
  %294 = vmatprep.subr.bf16.mxu0 0
  %295 = vmatpush1.bf16.msra.mxu0 %v234
  %296 = vmatprep.subr.bf16.mxu0 0
  %297 = vmatpush1.bf16.msra.mxu0 %v233
  %298 = vmatprep.subr.bf16.mxu0 0
  %299 = vmatpush1.bf16.msra.mxu0 %v232
  %300 = vmatprep.subr.bf16.mxu0 0
  %301 = vmatpush1.bf16.msra.mxu0 %v231
  %302 = vmatprep.subr.bf16.mxu0 0
  %303 = vmatpush1.bf16.msra.mxu0 %v230
  %304 = vmatprep.subr.bf16.mxu0 0
  %305 = vmatpush1.bf16.msra.mxu0 %v229
  %306 = vmatprep.subr.bf16.mxu0 0
  %307 = vmatpush1.bf16.msra.mxu0 %v228
  %308 = vmatprep.subr.bf16.mxu0 0
  %309 = vmatpush2.bf16.msra.mxu0 %v243
  %310 = vmatprep.subr.bf16.mxu0 0
  %311 = vmatpush2.bf16.msra.mxu0 %v242
  %312 = vmatprep.subr.bf16.mxu0 0
  %313 = vmatpush2.bf16.msra.mxu0 %v241
  %314 = vmatprep.subr.bf16.mxu0 0
  %315 = vmatpush2.bf16.msra.mxu0 %v240
  %316 = vmatprep.subr.bf16.mxu0 0
  %317 = vmatpush2.bf16.msra.mxu0 %v239
  %318 = vmatprep.subr.bf16.mxu0 0
  %319 = vmatpush2.bf16.msra.mxu0 %v238
  %320 = vmatprep.subr.bf16.mxu0 0
  %321 = vmatpush2.bf16.msra.mxu0 %v237
  %322 = vmatprep.subr.bf16.mxu0 0
  %323 = vmatpush2.bf16.msra.mxu0 %v236
  %324 = vmatprep.mubr.bf16.mxu0 %v93
  %325 = vmatmul.mubr.bf16.gmra.mxu0 %v92
  %v326 = vpop.f32.mrf.mxu0
  %v327 = vadd.f32 0.0, %v326
  %v328 = vpop.f32.mrf.mxu0
  %v329 = vpop.f32.mrf.mxu0
  %v330 = vadd.f32 0.0, %v329
  %v331 = vpop.f32.mrf.mxu0
  %332 = vdwg.mxu0
  %333 = vmatprep.subr.bf16.mxu0 0
  %334 = vmatpush1.bf16.msra.mxu0 %v251
  %335 = vmatprep.subr.bf16.mxu0 0
  %336 = vmatpush1.bf16.msra.mxu0 %v250
  %337 = vmatprep.subr.bf16.mxu0 0
  %338 = vmatpush1.bf16.msra.mxu0 %v249
  %339 = vmatprep.subr.bf16.mxu0 0
  %340 = vmatpush1.bf16.msra.mxu0 %v248
  %341 = vmatprep.subr.bf16.mxu0 0
  %342 = vmatpush1.bf16.msra.mxu0 %v247
  %343 = vmatprep.subr.bf16.mxu0 0
  %344 = vmatpush1.bf16.msra.mxu0 %v246
  %345 = vmatprep.subr.bf16.mxu0 0
  %346 = vmatpush1.bf16.msra.mxu0 %v245
  %347 = vmatprep.subr.bf16.mxu0 0
  %348 = vmatpush1.bf16.msra.mxu0 %v244
  %349 = vmatprep.subr.bf16.mxu0 0
  %350 = vmatpush2.bf16.msra.mxu0 %v259
  %351 = vmatprep.subr.bf16.mxu0 0
  %352 = vmatpush2.bf16.msra.mxu0 %v258
  %353 = vmatprep.subr.bf16.mxu0 0
  %354 = vmatpush2.bf16.msra.mxu0 %v257
  %355 = vmatprep.subr.bf16.mxu0 0
  %356 = vmatpush2.bf16.msra.mxu0 %v256
  %357 = vmatprep.subr.bf16.mxu0 0
  %358 = vmatpush2.bf16.msra.mxu0 %v255
  %359 = vmatprep.subr.bf16.mxu0 0
  %360 = vmatpush2.bf16.msra.mxu0 %v254
  %361 = vmatprep.subr.bf16.mxu0 0
  %362 = vmatpush2.bf16.msra.mxu0 %v253
  %363 = vmatprep.subr.bf16.mxu0 0
  %364 = vmatpush2.bf16.msra.mxu0 %v252
  %365 = vmatprep.mubr.bf16.mxu0 %v95
  %366 = vmatmul.mubr.bf16.gmra.mxu0 %v94
  %v367 = vpop.f32.mrf.mxu0
  %v368 = vadd.f32 %v327, %v367
  %v369 = vpop.f32.mrf.mxu0
  %v370 = vpop.f32.mrf.mxu0
  %v371 = vadd.f32 %v330, %v370
  %v372 = vpop.f32.mrf.mxu0
  %373 = vdwg.mxu0
  %v374 = vmul.f32 %v368, 0.2
  %v375 = vmul.f32 %v371, 0.2
  %v376 = vmax.f32 %v368, %v374
  %v377 = vmax.f32 %v371, %v375
  %v378 = vpack.c.bf16 %v377, %v376
  %v380 = vunpack.c.l.b16 %v378
  %v381 = vunpack.c.h.b16 %v378
  %v382 = vpack.c.b16 %v380, %v380
  %v383 = vpack.c.b16 %v381, %v381
  %386 = vst [vmem:[%s2] sm:$0xf] %v382
  %387 = vst [vmem:[%s2 + $0x4] sm:$0xf] %v383
  // Predicated region
  $region10: #{discriminator_forward.6} parent=0 // pred_check
    _
  $region11: #{discriminator_forward.6} parent=0 // pred_check_branch
    %389 = sbr.rel (0) target = $region13
  $region12: #{discriminator_forward.6} parent=0 // pred_region
    _
  $region13: #{discriminator_forward.6} parent=0 // pred_fallthru
    _
  // Predicated region
  $region14: #{discriminator_forward.6} parent=0 // pred_check
    _
  $region15: #{discriminator_forward.6} parent=0 // pred_check_branch
    %391 = sbr.rel (0) target = $region17
  $region16: #{discriminator_forward.6} parent=0 // pred_region
    _
  $region17: #{discriminator_forward.6} parent=0 // pred_fallthru
    _

// kernel: discriminator_forward.7
$region0: #{discriminator_forward.7}
  #allocation0 [shape = 'u32[]', space=smem, size = 0x4, offset = 0x4, fixed_abs, tag = 'smem constant byte address 0x4 - core index']
  #allocation1 [shape = 'u32[144,128]{1,0:T(1,128)}', space=vmem, size = 0x12000, scoped, tag = 'internal scratch']
  %s0 = inlined_call_operand.vmem [shape: bf16[32,1024], index: 0, kind: input, shape index: {}]
  %s1 = inlined_call_operand.vmem [shape: bf16[2,1024,8], index: 1, kind: input, shape index: {}]
  %s2 = inlined_call_operand.vmem [shape: f32[2,1,32], index: 2, kind: input, shape index: {}]
  %s3 = inlined_call_operand.vmem [shape: f32[2,1,8], index: 3, kind: output, shape index: {}]
  %s4 = sld [smem:[#allocation0]]
  $region45: #{discriminator_forward.7} parent=0
    _
  %s6 = ssub.s32 1, %s4
  %s7 = scalar_select 0, %s6, %s4
  loop: start=0, step=1, limit=4
  $region2: #{discriminator_forward.7} parent=0 // loop_pre_header
    _
  $region3: #{discriminator_forward.7} parent=0 // loop_header
    %s9 = sphi 0, %s13
    %p10 = scmp.ge.s32.totalorder %s9, 4
    %s16 = sphi 0, %s28
    %s17 = sphi 0, %s24
    %s18 = sphi 0, %s16
    %s19 = sphi 0, %s17
    %s20 = sphi 0, %s18
    %s21 = sphi 0, %s19
    %s29 = sphi 0, %s29
    %s31 = sphi 0, %s29
    %s32 = sphi 0, %s31
    %s46 = sphi 0, %s32
    %s54 = sphi 0, %s56
    %s57 = sphi 0, %s54
    %s58 = sphi 0, %s57
    %s74 = sphi 0, %s58
    %s80 = sphi 0, %s82
    %s83 = sphi 0, %s80
    %s84 = sphi 0, %s83
    %s100 = sphi 0, %s84
    %s108 = sphi 0, %s110
    %s111 = sphi 0, %s108
    %s112 = sphi 0, %s111
    %s128 = sphi 0, %s112
  $region4: #{discriminator_forward.7} parent=0 // loop_header_branch
    %12 = sbr.rel (%p10) target = $region8
  $region5: #{discriminator_forward.7} parent=0 // loop_body
    %s14 = ssub.s32 %s9, 1
    %s15 = ssub.s32 %s9, 2
    %s22 = sadd.s32 1, %s17
    %p23 = scmp.ge.s32.totalorder %s22, 1
    %s24 = scalar_select %p23, 0, %s22
    %s25 = sadd.s32 1, %s16
    %s26 = scalar_select %p23, %s25, %s16
    %p27 = scmp.ge.s32.totalorder %s26, 2
    %s28 = scalar_select %p27, 0, %s26
    %s30 = sadd.s32 %s29, 1
    %p33 = scmp.eq.s32.totalorder %s9, 1
    %p34 = scmp.ne.s32.totalorder %s29, %s31
    %p35 = scmp.eq.s32.totalorder %s9, 0
    %p36 = por %p34, %p35
    %p37 = scmp.ne.s32.totalorder %s29, %s31
    %p38 = scmp.eq.s32.totalorder %s14, 1
    %p39 = por %p37, %p38
    %p40 = scmp.ne.s32.totalorder %s31, %s32
    %p41 = scmp.eq.s32.totalorder %s14, 0
    %p42 = por %p40, %p41
    %p43 = scmp.ne.s32.totalorder %s31, %s32
    %p44 = scmp.eq.s32.totalorder %s15, 1
    %p45 = por %p43, %p44
    %p47 = scmp.ne.s32.totalorder %s32, %s46
    %p48 = scmp.eq.s32.totalorder %s15, 0
    %p49 = por %p47, %p48
    %s50 = ssub.s32 %s16, %s28
    %s51 = ssub.s32 %s17, %s24
    %s52 = sor.u32 %s50, %s51
    %p53 = scmp.eq.s32.totalorder %s52, 0
    %s55 = sadd.s32 %s54, 1
    %s56 = scalar_select %p53, %s54, %s55
    %p59 = pneg %p53
    %p60 = scmp.eq.s32.totalorder %s9, 1
    %p61 = por %p59, %p60
    %p62 = scmp.ne.s32.totalorder %s54, %s57
    %p63 = scmp.eq.s32.totalorder %s9, 0
    %p64 = por %p62, %p63
    %p65 = scmp.ne.s32.totalorder %s54, %s57
    %p66 = scmp.eq.s32.totalorder %s14, 1
    %p67 = por %p65, %p66
    %p68 = scmp.ne.s32.totalorder %s57, %s58
    %p69 = scmp.eq.s32.totalorder %s14, 0
    %p70 = por %p68, %p69
    %p71 = scmp.ne.s32.totalorder %s57, %s58
    %p72 = scmp.eq.s32.totalorder %s15, 1
    %p73 = por %p71, %p72
    %p75 = scmp.ne.s32.totalorder %s58, %s74
    %p76 = scmp.eq.s32.totalorder %s15, 0
    %p77 = por %p75, %p76
    %s78 = ssub.s32 %s16, %s28
    %p79 = scmp.eq.s32.totalorder %s78, 0
    %s81 = sadd.s32 %s80, 1
    %s82 = scalar_select %p79, %s80, %s81
    %p85 = pneg %p79
    %p86 = scmp.eq.s32.totalorder %s9, 1
    %p87 = por %p85, %p86
    %p88 = scmp.ne.s32.totalorder %s80, %s83
    %p89 = scmp.eq.s32.totalorder %s9, 0
    %p90 = por %p88, %p89
    %p91 = scmp.ne.s32.totalorder %s80, %s83
    %p92 = scmp.eq.s32.totalorder %s14, 1
    %p93 = por %p91, %p92
    %p94 = scmp.ne.s32.totalorder %s83, %s84
    %p95 = scmp.eq.s32.totalorder %s14, 0
    %p96 = por %p94, %p95
    %p97 = scmp.ne.s32.totalorder %s83, %s84
    %p98 = scmp.eq.s32.totalorder %s15, 1
    %p99 = por %p97, %p98
    %p101 = scmp.ne.s32.totalorder %s84, %s100
    %p102 = scmp.eq.s32.totalorder %s15, 0
    %p103 = por %p101, %p102
    %s104 = ssub.s32 %s16, %s28
    %s105 = ssub.s32 %s17, %s24
    %s106 = sor.u32 %s104, %s105
    %p107 = scmp.eq.s32.totalorder %s106, 0
    %s109 = sadd.s32 %s108, 1
    %s110 = scalar_select %p107, %s108, %s109
    %p113 = pneg %p107
    %p114 = scmp.eq.s32.totalorder %s9, 1
    %p115 = por %p113, %p114
    %p116 = scmp.ne.s32.totalorder %s108, %s111
    %p117 = scmp.eq.s32.totalorder %s9, 0
    %p118 = por %p116, %p117
    %p119 = scmp.ne.s32.totalorder %s108, %s111
    %p120 = scmp.eq.s32.totalorder %s14, 1
    %p121 = por %p119, %p120
    %p122 = scmp.ne.s32.totalorder %s111, %s112
    %p123 = scmp.eq.s32.totalorder %s14, 0
    %p124 = por %p122, %p123
    %p125 = scmp.ne.s32.totalorder %s111, %s112
    %p126 = scmp.eq.s32.totalorder %s15, 1
    %p127 = por %p125, %p126
    %p129 = scmp.ne.s32.totalorder %s112, %s128
    %p130 = scmp.eq.s32.totalorder %s15, 0
    %p131 = por %p129, %p130
    %p132 = scmp.le.s32.totalorder 1, %s9
    %p133 = scmp.lt.s32.totalorder %s9, 3
    %p134 = pnand %p132, %p133
    %p135 = pneg %p134
    // Predicated region
    $region9: #{discriminator_forward.7} parent=5 // pred_check
      _
    $region10: #{discriminator_forward.7} parent=5 // pred_check_branch
      %137 = sbr.rel (%p134) target = $region12
    $region11: #{discriminator_forward.7} parent=5 // pred_region
      %s138 = ssub.s32 %s9, 1
      // Predicated region
      $region13: #{discriminator_forward.7} parent=11 // pred_check
        %p139 = pneg %p42
      $region14: #{discriminator_forward.7} parent=11 // pred_check_branch
        %141 = sbr.rel (%p139) target = $region16
      $region15: #{discriminator_forward.7} parent=11 // pred_region
        _
      $region16: #{discriminator_forward.7} parent=11 // pred_fallthru
        _
    $region12: #{discriminator_forward.7} parent=5 // pred_fallthru
      _
    %p142 = scmp.lt.s32.totalorder %s9, 2
    // Predicated region
    $region17: #{discriminator_forward.7} parent=5 // pred_check
      %p143 = pneg %p142
    $region18: #{discriminator_forward.7} parent=5 // pred_check_branch
      %145 = sbr.rel (%p143) target = $region20
    $region19: #{discriminator_forward.7} parent=5 // pred_region
      // Predicated region
      $region21: #{discriminator_forward.7} parent=19 // pred_check
        %p146 = pneg %p64
      $region22: #{discriminator_forward.7} parent=19 // pred_check_branch
        %148 = sbr.rel (%p146) target = $region24
      $region23: #{discriminator_forward.7} parent=19 // pred_region
        %p149 = scmp.lt.s32.totalorder %s16, 1
        %s150 = scalar_select %p149, %s16, 1
        %p151 = scmp.lt.s32.totalorder %s17, 0
        %s152 = scalar_select %p151, %s17, 0
        %s153 = smul.addr %s150, 128
        %s154 = sadd.s32 %s152, %s153
        %s155 = smul.addr %s154, 4
        %s156 = scalar_lea.vmem %s1, %s155
      $region24: #{discriminator_forward.7} parent=19 // pred_fallthru
        _
      // Predicated region
      $region25: #{discriminator_forward.7} parent=19 // pred_check
        %p157 = pneg %p90
      $region26: #{discriminator_forward.7} parent=19 // pred_check_branch
        %159 = sbr.rel (%p157) target = $region28
      $region27: #{discriminator_forward.7} parent=19 // pred_region
        %p160 = scmp.lt.s32.totalorder %s16, 1
        %s161 = scalar_select %p160, %s16, 1
        %s162 = scalar_lea.vmem %s2, %s161
      $region28: #{discriminator_forward.7} parent=19 // pred_fallthru
        _
    $region20: #{discriminator_forward.7} parent=5 // pred_fallthru
      _
    %p163 = scmp.le.s32.totalorder 1, %s9
    %p164 = scmp.lt.s32.totalorder %s9, 3
    %p165 = pnand %p163, %p164
    %p166 = pneg %p165
    // Predicated region
    $region29: #{discriminator_forward.7} parent=5 // pred_check
      _
    $region30: #{discriminator_forward.7} parent=5 // pred_check_branch
      %168 = sbr.rel (%p165) target = $region32
    $region31: #{discriminator_forward.7} parent=5 // pred_region
      %s169 = ssub.s32 %s9, 1
      %p170 = pneg %p42
      %p171 = pneg %p39
      %p172 = scmp.lt.s32.totalorder %s18, 1
      %s173 = scalar_select %p172, %s18, 1
      %p174 = scmp.lt.s32.totalorder %s19, 0
      %s175 = scalar_select %p174, %s19, 0
      %s176 = smul.addr %s173, 128
      %s177 = sadd.s32 %s175, %s176
      %s178 = smul.addr %s177, 4
      %s179 = scalar_lea.vmem %s1, %s178
      %p180 = pneg %p70
      %p181 = pneg %p67
      %p182 = scmp.lt.s32.totalorder %s18, 1
      %s183 = scalar_select %p182, %s18, 1
      %s184 = scalar_lea.vmem %s2, %s183
      %p185 = pneg %p96
      %p186 = pneg %p93
      %p187 = pneg %p124
      %p188 = pneg %p121
      %p189 = scmp.lt.s32.totalorder %s18, 1
      %s190 = scalar_select %p189, %s18, 1
      %p191 = scmp.lt.s32.totalorder %s19, 0
      %s192 = scalar_select %p191, %s19, 0
      %s193 = sadd.s32 %s192, %s190
      %s194 = scalar_lea.vmem %s3, %s193
      %p195 = scmp.lt.s32.totalorder %s18, 1
      %s196 = scalar_select %p195, %s18, 1
      %p197 = scmp.lt.s32.totalorder %s19, 0
      %s198 = scalar_select %p197, %s19, 0
      %s199 = smul.addr %s196, 128
      %s200 = sadd.s32 %s198, %s199
      %s201 = smul.addr %s200, 4
      %s202 = scalar_lea.vmem %s1, %s201
      %p203 = scmp.lt.s32.totalorder %s18, 1
      %s204 = scalar_select %p203, %s18, 1
      %s205 = scalar_lea.vmem %s2, %s204
      %p206 = scmp.lt.s32.totalorder %s18, 1
      %s207 = scalar_select %p206, %s18, 1
      %p208 = scmp.lt.s32.totalorder %s19, 0
      %s209 = scalar_select %p208, %s19, 0
      %s210 = sadd.s32 %s209, %s207
      %s211 = scalar_lea.vmem %s3, %s210
      %v213 = vld [vmem:[%s0] sm:$0xff]
      %v214 = vld [vmem:[%s0 + $0x8] sm:$0xff]
      %v215 = vld [vmem:[%s0 + $0x10] sm:$0xff]
      %v216 = vld [vmem:[%s0 + $0x18] sm:$0xff]
      %v217 = vld [vmem:[%s0 + $0x20] sm:$0xff]
      %v218 = vld [vmem:[%s0 + $0x28] sm:$0xff]
      %v219 = vld [vmem:[%s0 + $0x30] sm:$0xff]
      %v220 = vld [vmem:[%s0 + $0x38] sm:$0xff]
      %v221 = vld [vmem:[%s0 + $0x40] sm:$0xff]
      %v222 = vld [vmem:[%s0 + $0x48] sm:$0xff]
      %v223 = vld [vmem:[%s0 + $0x50] sm:$0xff]
      %v224 = vld [vmem:[%s0 + $0x58] sm:$0xff]
      %v225 = vld [vmem:[%s0 + $0x60] sm:$0xff]
      %v226 = vld [vmem:[%s0 + $0x68] sm:$0xff]
      %v227 = vld [vmem:[%s0 + $0x70] sm:$0xff]
      %v228 = vld [vmem:[%s0 + $0x78] sm:$0xff]
      %v229 = vld [vmem:[%s202] sm:$0xf]
      %v230 = vld [vmem:[%s202 + $0x4] sm:$0xf]
      %v231 = vld [vmem:[%s202 + $0x8] sm:$0xf]
      %v232 = vld [vmem:[%s202 + $0xc] sm:$0xf]
      %v233 = vld [vmem:[%s202 + $0x10] sm:$0xf]
      %v234 = vld [vmem:[%s202 + $0x14] sm:$0xf]
      %v235 = vld [vmem:[%s202 + $0x18] sm:$0xf]
      %v236 = vld [vmem:[%s202 + $0x1c] sm:$0xf]
      %v237 = vld [vmem:[%s202 + $0x20] sm:$0xf]
      %v238 = vld [vmem:[%s202 + $0x24] sm:$0xf]
      %v239 = vld [vmem:[%s202 + $0x28] sm:$0xf]
      %v240 = vld [vmem:[%s202 + $0x2c] sm:$0xf]
      %v241 = vld [vmem:[%s202 + $0x30] sm:$0xf]
      %v242 = vld [vmem:[%s202 + $0x34] sm:$0xf]
      %v243 = vld [vmem:[%s202 + $0x38] sm:$0xf]
      %v244 = vld [vmem:[%s202 + $0x3c] sm:$0xf]
      %v245 = vld [vmem:[%s202 + $0x40] sm:$0xf]
      %v246 = vld [vmem:[%s202 + $0x44] sm:$0xf]
      %v247 = vld [vmem:[%s202 + $0x48] sm:$0xf]
      %v248 = vld [vmem:[%s202 + $0x4c] sm:$0xf]
      %v249 = vld [vmem:[%s202 + $0x50] sm:$0xf]
      %v250 = vld [vmem:[%s202 + $0x54] sm:$0xf]
      %v251 = vld [vmem:[%s202 + $0x58] sm:$0xf]
      %v252 = vld [vmem:[%s202 + $0x5c] sm:$0xf]
      %v253 = vld [vmem:[%s202 + $0x60] sm:$0xf]
      %v254 = vld [vmem:[%s202 + $0x64] sm:$0xf]
      %v255 = vld [vmem:[%s202 + $0x68] sm:$0xf]
      %v256 = vld [vmem:[%s202 + $0x6c] sm:$0xf]
      %v257 = vld [vmem:[%s202 + $0x70] sm:$0xf]
      %v258 = vld [vmem:[%s202 + $0x74] sm:$0xf]
      %v259 = vld [vmem:[%s202 + $0x78] sm:$0xf]
      %v260 = vld [vmem:[%s202 + $0x7c] sm:$0xf]
      %v261 = vld [vmem:[%s202 + $0x80] sm:$0xf]
      %v262 = vld [vmem:[%s202 + $0x84] sm:$0xf]
      %v263 = vld [vmem:[%s202 + $0x88] sm:$0xf]
      %v264 = vld [vmem:[%s202 + $0x8c] sm:$0xf]
      %v265 = vld [vmem:[%s202 + $0x90] sm:$0xf]
      %v266 = vld [vmem:[%s202 + $0x94] sm:$0xf]
      %v267 = vld [vmem:[%s202 + $0x98] sm:$0xf]
      %v268 = vld [vmem:[%s202 + $0x9c] sm:$0xf]
      %v269 = vld [vmem:[%s202 + $0xa0] sm:$0xf]
      %v270 = vld [vmem:[%s202 + $0xa4] sm:$0xf]
      %v271 = vld [vmem:[%s202 + $0xa8] sm:$0xf]
      %v272 = vld [vmem:[%s202 + $0xac] sm:$0xf]
      %v273 = vld [vmem:[%s202 + $0xb0] sm:$0xf]
      %v274 = vld [vmem:[%s202 + $0xb4] sm:$0xf]
      %v275 = vld [vmem:[%s202 + $0xb8] sm:$0xf]
      %v276 = vld [vmem:[%s202 + $0xbc] sm:$0xf]
      %v277 = vld [vmem:[%s202 + $0xc0] sm:$0xf]
      %v278 = vld [vmem:[%s202 + $0xc4] sm:$0xf]
      %v279 = vld [vmem:[%s202 + $0xc8] sm:$0xf]
      %v280 = vld [vmem:[%s202 + $0xcc] sm:$0xf]
      %v281 = vld [vmem:[%s202 + $0xd0] sm:$0xf]
      %v282 = vld [vmem:[%s202 + $0xd4] sm:$0xf]
      %v283 = vld [vmem:[%s202 + $0xd8] sm:$0xf]
      %v284 = vld [vmem:[%s202 + $0xdc] sm:$0xf]
      %v285 = vld [vmem:[%s202 + $0xe0] sm:$0xf]
      %v286 = vld [vmem:[%s202 + $0xe4] sm:$0xf]
      %v287 = vld [vmem:[%s202 + $0xe8] sm:$0xf]
      %v288 = vld [vmem:[%s202 + $0xec] sm:$0xf]
      %v289 = vld [vmem:[%s202 + $0xf0] sm:$0xf]
      %v290 = vld [vmem:[%s202 + $0xf4] sm:$0xf]
      %v291 = vld [vmem:[%s202 + $0xf8] sm:$0xf]
      %v292 = vld [vmem:[%s202 + $0xfc] sm:$0xf]
      %v293 = vld [vmem:[%s202 + $0x100] sm:$0xf]
      %v294 = vld [vmem:[%s202 + $0x104] sm:$0xf]
      %v295 = vld [vmem:[%s202 + $0x108] sm:$0xf]
      %v296 = vld [vmem:[%s202 + $0x10c] sm:$0xf]
      %v297 = vld [vmem:[%s202 + $0x110] sm:$0xf]
      %v298 = vld [vmem:[%s202 + $0x114] sm:$0xf]
      %v299 = vld [vmem:[%s202 + $0x118] sm:$0xf]
      %v300 = vld [vmem:[%s202 + $0x11c] sm:$0xf]
      %v301 = vld [vmem:[%s202 + $0x120] sm:$0xf]
      %v302 = vld [vmem:[%s202 + $0x124] sm:$0xf]
      %v303 = vld [vmem:[%s202 + $0x128] sm:$0xf]
      %v304 = vld [vmem:[%s202 + $0x12c] sm:$0xf]
      %v305 = vld [vmem:[%s202 + $0x130] sm:$0xf]
      %v306 = vld [vmem:[%s202 + $0x134] sm:$0xf]
      %v307 = vld [vmem:[%s202 + $0x138] sm:$0xf]
      %v308 = vld [vmem:[%s202 + $0x13c] sm:$0xf]
      %v309 = vld [vmem:[%s202 + $0x140] sm:$0xf]
      %v310 = vld [vmem:[%s202 + $0x144] sm:$0xf]
      %v311 = vld [vmem:[%s202 + $0x148] sm:$0xf]
      %v312 = vld [vmem:[%s202 + $0x14c] sm:$0xf]
      %v313 = vld [vmem:[%s202 + $0x150] sm:$0xf]
      %v314 = vld [vmem:[%s202 + $0x154] sm:$0xf]
      %v315 = vld [vmem:[%s202 + $0x158] sm:$0xf]
      %v316 = vld [vmem:[%s202 + $0x15c] sm:$0xf]
      %v317 = vld [vmem:[%s202 + $0x160] sm:$0xf]
      %v318 = vld [vmem:[%s202 + $0x164] sm:$0xf]
      %v319 = vld [vmem:[%s202 + $0x168] sm:$0xf]
      %v320 = vld [vmem:[%s202 + $0x16c] sm:$0xf]
      %v321 = vld [vmem:[%s202 + $0x170] sm:$0xf]
      %v322 = vld [vmem:[%s202 + $0x174] sm:$0xf]
      %v323 = vld [vmem:[%s202 + $0x178] sm:$0xf]
      %v324 = vld [vmem:[%s202 + $0x17c] sm:$0xf]
      %v325 = vld [vmem:[%s202 + $0x180] sm:$0xf]
      %v326 = vld [vmem:[%s202 + $0x184] sm:$0xf]
      %v327 = vld [vmem:[%s202 + $0x188] sm:$0xf]
      %v328 = vld [vmem:[%s202 + $0x18c] sm:$0xf]
      %v329 = vld [vmem:[%s202 + $0x190] sm:$0xf]
      %v330 = vld [vmem:[%s202 + $0x194] sm:$0xf]
      %v331 = vld [vmem:[%s202 + $0x198] sm:$0xf]
      %v332 = vld [vmem:[%s202 + $0x19c] sm:$0xf]
      %v333 = vld [vmem:[%s202 + $0x1a0] sm:$0xf]
      %v334 = vld [vmem:[%s202 + $0x1a4] sm:$0xf]
      %v335 = vld [vmem:[%s202 + $0x1a8] sm:$0xf]
      %v336 = vld [vmem:[%s202 + $0x1ac] sm:$0xf]
      %v337 = vld [vmem:[%s202 + $0x1b0] sm:$0xf]
      %v338 = vld [vmem:[%s202 + $0x1b4] sm:$0xf]
      %v339 = vld [vmem:[%s202 + $0x1b8] sm:$0xf]
      %v340 = vld [vmem:[%s202 + $0x1bc] sm:$0xf]
      %v341 = vld [vmem:[%s202 + $0x1c0] sm:$0xf]
      %v342 = vld [vmem:[%s202 + $0x1c4] sm:$0xf]
      %v343 = vld [vmem:[%s202 + $0x1c8] sm:$0xf]
      %v344 = vld [vmem:[%s202 + $0x1cc] sm:$0xf]
      %v345 = vld [vmem:[%s202 + $0x1d0] sm:$0xf]
      %v346 = vld [vmem:[%s202 + $0x1d4] sm:$0xf]
      %v347 = vld [vmem:[%s202 + $0x1d8] sm:$0xf]
      %v348 = vld [vmem:[%s202 + $0x1dc] sm:$0xf]
      %v349 = vld [vmem:[%s202 + $0x1e0] sm:$0xf]
      %v350 = vld [vmem:[%s202 + $0x1e4] sm:$0xf]
      %v351 = vld [vmem:[%s202 + $0x1e8] sm:$0xf]
      %v352 = vld [vmem:[%s202 + $0x1ec] sm:$0xf]
      %v353 = vld [vmem:[%s202 + $0x1f0] sm:$0xf]
      %v354 = vld [vmem:[%s202 + $0x1f4] sm:$0xf]
      %v355 = vld [vmem:[%s202 + $0x1f8] sm:$0xf]
      %v356 = vld [vmem:[%s202 + $0x1fc] sm:$0xf]
      %v373 = vunpack.c.l.b16 %v213
      %v374 = vunpack.c.h.b16 %v213
      %v375 = vunpack.c.l.b16 %v214
      %v376 = vunpack.c.h.b16 %v214
      %v377 = vunpack.c.l.b16 %v215
      %v378 = vunpack.c.h.b16 %v215
      %v379 = vunpack.c.l.b16 %v216
      %v380 = vunpack.c.h.b16 %v216
      %v381 = vunpack.c.l.b16 %v217
      %v382 = vunpack.c.h.b16 %v217
      %v383 = vunpack.c.l.b16 %v218
      %v384 = vunpack.c.h.b16 %v218
      %v385 = vunpack.c.l.b16 %v219
      %v386 = vunpack.c.h.b16 %v219
      %v387 = vunpack.c.l.b16 %v220
      %v388 = vunpack.c.h.b16 %v220
      %v389 = vunpack.c.l.b16 %v221
      %v390 = vunpack.c.h.b16 %v221
      %v391 = vunpack.c.l.b16 %v222
      %v392 = vunpack.c.h.b16 %v222
      %v393 = vunpack.c.l.b16 %v223
      %v394 = vunpack.c.h.b16 %v223
      %v395 = vunpack.c.l.b16 %v224
      %v396 = vunpack.c.h.b16 %v224
      %v397 = vunpack.c.l.b16 %v225
      %v398 = vunpack.c.h.b16 %v225
      %v399 = vunpack.c.l.b16 %v226
      %v400 = vunpack.c.h.b16 %v226
      %v401 = vunpack.c.l.b16 %v227
      %v402 = vunpack.c.h.b16 %v227
      %v403 = vunpack.c.l.b16 %v228
      %v404 = vunpack.c.h.b16 %v228
      %v405 = vpack.c.b16 %v381, %v373
      %v406 = vpack.c.b16 %v382, %v374
      %v407 = vpack.c.b16 %v383, %v375
      %v408 = vpack.c.b16 %v384, %v376
      %v409 = vpack.c.b16 %v385, %v377
      %v410 = vpack.c.b16 %v386, %v378
      %v411 = vpack.c.b16 %v387, %v379
      %v412 = vpack.c.b16 %v388, %v380
      %v413 = vpack.c.b16 %v397, %v389
      %v414 = vpack.c.b16 %v398, %v390
      %v415 = vpack.c.b16 %v399, %v391
      %v416 = vpack.c.b16 %v400, %v392
      %v417 = vpack.c.b16 %v401, %v393
      %v418 = vpack.c.b16 %v402, %v394
      %v419 = vpack.c.b16 %v403, %v395
      %v420 = vpack.c.b16 %v404, %v396
      %v565 = vunpack.c.l.b16 %v229
      %v566 = vunpack.c.l.b16 %v230
      %v567 = vunpack.c.l.b16 %v231
      %v568 = vunpack.c.l.b16 %v232
      %v569 = vunpack.c.l.b16 %v233
      %v570 = vunpack.c.l.b16 %v234
      %v571 = vunpack.c.l.b16 %v235
      %v572 = vunpack.c.l.b16 %v236
      %v573 = vunpack.c.l.b16 %v237
      %v574 = vunpack.c.l.b16 %v238
      %v575 = vunpack.c.l.b16 %v239
      %v576 = vunpack.c.l.b16 %v240
      %v577 = vunpack.c.l.b16 %v241
      %v578 = vunpack.c.l.b16 %v242
      %v579 = vunpack.c.l.b16 %v243
      %v580 = vunpack.c.l.b16 %v244
      %v581 = vunpack.c.l.b16 %v245
      %v582 = vunpack.c.l.b16 %v246
      %v583 = vunpack.c.l.b16 %v247
      %v584 = vunpack.c.l.b16 %v248
      %v585 = vunpack.c.l.b16 %v249
      %v586 = vunpack.c.l.b16 %v250
      %v587 = vunpack.c.l.b16 %v251
      %v588 = vunpack.c.l.b16 %v252
      %v589 = vunpack.c.l.b16 %v253
      %v590 = vunpack.c.l.b16 %v254
      %v591 = vunpack.c.l.b16 %v255
      %v592 = vunpack.c.l.b16 %v256
      %v593 = vunpack.c.l.b16 %v257
      %v594 = vunpack.c.l.b16 %v258
      %v595 = vunpack.c.l.b16 %v259
      %v596 = vunpack.c.l.b16 %v260
      %v597 = vunpack.c.l.b16 %v261
      %v598 = vunpack.c.l.b16 %v262
      %v599 = vunpack.c.l.b16 %v263
      %v600 = vunpack.c.l.b16 %v264
      %v601 = vunpack.c.l.b16 %v265
      %v602 = vunpack.c.l.b16 %v266
      %v603 = vunpack.c.l.b16 %v267
      %v604 = vunpack.c.l.b16 %v268
      %v605 = vunpack.c.l.b16 %v269
      %v606 = vunpack.c.l.b16 %v270
      %v607 = vunpack.c.l.b16 %v271
      %v608 = vunpack.c.l.b16 %v272
      %v609 = vunpack.c.l.b16 %v273
      %v610 = vunpack.c.l.b16 %v274
      %v611 = vunpack.c.l.b16 %v275
      %v612 = vunpack.c.l.b16 %v276
      %v613 = vunpack.c.l.b16 %v277
      %v614 = vunpack.c.l.b16 %v278
      %v615 = vunpack.c.l.b16 %v279
      %v616 = vunpack.c.l.b16 %v280
      %v617 = vunpack.c.l.b16 %v281
      %v618 = vunpack.c.l.b16 %v282
      %v619 = vunpack.c.l.b16 %v283
      %v620 = vunpack.c.l.b16 %v284
      %v621 = vunpack.c.l.b16 %v285
      %v622 = vunpack.c.l.b16 %v286
      %v623 = vunpack.c.l.b16 %v287
      %v624 = vunpack.c.l.b16 %v288
      %v625 = vunpack.c.l.b16 %v289
      %v626 = vunpack.c.l.b16 %v290
      %v627 = vunpack.c.l.b16 %v291
      %v628 = vunpack.c.l.b16 %v292
      %v629 = vunpack.c.l.b16 %v293
      %v630 = vunpack.c.l.b16 %v294
      %v631 = vunpack.c.l.b16 %v295
      %v632 = vunpack.c.l.b16 %v296
      %v633 = vunpack.c.l.b16 %v297
      %v634 = vunpack.c.l.b16 %v298
      %v635 = vunpack.c.l.b16 %v299
      %v636 = vunpack.c.l.b16 %v300
      %v637 = vunpack.c.l.b16 %v301
      %v638 = vunpack.c.l.b16 %v302
      %v639 = vunpack.c.l.b16 %v303
      %v640 = vunpack.c.l.b16 %v304
      %v641 = vunpack.c.l.b16 %v305
      %v642 = vunpack.c.l.b16 %v306
      %v643 = vunpack.c.l.b16 %v307
      %v644 = vunpack.c.l.b16 %v308
      %v645 = vunpack.c.l.b16 %v309
      %v646 = vunpack.c.l.b16 %v310
      %v647 = vunpack.c.l.b16 %v311
      %v648 = vunpack.c.l.b16 %v312
      %v649 = vunpack.c.l.b16 %v313
      %v650 = vunpack.c.l.b16 %v314
      %v651 = vunpack.c.l.b16 %v315
      %v652 = vunpack.c.l.b16 %v316
      %v653 = vunpack.c.l.b16 %v317
      %v654 = vunpack.c.l.b16 %v318
      %v655 = vunpack.c.l.b16 %v319
      %v656 = vunpack.c.l.b16 %v320
      %v657 = vunpack.c.l.b16 %v321
      %v658 = vunpack.c.l.b16 %v322
      %v659 = vunpack.c.l.b16 %v323
      %v660 = vunpack.c.l.b16 %v324
      %v661 = vunpack.c.l.b16 %v325
      %v662 = vunpack.c.l.b16 %v326
      %v663 = vunpack.c.l.b16 %v327
      %v664 = vunpack.c.l.b16 %v328
      %v665 = vunpack.c.l.b16 %v329
      %v666 = vunpack.c.l.b16 %v330
      %v667 = vunpack.c.l.b16 %v331
      %v668 = vunpack.c.l.b16 %v332
      %v669 = vunpack.c.l.b16 %v333
      %v670 = vunpack.c.l.b16 %v334
      %v671 = vunpack.c.l.b16 %v335
      %v672 = vunpack.c.l.b16 %v336
      %v673 = vunpack.c.l.b16 %v337
      %v674 = vunpack.c.l.b16 %v338
      %v675 = vunpack.c.l.b16 %v339
      %v676 = vunpack.c.l.b16 %v340
      %v677 = vunpack.c.l.b16 %v341
      %v678 = vunpack.c.l.b16 %v342
      %v679 = vunpack.c.l.b16 %v343
      %v680 = vunpack.c.l.b16 %v344
      %v681 = vunpack.c.l.b16 %v345
      %v682 = vunpack.c.l.b16 %v346
      %v683 = vunpack.c.l.b16 %v347
      %v684 = vunpack.c.l.b16 %v348
      %v685 = vunpack.c.l.b16 %v349
      %v686 = vunpack.c.l.b16 %v350
      %v687 = vunpack.c.l.b16 %v351
      %v688 = vunpack.c.l.b16 %v352
      %v689 = vunpack.c.l.b16 %v353
      %v690 = vunpack.c.l.b16 %v354
      %v691 = vunpack.c.l.b16 %v355
      %v692 = vunpack.c.l.b16 %v356
      %v693 = vpack.c.b16 %v566, %v565
      %v694 = vpack.c.b16 %v568, %v567
      %v695 = vpack.c.b16 %v570, %v569
      %v696 = vpack.c.b16 %v572, %v571
      %v697 = vpack.c.b16 %v574, %v573
      %v698 = vpack.c.b16 %v576, %v575
      %v699 = vpack.c.b16 %v578, %v577
      %v700 = vpack.c.b16 %v580, %v579
      %v701 = vpack.c.b16 %v582, %v581
      %v702 = vpack.c.b16 %v584, %v583
      %v703 = vpack.c.b16 %v586, %v585
      %v704 = vpack.c.b16 %v588, %v587
      %v705 = vpack.c.b16 %v590, %v589
      %v706 = vpack.c.b16 %v592, %v591
      %v707 = vpack.c.b16 %v594, %v593
      %v708 = vpack.c.b16 %v596, %v595
      %v709 = vpack.c.b16 %v598, %v597
      %v710 = vpack.c.b16 %v600, %v599
      %v711 = vpack.c.b16 %v602, %v601
      %v712 = vpack.c.b16 %v604, %v603
      %v713 = vpack.c.b16 %v606, %v605
      %v714 = vpack.c.b16 %v608, %v607
      %v715 = vpack.c.b16 %v610, %v609
      %v716 = vpack.c.b16 %v612, %v611
      %v717 = vpack.c.b16 %v614, %v613
      %v718 = vpack.c.b16 %v616, %v615
      %v719 = vpack.c.b16 %v618, %v617
      %v720 = vpack.c.b16 %v620, %v619
      %v721 = vpack.c.b16 %v622, %v621
      %v722 = vpack.c.b16 %v624, %v623
      %v723 = vpack.c.b16 %v626, %v625
      %v724 = vpack.c.b16 %v628, %v627
      %v725 = vpack.c.b16 %v630, %v629
      %v726 = vpack.c.b16 %v632, %v631
      %v727 = vpack.c.b16 %v634, %v633
      %v728 = vpack.c.b16 %v636, %v635
      %v729 = vpack.c.b16 %v638, %v637
      %v730 = vpack.c.b16 %v640, %v639
      %v731 = vpack.c.b16 %v642, %v641
      %v732 = vpack.c.b16 %v644, %v643
      %v733 = vpack.c.b16 %v646, %v645
      %v734 = vpack.c.b16 %v648, %v647
      %v735 = vpack.c.b16 %v650, %v649
      %v736 = vpack.c.b16 %v652, %v651
      %v737 = vpack.c.b16 %v654, %v653
      %v738 = vpack.c.b16 %v656, %v655
      %v739 = vpack.c.b16 %v658, %v657
      %v740 = vpack.c.b16 %v660, %v659
      %v741 = vpack.c.b16 %v662, %v661
      %v742 = vpack.c.b16 %v664, %v663
      %v743 = vpack.c.b16 %v666, %v665
      %v744 = vpack.c.b16 %v668, %v667
      %v745 = vpack.c.b16 %v670, %v669
      %v746 = vpack.c.b16 %v672, %v671
      %v747 = vpack.c.b16 %v674, %v673
      %v748 = vpack.c.b16 %v676, %v675
      %v749 = vpack.c.b16 %v678, %v677
      %v750 = vpack.c.b16 %v680, %v679
      %v751 = vpack.c.b16 %v682, %v681
      %v752 = vpack.c.b16 %v684, %v683
      %v753 = vpack.c.b16 %v686, %v685
      %v754 = vpack.c.b16 %v688, %v687
      %v755 = vpack.c.b16 %v690, %v689
      %v756 = vpack.c.b16 %v692, %v691
      %821 = vmatprep.subr.bf16.mxu0 0
      %822 = vmatpush1.bf16.msra.mxu0 %v700
      %823 = vmatprep.subr.bf16.mxu0 0
      %824 = vmatpush1.bf16.msra.mxu0 %v699
      %825 = vmatprep.subr.bf16.mxu0 0
      %826 = vmatpush1.bf16.msra.mxu0 %v698
      %827 = vmatprep.subr.bf16.mxu0 0
      %828 = vmatpush1.bf16.msra.mxu0 %v697
      %829 = vmatprep.subr.bf16.mxu0 0
      %830 = vmatpush1.bf16.msra.mxu0 %v696
      %831 = vmatprep.subr.bf16.mxu0 0
      %832 = vmatpush1.bf16.msra.mxu0 %v695
      %833 = vmatprep.subr.bf16.mxu0 0
      %834 = vmatpush1.bf16.msra.mxu0 %v694
      %835 = vmatprep.subr.bf16.mxu0 0
      %836 = vmatpush1.bf16.msra.mxu0 %v693
      %837 = vmatprep.subr.bf16.mxu0 0
      %838 = vmatpush2.bf16.msra.mxu0 %v708
      %839 = vmatprep.subr.bf16.mxu0 0
      %840 = vmatpush2.bf16.msra.mxu0 %v707
      %841 = vmatprep.subr.bf16.mxu0 0
      %842 = vmatpush2.bf16.msra.mxu0 %v706
      %843 = vmatprep.subr.bf16.mxu0 0
      %844 = vmatpush2.bf16.msra.mxu0 %v705
      %845 = vmatprep.subr.bf16.mxu0 0
      %846 = vmatpush2.bf16.msra.mxu0 %v704
      %847 = vmatprep.subr.bf16.mxu0 0
      %848 = vmatpush2.bf16.msra.mxu0 %v703
      %849 = vmatprep.subr.bf16.mxu0 0
      %850 = vmatpush2.bf16.msra.mxu0 %v702
      %851 = vmatprep.subr.bf16.mxu0 0
      %852 = vmatpush2.bf16.msra.mxu0 %v701
      %853 = vmatprep.mubr.bf16.mxu0 %v406
      %854 = vmatmul.mubr.bf16.gmra.mxu0 %v405
      %v855 = vpop.f32.mrf.mxu0
      %v856 = vadd.f32 0.0, %v855
      %v857 = vpop.f32.mrf.mxu0
      %v858 = vpop.f32.mrf.mxu0
      %v859 = vadd.f32 0.0, %v858
      %v860 = vpop.f32.mrf.mxu0
      %861 = vmatprep.mubr.bf16.mxu0 %v414
      %862 = vmatmul.mubr.bf16.gmra.mxu0 %v413
      %v863 = vpop.f32.mrf.mxu0
      %v864 = vadd.f32 0.0, %v863
      %v865 = vpop.f32.mrf.mxu0
      %v866 = vpop.f32.mrf.mxu0
      %v867 = vadd.f32 0.0, %v866
      %v868 = vpop.f32.mrf.mxu0
      %869 = vdwg.mxu0
      %870 = vmatprep.subr.bf16.mxu0 0
      %871 = vmatpush1.bf16.msra.mxu0 %v716
      %872 = vmatprep.subr.bf16.mxu0 0
      %873 = vmatpush1.bf16.msra.mxu0 %v715
      %874 = vmatprep.subr.bf16.mxu0 0
      %875 = vmatpush1.bf16.msra.mxu0 %v714
      %876 = vmatprep.subr.bf16.mxu0 0
      %877 = vmatpush1.bf16.msra.mxu0 %v713
      %878 = vmatprep.subr.bf16.mxu0 0
      %879 = vmatpush1.bf16.msra.mxu0 %v712
      %880 = vmatprep.subr.bf16.mxu0 0
      %881 = vmatpush1.bf16.msra.mxu0 %v711
      %882 = vmatprep.subr.bf16.mxu0 0
      %883 = vmatpush1.bf16.msra.mxu0 %v710
      %884 = vmatprep.subr.bf16.mxu0 0
      %885 = vmatpush1.bf16.msra.mxu0 %v709
      %886 = vmatprep.subr.bf16.mxu0 0
      %887 = vmatpush2.bf16.msra.mxu0 %v724
      %888 = vmatprep.subr.bf16.mxu0 0
      %889 = vmatpush2.bf16.msra.mxu0 %v723
      %890 = vmatprep.subr.bf16.mxu0 0
      %891 = vmatpush2.bf16.msra.mxu0 %v722
      %892 = vmatprep.subr.bf16.mxu0 0
      %893 = vmatpush2.bf16.msra.mxu0 %v721
      %894 = vmatprep.subr.bf16.mxu0 0
      %895 = vmatpush2.bf16.msra.mxu0 %v720
      %896 = vmatprep.subr.bf16.mxu0 0
      %897 = vmatpush2.bf16.msra.mxu0 %v719
      %898 = vmatprep.subr.bf16.mxu0 0
      %899 = vmatpush2.bf16.msra.mxu0 %v718
      %900 = vmatprep.subr.bf16.mxu0 0
      %901 = vmatpush2.bf16.msra.mxu0 %v717
      %902 = vmatprep.mubr.bf16.mxu0 %v408
      %903 = vmatmul.mubr.bf16.gmra.mxu0 %v407
      %v904 = vpop.f32.mrf.mxu0
      %v905 = vadd.f32 %v856, %v904
      %v906 = vpop.f32.mrf.mxu0
      %v907 = vpop.f32.mrf.mxu0
      %v908 = vadd.f32 %v859, %v907
      %v909 = vpop.f32.mrf.mxu0
      %910 = vmatprep.mubr.bf16.mxu0 %v416
      %911 = vmatmul.mubr.bf16.gmra.mxu0 %v415
      %v912 = vpop.f32.mrf.mxu0
      %v913 = vadd.f32 %v864, %v912
      %v914 = vpop.f32.mrf.mxu0
      %v915 = vpop.f32.mrf.mxu0
      %v916 = vadd.f32 %v867, %v915
      %v917 = vpop.f32.mrf.mxu0
      %918 = vdwg.mxu0
      %919 = vmatprep.subr.bf16.mxu0 0
      %920 = vmatpush1.bf16.msra.mxu0 %v732
      %921 = vmatprep.subr.bf16.mxu0 0
      %922 = vmatpush1.bf16.msra.mxu0 %v731
      %923 = vmatprep.subr.bf16.mxu0 0
      %924 = vmatpush1.bf16.msra.mxu0 %v730
      %925 = vmatprep.subr.bf16.mxu0 0
      %926 = vmatpush1.bf16.msra.mxu0 %v729
      %927 = vmatprep.subr.bf16.mxu0 0
      %928 = vmatpush1.bf16.msra.mxu0 %v728
      %929 = vmatprep.subr.bf16.mxu0 0
      %930 = vmatpush1.bf16.msra.mxu0 %v727
      %931 = vmatprep.subr.bf16.mxu0 0
      %932 = vmatpush1.bf16.msra.mxu0 %v726
      %933 = vmatprep.subr.bf16.mxu0 0
      %934 = vmatpush1.bf16.msra.mxu0 %v725
      %935 = vmatprep.subr.bf16.mxu0 0
      %936 = vmatpush2.bf16.msra.mxu0 %v740
      %937 = vmatprep.subr.bf16.mxu0 0
      %938 = vmatpush2.bf16.msra.mxu0 %v739
      %939 = vmatprep.subr.bf16.mxu0 0
      %940 = vmatpush2.bf16.msra.mxu0 %v738
      %941 = vmatprep.subr.bf16.mxu0 0
      %942 = vmatpush2.bf16.msra.mxu0 %v737
      %943 = vmatprep.subr.bf16.mxu0 0
      %944 = vmatpush2.bf16.msra.mxu0 %v736
      %945 = vmatprep.subr.bf16.mxu0 0
      %946 = vmatpush2.bf16.msra.mxu0 %v735
      %947 = vmatprep.subr.bf16.mxu0 0
      %948 = vmatpush2.bf16.msra.mxu0 %v734
      %949 = vmatprep.subr.bf16.mxu0 0
      %950 = vmatpush2.bf16.msra.mxu0 %v733
      %951 = vmatprep.mubr.bf16.mxu0 %v410
      %952 = vmatmul.mubr.bf16.gmra.mxu0 %v409
      %v953 = vpop.f32.mrf.mxu0
      %v954 = vadd.f32 %v905, %v953
      %v955 = vpop.f32.mrf.mxu0
      %v956 = vpop.f32.mrf.mxu0
      %v957 = vadd.f32 %v908, %v956
      %v958 = vpop.f32.mrf.mxu0
      %959 = vmatprep.mubr.bf16.mxu0 %v418
      %960 = vmatmul.mubr.bf16.gmra.mxu0 %v417
      %v961 = vpop.f32.mrf.mxu0
      %v962 = vadd.f32 %v913, %v961
      %v963 = vpop.f32.mrf.mxu0
      %v964 = vpop.f32.mrf.mxu0
      %v965 = vadd.f32 %v916, %v964
      %v966 = vpop.f32.mrf.mxu0
      %967 = vdwg.mxu0
      %968 = vmatprep.subr.bf16.mxu0 0
      %969 = vmatpush1.bf16.msra.mxu0 %v748
      %970 = vmatprep.subr.bf16.mxu0 0
      %971 = vmatpush1.bf16.msra.mxu0 %v747
      %972 = vmatprep.subr.bf16.mxu0 0
      %973 = vmatpush1.bf16.msra.mxu0 %v746
      %974 = vmatprep.subr.bf16.mxu0 0
      %975 = vmatpush1.bf16.msra.mxu0 %v745
      %976 = vmatprep.subr.bf16.mxu0 0
      %977 = vmatpush1.bf16.msra.mxu0 %v744
      %978 = vmatprep.subr.bf16.mxu0 0
      %979 = vmatpush1.bf16.msra.mxu0 %v743
      %980 = vmatprep.subr.bf16.mxu0 0
      %981 = vmatpush1.bf16.msra.mxu0 %v742
      %982 = vmatprep.subr.bf16.mxu0 0
      %983 = vmatpush1.bf16.msra.mxu0 %v741
      %984 = vmatprep.subr.bf16.mxu0 0
      %985 = vmatpush2.bf16.msra.mxu0 %v756
      %986 = vmatprep.subr.bf16.mxu0 0
      %987 = vmatpush2.bf16.msra.mxu0 %v755
      %988 = vmatprep.subr.bf16.mxu0 0
      %989 = vmatpush2.bf16.msra.mxu0 %v754
      %990 = vmatprep.subr.bf16.mxu0 0
      %991 = vmatpush2.bf16.msra.mxu0 %v753
      %992 = vmatprep.subr.bf16.mxu0 0
      %993 = vmatpush2.bf16.msra.mxu0 %v752
      %994 = vmatprep.subr.bf16.mxu0 0
      %995 = vmatpush2.bf16.msra.mxu0 %v751
      %996 = vmatprep.subr.bf16.mxu0 0
      %997 = vmatpush2.bf16.msra.mxu0 %v750
      %998 = vmatprep.subr.bf16.mxu0 0
      %999 = vmatpush2.bf16.msra.mxu0 %v749
      %1000 = vmatprep.mubr.bf16.mxu0 %v412
      %1001 = vmatmul.mubr.bf16.gmra.mxu0 %v411
      %v1002 = vpop.f32.mrf.mxu0
      %v1003 = vadd.f32 %v954, %v1002
      %v1004 = vpop.f32.mrf.mxu0
      %v1005 = vpop.f32.mrf.mxu0
      %v1006 = vadd.f32 %v957, %v1005
      %v1007 = vpop.f32.mrf.mxu0
      %1008 = vmatprep.mubr.bf16.mxu0 %v420
      %1009 = vmatmul.mubr.bf16.gmra.mxu0 %v419
      %v1010 = vpop.f32.mrf.mxu0
      %v1011 = vadd.f32 %v962, %v1010
      %v1012 = vpop.f32.mrf.mxu0
      %v1013 = vpop.f32.mrf.mxu0
      %v1014 = vadd.f32 %v965, %v1013
      %v1015 = vpop.f32.mrf.mxu0
      %1016 = vdwg.mxu0
      %v1017 = vmul.f32 %v1003, 0.2
      %v1018 = vmul.f32 %v1006, 0.2
      %v1019 = vmul.f32 %v1011, 0.2
      %v1020 = vmul.f32 %v1014, 0.2
      %v1021 = vmax.f32 %v1003, %v1017
      %v1022 = vmax.f32 %v1006, %v1018
      %v1023 = vmax.f32 %v1011, %v1019
      %v1024 = vmax.f32 %v1014, %v1020
      %v1025 = vld [vmem:[%s205] sm:$0x1]
      %vm1026 = vcmask 261120
      %v1028 = vsel %vm1026, %v1025, 0
      %1030 = vmatprep.subr.mxu0 0.0
      %1031 = vmatpush1.msra.mxu0 0.0
      %1032 = vmatprep.subr.mxu0 0.0
      %1033 = vmatpush1.msra.mxu0 0.0
      %1034 = vmatprep.subr.mxu0 0.0
      %1035 = vmatpush1.msra.mxu0 0.0
      %1036 = vmatprep.subr.mxu0 0.0
      %1037 = vmatpush1.msra.mxu0 0.0
      %1038 = vmatprep.subr.mxu0 0.0
      %1039 = vmatpush1.msra.mxu0 0.0
      %1040 = vmatprep.subr.mxu0 0.0
      %1041 = vmatpush1.msra.mxu0 0.0
      %1042 = vmatprep.subr.mxu0 0.0
      %1043 = vmatpush1.msra.mxu0 0.0
      %1044 = vmatprep.subr.mxu0 0.0
      %1045 = vmatpush1.msra.mxu0 0.0
      %1046 = vmatprep.subr.mxu0 0.0
      %1047 = vmatpush1.msra.mxu0 0.0
      %1048 = vmatprep.subr.mxu0 0.0
      %1049 = vmatpush1.msra.mxu0 0.0
      %1050 = vmatprep.subr.mxu0 0.0
      %1051 = vmatpush1.msra.mxu0 0.0
      %1052 = vmatprep.subr.mxu0 0.0
      %1053 = vmatpush1.msra.mxu0 0.0
      %1054 = vmatprep.subr.mxu0 0.0
      %1055 = vmatpush1.msra.mxu0 %v1024
      %1056 = vmatprep.subr.mxu0 0.0
      %1057 = vmatpush1.msra.mxu0 %v1023
      %1058 = vmatprep.subr.mxu0 0.0
      %1059 = vmatpush1.msra.mxu0 %v1022
      %1060 = vmatprep.subr.mxu0 0.0
      %1061 = vmatpush1.msra.mxu0 %v1021
      %1062 = vmatprep.subr.mxu0 0.0
      %1063 = vmatpush2.msra.mxu0 0.0
      %1064 = vmatprep.subr.mxu0 0.0
      %1065 = vmatpush2.msra.mxu0 0.0
      %1066 = vmatprep.subr.mxu0 0.0
      %1067 = vmatpush2.msra.mxu0 0.0
      %1068 = vmatprep.subr.mxu0 0.0
      %1069 = vmatpush2.msra.mxu0 0.0
      %1070 = vmatprep.subr.mxu0 0.0
      %1071 = vmatpush2.msra.mxu0 0.0
      %1072 = vmatprep.subr.mxu0 0.0
      %1073 = vmatpush2.msra.mxu0 0.0
      %1074 = vmatprep.subr.mxu0 0.0
      %1075 = vmatpush2.msra.mxu0 0.0
      %1076 = vmatprep.subr.mxu0 0.0
      %1077 = vmatpush2.msra.mxu0 0.0
      %1078 = vmatprep.subr.mxu0 0.0
      %1079 = vmatpush2.msra.mxu0 0.0
      %1080 = vmatprep.subr.mxu0 0.0
      %1081 = vmatpush2.msra.mxu0 0.0
      %1082 = vmatprep.subr.mxu0 0.0
      %1083 = vmatpush2.msra.mxu0 0.0
      %1084 = vmatprep.subr.mxu0 0.0
      %1085 = vmatpush2.msra.mxu0 0.0
      %1086 = vmatprep.subr.mxu0 0.0
      %1087 = vmatpush2.msra.mxu0 0.0
      %1088 = vmatprep.subr.mxu0 0.0
      %1089 = vmatpush2.msra.mxu0 0.0
      %1090 = vmatprep.subr.mxu0 0.0
      %1091 = vmatpush2.msra.mxu0 0.0
      %1092 = vmatprep.subr.mxu0 0.0
      %1093 = vmatpush2.msra.mxu0 0.0
      %1094 = vmatprep.mubr.f32.mxu0 0.0
      %1095 = vmatmul.mubr.f32.gmra.mxu0 %v1028
      %v1096 = vpop.f32.mrf.mxu0
      %v1097 = vadd.f32 0.0, %v1096
      %v1098 = vpop.f32.mrf.mxu0
      %1099 = vdwg.mxu0
      %vm1100 = vcmask 57344
      %1101 = vst.msk [vmem:[%s211] sm:$0x1] %vm1100, %v1097
      %p1102 = scmp.lt.s32.totalorder %s18, 1
      %s1103 = scalar_select %p1102, %s18, 1
      %p1104 = scmp.lt.s32.totalorder %s19, 0
      %s1105 = scalar_select %p1104, %s19, 0
      %s1106 = sadd.s32 %s1105, %s1103
      %s1107 = scalar_lea.vmem %s3, %s1106
      // Predicated region
      $region33: #{discriminator_forward.7} parent=31 // pred_check
        %p1108 = pneg %p121
      $region34: #{discriminator_forward.7} parent=31 // pred_check_branch
        %1110 = sbr.rel (%p1108) target = $region36
      $region35: #{discriminator_forward.7} parent=31 // pred_region
        _
      $region36: #{discriminator_forward.7} parent=31 // pred_fallthru
        _
    $region32: #{discriminator_forward.7} parent=5 // pred_fallthru
      _
    %p1111 = scmp.le.s32.totalorder 2, %s9
    // Predicated region
    $region37: #{discriminator_forward.7} parent=5 // pred_check
      %p1112 = pneg %p1111
    $region38: #{discriminator_forward.7} parent=5 // pred_check_branch
      %1114 = sbr.rel (%p1112) target = $region40
    $region39: #{discriminator_forward.7} parent=5 // pred_region
      %s1115 = ssub.s32 %s9, 2
      // Predicated region
      $region41: #{discriminator_forward.7} parent=39 // pred_check
        %p1116 = pneg %p127
      $region42: #{discriminator_forward.7} parent=39 // pred_check_branch
        %1118 = sbr.rel (%p1116) target = $region44
      $region43: #{discriminator_forward.7} parent=39 // pred_region
        %p1119 = scmp.lt.s32.totalorder %s20, 1
        %s1120 = scalar_select %p1119, %s20, 1
        %p1121 = scmp.lt.s32.totalorder %s21, 0
        %s1122 = scalar_select %p1121, %s21, 0
        %s1123 = sadd.s32 %s1122, %s1120
        %s1124 = scalar_lea.vmem %s3, %s1123
      $region44: #{discriminator_forward.7} parent=39 // pred_fallthru
        _
    $region40: #{discriminator_forward.7} parent=5 // pred_fallthru
      _
  $region6: #{discriminator_forward.7} parent=0 // loop_footer
    %s13 = sadd.s32 1, %s9
  $region7: #{discriminator_forward.7} parent=0 // loop_footer_branch
    %8 = sbr.rel target = $region3
  $region8: #{discriminator_forward.7} parent=0 // loop_exit
    _

</llo_original>
